<compile_context>
chip_gen: v5e
topology: v5e:2x2
jax: 0.10.0
libtpu: 0.0.40
codegen_flags: <defaults>
</compile_context>

<pallas_src>
import functools

import jax
import jax.numpy as jnp
from jax.experimental import pallas as pl
from jax.experimental.pallas import tpu as pltpu

# ----------------------------- model config (small, synthetic) ---------------
VOCAB = 128          # gpt2 vocab (tiny synthetic)
EMBED = 32           # gpt_embedding_size
N_LAYERS = 2
N_HEADS = 2
HEAD_DIM = EMBED // N_HEADS
MAX_POS = 64
PREFIX_LENGTH = 8    # <= 10  -> MLP clip_project branch
PREFIX_SIZE = 32
MLP_RATIO = 4        # GPT-2 ffn = 4 * embed
LN_EPS = 1e-5
CLIP_HID = EMBED * PREFIX_LENGTH // 2      # 128


# ----------------------------- fused Pallas kernel ----------------------------
def _clipcap_kernel(tok_ref, prefix_ref, wte_ref, wpe_ref,
                    cw1_ref, cb1_ref, cw2_ref, cb2_ref,
                    ln1_g_ref, ln1_b_ref, attn_w_ref, attn_b_ref,
                    proj_w_ref, proj_b_ref, ln2_g_ref, ln2_b_ref,
                    fc1_w_ref, fc1_b_ref, fc2_w_ref, fc2_b_ref,
                    lnf_g_ref, lnf_b_ref,
                    logits_ref,
                    x_scratch,
                    *, batch, text_len):
    f32 = jnp.float32
    B, T = batch, text_len
    S = PREFIX_LENGTH + T
    BS = B * S

    def ln(x, g, b):
        mu = jnp.mean(x, axis=-1, keepdims=True)
        var = jnp.mean(jnp.square(x - mu), axis=-1, keepdims=True)
        return (x - mu) * jax.lax.rsqrt(var + LN_EPS) * g + b

    def gelu_new(y):
        c = jnp.sqrt(2.0 / jnp.pi).astype(f32)
        return 0.5 * y * (1.0 + jnp.tanh(c * (y + 0.044715 * y * y * y)))

    # ---- clip_project MLP (Linear -> Tanh -> Linear), written slot-by-slot
    #      straight into the sequence buffer (fused "concat", prefix half) ----
    h = jnp.tanh(jnp.dot(prefix_ref[...].astype(f32), cw1_ref[...],
                         preferred_element_type=f32) + cb1_ref[...])          # [B, CLIP_HID]
    for p in range(PREFIX_LENGTH):
        slot = jnp.dot(h, cw2_ref[p], preferred_element_type=f32) \
            + cb2_ref[p:p + 1, :]                                             # [B, E]
        x_scratch[:, p:p + 1, :] = slot[:, None, :]

    # ---- token embedding gather as a one-hot matmul on the MXU ----
    vocab_ids = jax.lax.broadcasted_iota(jnp.int32, (B * T, VOCAB), 1)
    onehot = (vocab_ids == tok_ref[...]).astype(f32)                          # [B*T, V]
    emb_text = jnp.dot(onehot, wte_ref[...], preferred_element_type=f32)      # [B*T, E]
    for b in range(B):
        x_scratch[b, PREFIX_LENGTH:, :] = emb_text[b * T:(b + 1) * T, :]

    # ---- position embeddings; flatten to a [B*S, E] slab (stays in VMEM) ----
    x = x_scratch[...] + wpe_ref[0:S, :][None, :, :]                          # [B, S, E]
    x = x.reshape(BS, EMBED)

    # additive causal mask, shared across layers / heads
    rows = jax.lax.broadcasted_iota(jnp.int32, (S, S), 0)
    cols = jax.lax.broadcasted_iota(jnp.int32, (S, S), 1)
    neg_mask = jnp.where(cols <= rows, 0.0, -1e9).astype(f32)[None, :, :]     # [1, S, S]
    scale = 1.0 / jnp.sqrt(jnp.float32(HEAD_DIM))

    for l in range(N_LAYERS):
        # --- attention sub-block ---
        hx = ln(x, ln1_g_ref[l:l + 1, :], ln1_b_ref[l:l + 1, :])
        qkv = jnp.dot(hx, attn_w_ref[l], preferred_element_type=f32) \
            + attn_b_ref[l:l + 1, :]                                          # [BS, 3E]
        pw = proj_w_ref[l]                                                    # [E, E]
        attn_out = jnp.zeros((BS, EMBED), f32)
        for hh in range(N_HEADS):
            lo = hh * HEAD_DIM
            q_h = qkv[:, lo:lo + HEAD_DIM].reshape(B, S, HEAD_DIM)
            k_h = qkv[:, EMBED + lo:EMBED + lo + HEAD_DIM].reshape(B, S, HEAD_DIM)
            v_h = qkv[:, 2 * EMBED + lo:2 * EMBED + lo + HEAD_DIM].reshape(B, S, HEAD_DIM)
            s_h = jnp.einsum("bqd,bkd->bqk", q_h, k_h,
                             preferred_element_type=f32) * scale + neg_mask   # [B, S, S]
            m = jnp.max(s_h, axis=-1, keepdims=True)
            pr = jnp.exp(s_h - m)
            pr = pr * pl.reciprocal(jnp.sum(pr, axis=-1, keepdims=True), approx=True)
            o_h = jnp.einsum("bqk,bkd->bqd", pr, v_h,
                             preferred_element_type=f32)                      # [B, S, Dh]
            # concat-free head merge: accumulate o_h @ proj_w[head rows, :]
            attn_out = attn_out + jnp.dot(o_h.reshape(BS, HEAD_DIM),
                                          pw[lo:lo + HEAD_DIM, :],
                                          preferred_element_type=f32)
        x = x + attn_out + proj_b_ref[l:l + 1, :]

        # --- MLP sub-block ---
        hx = ln(x, ln2_g_ref[l:l + 1, :], ln2_b_ref[l:l + 1, :])
        m1 = gelu_new(jnp.dot(hx, fc1_w_ref[l], preferred_element_type=f32)
                      + fc1_b_ref[l:l + 1, :])
        m2 = jnp.dot(m1, fc2_w_ref[l], preferred_element_type=f32) \
            + fc2_b_ref[l:l + 1, :]
        x = x + m2

    # --- final LN + tied lm_head: contract against wte's 2nd dim (no wte.T) ---
    xf = ln(x, lnf_g_ref[...], lnf_b_ref[...])
    logits = jax.lax.dot_general(xf, wte_ref[...],
                                 dimension_numbers=(((1,), (1,)), ((), ())),
                                 preferred_element_type=f32)                  # [BS, V]
    logits_ref[...] = logits.astype(logits_ref.dtype)


def _full_spec(shape):
    """Whole-array VMEM block for a grid of (1,)."""
    nd = len(shape)
    return pl.BlockSpec(tuple(int(d) for d in shape), lambda i, nd=nd: (0,) * nd)


def clipcap_forward(params, tokens, prefix):
    """tokens: int32 [B, T]; prefix: f32 [B, PREFIX_SIZE] -> logits [B, P+T, V]."""
    B, T = tokens.shape
    S = PREFIX_LENGTH + T

    # stack the per-layer params so the fused kernel sees [L, ...] slabs
    stack = lambda name: jnp.stack([lp[name] for lp in params["layers"]], axis=0)

    # per-prefix-slot view of the second clip-MLP weight: [P, CLIP_HID, E]
    cw2 = params["clip_w2"].reshape(CLIP_HID, PREFIX_LENGTH, EMBED).transpose(1, 0, 2)
    cb2 = params["clip_b2"].reshape(PREFIX_LENGTH, EMBED)

    inputs = (
        tokens.reshape(B * T, 1).astype(jnp.int32),
        prefix,
        params["wte"], params["wpe"],
        params["clip_w1"], params["clip_b1"].reshape(1, CLIP_HID),
        cw2, cb2,
        stack("ln1_g"), stack("ln1_b"),
        stack("attn_w"), stack("attn_b"),
        stack("proj_w"), stack("proj_b"),
        stack("ln2_g"), stack("ln2_b"),
        stack("fc1_w"), stack("fc1_b"),
        stack("fc2_w"), stack("fc2_b"),
        params["lnf_g"].reshape(1, EMBED), params["lnf_b"].reshape(1, EMBED),
    )

    kernel = functools.partial(_clipcap_kernel, batch=B, text_len=T)
    logits = pl.pallas_call(
        kernel,
        out_shape=jax.ShapeDtypeStruct((B * S, VOCAB), jnp.float32),
        grid=(1,),
        in_specs=[_full_spec(x.shape) for x in inputs],
        out_specs=pl.BlockSpec((B * S, VOCAB), lambda i: (0, 0)),
        scratch_shapes=[pltpu.VMEM((B, S, EMBED), jnp.float32)],
        compiler_params=pltpu.CompilerParams(
            dimension_semantics=("arbitrary",)),
    )(*inputs)
    return logits.reshape(B, S, VOCAB)


# ----------------------------- pure-JAX reference (for validation) -----------
def _reference_forward(params, tokens, prefix):
    wte, wpe = params["wte"], params["wpe"]
    emb_text = jnp.take(wte, tokens, axis=0)
    h = jnp.tanh(prefix @ params["clip_w1"] + params["clip_b1"])
    pp = (h @ params["clip_w2"] + params["clip_b2"]).reshape(-1, PREFIX_LENGTH, EMBED)
    x = jnp.concatenate([pp, emb_text], axis=1)
    B, S, E = x.shape
    x = x + wpe[:S][None]

    def ln(x, g, b):
        mu = x.mean(-1, keepdims=True)
        var = ((x - mu) ** 2).mean(-1, keepdims=True)
        return (x - mu) / jnp.sqrt(var + LN_EPS) * g + b

    mask = jnp.tril(jnp.ones((S, S), bool))
    for lp in params["layers"]:
        hh = ln(x, lp["ln1_g"], lp["ln1_b"])
        qkv = (hh @ lp["attn_w"] + lp["attn_b"]).reshape(B, S, 3, N_HEADS, HEAD_DIM)
        q = jnp.transpose(qkv[:, :, 0], (0, 2, 1, 3))
        k = jnp.transpose(qkv[:, :, 1], (0, 2, 1, 3))
        v = jnp.transpose(qkv[:, :, 2], (0, 2, 1, 3))
        s = jnp.einsum("bhqd,bhkd->bhqk", q, k) / jnp.sqrt(jnp.float32(HEAD_DIM))
        s = jnp.where(mask, s, -1e9)
        p = jax.nn.softmax(s, axis=-1)
        a = jnp.einsum("bhqk,bhkd->bhqd", p, v)
        a = jnp.transpose(a, (0, 2, 1, 3)).reshape(B, S, E)
        x = x + a @ lp["proj_w"] + lp["proj_b"]
        hh = ln(x, lp["ln2_g"], lp["ln2_b"])
        m = hh @ lp["fc1_w"] + lp["fc1_b"]
        c = jnp.sqrt(2.0 / jnp.pi)
        m = 0.5 * m * (1.0 + jnp.tanh(c * (m + 0.044715 * m ** 3)))
        x = x + m @ lp["fc2_w"] + lp["fc2_b"]
    x = ln(x, params["lnf_g"], params["lnf_b"])
    return x @ wte.T


# ----------------------------- deterministic parameter init ------------------
def init_params(key):
    def normal(k, shape, std=0.02):
        return std * jax.random.normal(k, shape, jnp.float32)

    keys = iter(jax.random.split(key, 16 + 16 * N_LAYERS))
    params = {
        "wte": normal(next(keys), (VOCAB, EMBED)),
        "wpe": normal(next(keys), (MAX_POS, EMBED), std=0.01),
        "lnf_g": jnp.ones((EMBED,), jnp.float32),
        "lnf_b": jnp.zeros((EMBED,), jnp.float32),
        # clip_project MLP: (prefix_size, E*P//2, E*P)
        "clip_w1": normal(next(keys), (PREFIX_SIZE, CLIP_HID)),
        "clip_b1": jnp.zeros((CLIP_HID,), jnp.float32),
        "clip_w2": normal(next(keys), (CLIP_HID, EMBED * PREFIX_LENGTH)),
        "clip_b2": jnp.zeros((EMBED * PREFIX_LENGTH,), jnp.float32),
        "layers": [],
    }
    for _ in range(N_LAYERS):
        lp = {
            "ln1_g": jnp.ones((EMBED,), jnp.float32),
            "ln1_b": jnp.zeros((EMBED,), jnp.float32),
            "attn_w": normal(next(keys), (EMBED, 3 * EMBED)),
            "attn_b": jnp.zeros((3 * EMBED,), jnp.float32),
            "proj_w": normal(next(keys), (EMBED, EMBED)),
            "proj_b": jnp.zeros((EMBED,), jnp.float32),
            "ln2_g": jnp.ones((EMBED,), jnp.float32),
            "ln2_b": jnp.zeros((EMBED,), jnp.float32),
            "fc1_w": normal(next(keys), (EMBED, MLP_RATIO * EMBED)),
            "fc1_b": jnp.zeros((MLP_RATIO * EMBED,), jnp.float32),
            "fc2_w": normal(next(keys), (MLP_RATIO * EMBED, EMBED)),
            "fc2_b": jnp.zeros((EMBED,), jnp.float32),
        }
        params["layers"].append(lp)
    return params


# ----------------------------- main -------------------------------------------
if __name__ == "__main__":
    key = jax.random.PRNGKey(0)
    k_params, k_tok, k_pre = jax.random.split(key, 3)

    params = init_params(k_params)

    B, T = 2, 8
    tokens = jax.random.randint(k_tok, (B, T), 0, VOCAB, dtype=jnp.int32)
    prefix = jax.random.normal(k_pre, (B, PREFIX_SIZE), jnp.float32)

    logits = jax.jit(clipcap_forward)(params, tokens, prefix)
    logits = jax.block_until_ready(logits)

    assert logits.shape == (B, PREFIX_LENGTH + T, VOCAB)
    assert bool(jnp.all(jnp.isfinite(logits)))

    ref = _reference_forward(params, tokens, prefix)
    assert bool(jnp.allclose(logits, ref, rtol=1e-2, atol=1e-2)), \
        "fused kernel disagrees with pure-JAX reference"

    print("KERNEL_OK")
</pallas_src>

<mosaic_0001>
module attributes {stable_mosaic.version = 11 : i64} {
  func.func @_clipcap_kernel(%arg0: i32, %arg1: memref<16x1xi32, #tpu.memory_space<vmem>>, %arg2: memref<2x32xf32, #tpu.memory_space<vmem>>, %arg3: memref<128x32xf32, #tpu.memory_space<vmem>>, %arg4: memref<64x32xf32, #tpu.memory_space<vmem>>, %arg5: memref<32x128xf32, #tpu.memory_space<vmem>>, %arg6: memref<1x128xf32, #tpu.memory_space<vmem>>, %arg7: memref<8x128x32xf32, #tpu.memory_space<vmem>>, %arg8: memref<8x32xf32, #tpu.memory_space<vmem>>, %arg9: memref<2x32xf32, #tpu.memory_space<vmem>>, %arg10: memref<2x32xf32, #tpu.memory_space<vmem>>, %arg11: memref<2x32x96xf32, #tpu.memory_space<vmem>>, %arg12: memref<2x96xf32, #tpu.memory_space<vmem>>, %arg13: memref<2x32x32xf32, #tpu.memory_space<vmem>>, %arg14: memref<2x32xf32, #tpu.memory_space<vmem>>, %arg15: memref<2x32xf32, #tpu.memory_space<vmem>>, %arg16: memref<2x32xf32, #tpu.memory_space<vmem>>, %arg17: memref<2x32x128xf32, #tpu.memory_space<vmem>>, %arg18: memref<2x128xf32, #tpu.memory_space<vmem>>, %arg19: memref<2x128x32xf32, #tpu.memory_space<vmem>>, %arg20: memref<2x32xf32, #tpu.memory_space<vmem>>, %arg21: memref<1x32xf32, #tpu.memory_space<vmem>>, %arg22: memref<1x32xf32, #tpu.memory_space<vmem>>, %arg23: memref<32x128xf32, #tpu.memory_space<vmem>>, %arg24: memref<2x16x32xf32, #tpu.memory_space<vmem>>) attributes {dimension_semantics = [#tpu.dimension_semantics<arbitrary>], iteration_bounds = array<i64: 1>, scalar_prefetch = 0 : i64, scratch_operands = 1 : i64, tpu.core_type = #tpu.core_type<tc>, window_params = [{pipeline_mode = #tpu.pipeline_mode<synchronous>, transform_indices = @transform_0, window_bounds = array<i64: 16, 1>}, {pipeline_mode = #tpu.pipeline_mode<synchronous>, transform_indices = @transform_1, window_bounds = array<i64: 2, 32>}, {pipeline_mode = #tpu.pipeline_mode<synchronous>, transform_indices = @transform_2, window_bounds = array<i64: 128, 32>}, {pipeline_mode = #tpu.pipeline_mode<synchronous>, transform_indices = @transform_3, window_bounds = array<i64: 64, 32>}, {pipeline_mode = #tpu.pipeline_mode<synchronous>, transform_indices = @transform_4, window_bounds = array<i64: 32, 128>}, {pipeline_mode = #tpu.pipeline_mode<synchronous>, transform_indices = @transform_5, window_bounds = array<i64: 1, 128>}, {pipeline_mode = #tpu.pipeline_mode<synchronous>, transform_indices = @transform_6, window_bounds = array<i64: 8, 128, 32>}, {pipeline_mode = #tpu.pipeline_mode<synchronous>, transform_indices = @transform_7, window_bounds = array<i64: 8, 32>}, {pipeline_mode = #tpu.pipeline_mode<synchronous>, transform_indices = @transform_8, window_bounds = array<i64: 2, 32>}, {pipeline_mode = #tpu.pipeline_mode<synchronous>, transform_indices = @transform_9, window_bounds = array<i64: 2, 32>}, {pipeline_mode = #tpu.pipeline_mode<synchronous>, transform_indices = @transform_10, window_bounds = array<i64: 2, 32, 96>}, {pipeline_mode = #tpu.pipeline_mode<synchronous>, transform_indices = @transform_11, window_bounds = array<i64: 2, 96>}, {pipeline_mode = #tpu.pipeline_mode<synchronous>, transform_indices = @transform_12, window_bounds = array<i64: 2, 32, 32>}, {pipeline_mode = #tpu.pipeline_mode<synchronous>, transform_indices = @transform_13, window_bounds = array<i64: 2, 32>}, {pipeline_mode = #tpu.pipeline_mode<synchronous>, transform_indices = @transform_14, window_bounds = array<i64: 2, 32>}, {pipeline_mode = #tpu.pipeline_mode<synchronous>, transform_indices = @transform_15, window_bounds = array<i64: 2, 32>}, {pipeline_mode = #tpu.pipeline_mode<synchronous>, transform_indices = @transform_16, window_bounds = array<i64: 2, 32, 128>}, {pipeline_mode = #tpu.pipeline_mode<synchronous>, transform_indices = @transform_17, window_bounds = array<i64: 2, 128>}, {pipeline_mode = #tpu.pipeline_mode<synchronous>, transform_indices = @transform_18, window_bounds = array<i64: 2, 128, 32>}, {pipeline_mode = #tpu.pipeline_mode<synchronous>, transform_indices = @transform_19, window_bounds = array<i64: 2, 32>}, {pipeline_mode = #tpu.pipeline_mode<synchronous>, transform_indices = @transform_20, window_bounds = array<i64: 1, 32>}, {pipeline_mode = #tpu.pipeline_mode<synchronous>, transform_indices = @transform_21, window_bounds = array<i64: 1, 32>}, {pipeline_mode = #tpu.pipeline_mode<synchronous>, transform_indices = @transform_22, window_bounds = array<i64: 32, 128>}]} {
    %c0 = arith.constant 0 : index
    %c0_0 = arith.constant 0 : index
    %0 = vector.load %arg2[%c0, %c0_0] : memref<2x32xf32, #tpu.memory_space<vmem>>, vector<2x32xf32>
    %c0_1 = arith.constant 0 : index
    %c0_2 = arith.constant 0 : index
    %1 = vector.load %arg5[%c0_1, %c0_2] : memref<32x128xf32, #tpu.memory_space<vmem>>, vector<32x128xf32>
    %cst = arith.constant dense<0.000000e+00> : vector<2x128xf32>
    %2 = tpu.matmul %0, %1, %cst {dimension_numbers = #tpu.dot_dimension_numbers<[1], [0], [0], [1], [0, 0, 1, 1], [], []>} : vector<2x32xf32>, vector<32x128xf32>, vector<2x128xf32> -> vector<2x128xf32>
    %c0_3 = arith.constant 0 : index
    %c0_4 = arith.constant 0 : index
    %3 = vector.load %arg6[%c0_3, %c0_4] : memref<1x128xf32, #tpu.memory_space<vmem>>, vector<1x128xf32>
    %4 = vector.broadcast %3 : vector<1x128xf32> to vector<2x128xf32>
    %5 = arith.addf %2, %4 : vector<2x128xf32>
    %6 = math.tanh %5 : vector<2x128xf32>
    %c0_5 = arith.constant 0 : index
    %c0_6 = arith.constant 0 : index
    %c0_7 = arith.constant 0 : index
    %7 = vector.load %arg7[%c0_5, %c0_6, %c0_7] : memref<8x128x32xf32, #tpu.memory_space<vmem>>, vector<1x128x32xf32>
    %8 = vector.shape_cast %7 : vector<1x128x32xf32> to vector<128x32xf32>
    %cst_8 = arith.constant dense<0.000000e+00> : vector<2x32xf32>
    %9 = tpu.matmul %6, %8, %cst_8 {dimension_numbers = #tpu.dot_dimension_numbers<[1], [0], [0], [1], [0, 0, 1, 1], [], []>} : vector<2x128xf32>, vector<128x32xf32>, vector<2x32xf32> -> vector<2x32xf32>
    %c0_9 = arith.constant 0 : index
    %c0_10 = arith.constant 0 : index
    %10 = vector.load %arg8[%c0_9, %c0_10] : memref<8x32xf32, #tpu.memory_space<vmem>>, vector<1x32xf32>
    %11 = vector.broadcast %10 : vector<1x32xf32> to vector<2x32xf32>
    %12 = arith.addf %9, %11 : vector<2x32xf32>
    %13 = vector.shape_cast %12 : vector<2x32xf32> to vector<2x1x32xf32>
    %c0_11 = arith.constant 0 : index
    %c0_12 = arith.constant 0 : index
    %c0_13 = arith.constant 0 : index
    %14 = vector.load %arg24[%c0_11, %c0_12, %c0_13] : memref<2x16x32xf32, #tpu.memory_space<vmem>>, vector<2x1x32xf32>
    tpu.vector_store %arg24[%c0_11, %c0_12, %c0_13], %13 {strides = array<i32>} : memref<2x16x32xf32, #tpu.memory_space<vmem>>, vector<2x1x32xf32>,
    %c1 = arith.constant 1 : index
    %c0_14 = arith.constant 0 : index
    %c0_15 = arith.constant 0 : index
    %15 = vector.load %arg7[%c1, %c0_14, %c0_15] : memref<8x128x32xf32, #tpu.memory_space<vmem>>, vector<1x128x32xf32>
    %16 = vector.shape_cast %15 : vector<1x128x32xf32> to vector<128x32xf32>
    %cst_16 = arith.constant dense<0.000000e+00> : vector<2x32xf32>
    %17 = tpu.matmul %6, %16, %cst_16 {dimension_numbers = #tpu.dot_dimension_numbers<[1], [0], [0], [1], [0, 0, 1, 1], [], []>} : vector<2x128xf32>, vector<128x32xf32>, vector<2x32xf32> -> vector<2x32xf32>
    %c1_17 = arith.constant 1 : index
    %c0_18 = arith.constant 0 : index
    %18 = vector.load %arg8[%c1_17, %c0_18] : memref<8x32xf32, #tpu.memory_space<vmem>>, vector<1x32xf32>
    %19 = vector.broadcast %18 : vector<1x32xf32> to vector<2x32xf32>
    %20 = arith.addf %17, %19 : vector<2x32xf32>
    %21 = vector.shape_cast %20 : vector<2x32xf32> to vector<2x1x32xf32>
    %c0_19 = arith.constant 0 : index
    %c1_20 = arith.constant 1 : index
    %c0_21 = arith.constant 0 : index
    %22 = vector.load %arg24[%c0_19, %c1_20, %c0_21] : memref<2x16x32xf32, #tpu.memory_space<vmem>>, vector<2x1x32xf32>
    tpu.vector_store %arg24[%c0_19, %c1_20, %c0_21], %21 {strides = array<i32>} : memref<2x16x32xf32, #tpu.memory_space<vmem>>, vector<2x1x32xf32>,
    %c2 = arith.constant 2 : index
    %c0_22 = arith.constant 0 : index
    %c0_23 = arith.constant 0 : index
    %23 = vector.load %arg7[%c2, %c0_22, %c0_23] : memref<8x128x32xf32, #tpu.memory_space<vmem>>, vector<1x128x32xf32>
    %24 = vector.shape_cast %23 : vector<1x128x32xf32> to vector<128x32xf32>
    %cst_24 = arith.constant dense<0.000000e+00> : vector<2x32xf32>
    %25 = tpu.matmul %6, %24, %cst_24 {dimension_numbers = #tpu.dot_dimension_numbers<[1], [0], [0], [1], [0, 0, 1, 1], [], []>} : vector<2x128xf32>, vector<128x32xf32>, vector<2x32xf32> -> vector<2x32xf32>
    %c2_25 = arith.constant 2 : index
    %c0_26 = arith.constant 0 : index
    %26 = vector.load %arg8[%c2_25, %c0_26] : memref<8x32xf32, #tpu.memory_space<vmem>>, vector<1x32xf32>
    %27 = vector.broadcast %26 : vector<1x32xf32> to vector<2x32xf32>
    %28 = arith.addf %25, %27 : vector<2x32xf32>
    %29 = vector.shape_cast %28 : vector<2x32xf32> to vector<2x1x32xf32>
    %c0_27 = arith.constant 0 : index
    %c2_28 = arith.constant 2 : index
    %c0_29 = arith.constant 0 : index
    %30 = vector.load %arg24[%c0_27, %c2_28, %c0_29] : memref<2x16x32xf32, #tpu.memory_space<vmem>>, vector<2x1x32xf32>
    tpu.vector_store %arg24[%c0_27, %c2_28, %c0_29], %29 {strides = array<i32>} : memref<2x16x32xf32, #tpu.memory_space<vmem>>, vector<2x1x32xf32>,
    %c3 = arith.constant 3 : index
    %c0_30 = arith.constant 0 : index
    %c0_31 = arith.constant 0 : index
    %31 = vector.load %arg7[%c3, %c0_30, %c0_31] : memref<8x128x32xf32, #tpu.memory_space<vmem>>, vector<1x128x32xf32>
    %32 = vector.shape_cast %31 : vector<1x128x32xf32> to vector<128x32xf32>
    %cst_32 = arith.constant dense<0.000000e+00> : vector<2x32xf32>
    %33 = tpu.matmul %6, %32, %cst_32 {dimension_numbers = #tpu.dot_dimension_numbers<[1], [0], [0], [1], [0, 0, 1, 1], [], []>} : vector<2x128xf32>, vector<128x32xf32>, vector<2x32xf32> -> vector<2x32xf32>
    %c3_33 = arith.constant 3 : index
    %c0_34 = arith.constant 0 : index
    %34 = vector.load %arg8[%c3_33, %c0_34] : memref<8x32xf32, #tpu.memory_space<vmem>>, vector<1x32xf32>
    %35 = vector.broadcast %34 : vector<1x32xf32> to vector<2x32xf32>
    %36 = arith.addf %33, %35 : vector<2x32xf32>
    %37 = vector.shape_cast %36 : vector<2x32xf32> to vector<2x1x32xf32>
    %c0_35 = arith.constant 0 : index
    %c3_36 = arith.constant 3 : index
    %c0_37 = arith.constant 0 : index
    %38 = vector.load %arg24[%c0_35, %c3_36, %c0_37] : memref<2x16x32xf32, #tpu.memory_space<vmem>>, vector<2x1x32xf32>
    tpu.vector_store %arg24[%c0_35, %c3_36, %c0_37], %37 {strides = array<i32>} : memref<2x16x32xf32, #tpu.memory_space<vmem>>, vector<2x1x32xf32>,
    %c4 = arith.constant 4 : index
    %c0_38 = arith.constant 0 : index
    %c0_39 = arith.constant 0 : index
    %39 = vector.load %arg7[%c4, %c0_38, %c0_39] : memref<8x128x32xf32, #tpu.memory_space<vmem>>, vector<1x128x32xf32>
    %40 = vector.shape_cast %39 : vector<1x128x32xf32> to vector<128x32xf32>
    %cst_40 = arith.constant dense<0.000000e+00> : vector<2x32xf32>
    %41 = tpu.matmul %6, %40, %cst_40 {dimension_numbers = #tpu.dot_dimension_numbers<[1], [0], [0], [1], [0, 0, 1, 1], [], []>} : vector<2x128xf32>, vector<128x32xf32>, vector<2x32xf32> -> vector<2x32xf32>
    %c4_41 = arith.constant 4 : index
    %c0_42 = arith.constant 0 : index
    %42 = vector.load %arg8[%c4_41, %c0_42] : memref<8x32xf32, #tpu.memory_space<vmem>>, vector<1x32xf32>
    %43 = vector.broadcast %42 : vector<1x32xf32> to vector<2x32xf32>
    %44 = arith.addf %41, %43 : vector<2x32xf32>
    %45 = vector.shape_cast %44 : vector<2x32xf32> to vector<2x1x32xf32>
    %c0_43 = arith.constant 0 : index
    %c4_44 = arith.constant 4 : index
    %c0_45 = arith.constant 0 : index
    %46 = vector.load %arg24[%c0_43, %c4_44, %c0_45] : memref<2x16x32xf32, #tpu.memory_space<vmem>>, vector<2x1x32xf32>
    tpu.vector_store %arg24[%c0_43, %c4_44, %c0_45], %45 {strides = array<i32>} : memref<2x16x32xf32, #tpu.memory_space<vmem>>, vector<2x1x32xf32>,
    %c5 = arith.constant 5 : index
    %c0_46 = arith.constant 0 : index
    %c0_47 = arith.constant 0 : index
    %47 = vector.load %arg7[%c5, %c0_46, %c0_47] : memref<8x128x32xf32, #tpu.memory_space<vmem>>, vector<1x128x32xf32>
    %48 = vector.shape_cast %47 : vector<1x128x32xf32> to vector<128x32xf32>
    %cst_48 = arith.constant dense<0.000000e+00> : vector<2x32xf32>
    %49 = tpu.matmul %6, %48, %cst_48 {dimension_numbers = #tpu.dot_dimension_numbers<[1], [0], [0], [1], [0, 0, 1, 1], [], []>} : vector<2x128xf32>, vector<128x32xf32>, vector<2x32xf32> -> vector<2x32xf32>
    %c5_49 = arith.constant 5 : index
    %c0_50 = arith.constant 0 : index
    %50 = vector.load %arg8[%c5_49, %c0_50] : memref<8x32xf32, #tpu.memory_space<vmem>>, vector<1x32xf32>
    %51 = vector.broadcast %50 : vector<1x32xf32> to vector<2x32xf32>
    %52 = arith.addf %49, %51 : vector<2x32xf32>
    %53 = vector.shape_cast %52 : vector<2x32xf32> to vector<2x1x32xf32>
    %c0_51 = arith.constant 0 : index
    %c5_52 = arith.constant 5 : index
    %c0_53 = arith.constant 0 : index
    %54 = vector.load %arg24[%c0_51, %c5_52, %c0_53] : memref<2x16x32xf32, #tpu.memory_space<vmem>>, vector<2x1x32xf32>
    tpu.vector_store %arg24[%c0_51, %c5_52, %c0_53], %53 {strides = array<i32>} : memref<2x16x32xf32, #tpu.memory_space<vmem>>, vector<2x1x32xf32>,
    %c6 = arith.constant 6 : index
    %c0_54 = arith.constant 0 : index
    %c0_55 = arith.constant 0 : index
    %55 = vector.load %arg7[%c6, %c0_54, %c0_55] : memref<8x128x32xf32, #tpu.memory_space<vmem>>, vector<1x128x32xf32>
    %56 = vector.shape_cast %55 : vector<1x128x32xf32> to vector<128x32xf32>
    %cst_56 = arith.constant dense<0.000000e+00> : vector<2x32xf32>
    %57 = tpu.matmul %6, %56, %cst_56 {dimension_numbers = #tpu.dot_dimension_numbers<[1], [0], [0], [1], [0, 0, 1, 1], [], []>} : vector<2x128xf32>, vector<128x32xf32>, vector<2x32xf32> -> vector<2x32xf32>
    %c6_57 = arith.constant 6 : index
    %c0_58 = arith.constant 0 : index
    %58 = vector.load %arg8[%c6_57, %c0_58] : memref<8x32xf32, #tpu.memory_space<vmem>>, vector<1x32xf32>
    %59 = vector.broadcast %58 : vector<1x32xf32> to vector<2x32xf32>
    %60 = arith.addf %57, %59 : vector<2x32xf32>
    %61 = vector.shape_cast %60 : vector<2x32xf32> to vector<2x1x32xf32>
    %c0_59 = arith.constant 0 : index
    %c6_60 = arith.constant 6 : index
    %c0_61 = arith.constant 0 : index
    %62 = vector.load %arg24[%c0_59, %c6_60, %c0_61] : memref<2x16x32xf32, #tpu.memory_space<vmem>>, vector<2x1x32xf32>
    tpu.vector_store %arg24[%c0_59, %c6_60, %c0_61], %61 {strides = array<i32>} : memref<2x16x32xf32, #tpu.memory_space<vmem>>, vector<2x1x32xf32>,
    %c7 = arith.constant 7 : index
    %c0_62 = arith.constant 0 : index
    %c0_63 = arith.constant 0 : index
    %63 = vector.load %arg7[%c7, %c0_62, %c0_63] : memref<8x128x32xf32, #tpu.memory_space<vmem>>, vector<1x128x32xf32>
    %64 = vector.shape_cast %63 : vector<1x128x32xf32> to vector<128x32xf32>
    %cst_64 = arith.constant dense<0.000000e+00> : vector<2x32xf32>
    %65 = tpu.matmul %6, %64, %cst_64 {dimension_numbers = #tpu.dot_dimension_numbers<[1], [0], [0], [1], [0, 0, 1, 1], [], []>} : vector<2x128xf32>, vector<128x32xf32>, vector<2x32xf32> -> vector<2x32xf32>
    %c7_65 = arith.constant 7 : index
    %c0_66 = arith.constant 0 : index
    %66 = vector.load %arg8[%c7_65, %c0_66] : memref<8x32xf32, #tpu.memory_space<vmem>>, vector<1x32xf32>
    %67 = vector.broadcast %66 : vector<1x32xf32> to vector<2x32xf32>
    %68 = arith.addf %65, %67 : vector<2x32xf32>
    %69 = vector.shape_cast %68 : vector<2x32xf32> to vector<2x1x32xf32>
    %c0_67 = arith.constant 0 : index
    %c7_68 = arith.constant 7 : index
    %c0_69 = arith.constant 0 : index
    %70 = vector.load %arg24[%c0_67, %c7_68, %c0_69] : memref<2x16x32xf32, #tpu.memory_space<vmem>>, vector<2x1x32xf32>
    tpu.vector_store %arg24[%c0_67, %c7_68, %c0_69], %69 {strides = array<i32>} : memref<2x16x32xf32, #tpu.memory_space<vmem>>, vector<2x1x32xf32>,
    %71 = tpu.iota {dimensions = array<i32: 1>} : vector<16x128xi32>
    %c0_70 = arith.constant 0 : index
    %c0_71 = arith.constant 0 : index
    %72 = vector.load %arg1[%c0_70, %c0_71] : memref<16x1xi32, #tpu.memory_space<vmem>>, vector<16x1xi32>
    %73 = vector.broadcast %72 : vector<16x1xi32> to vector<16x128xi32>
    %74 = arith.cmpi eq, %71, %73 : vector<16x128xi32>
    %75 = arith.extui %74 : vector<16x128xi1> to vector<16x128xi32>
    %76 = arith.sitofp %75 : vector<16x128xi32> to vector<16x128xf32>
    %c0_72 = arith.constant 0 : index
    %c0_73 = arith.constant 0 : index
    %77 = vector.load %arg3[%c0_72, %c0_73] : memref<128x32xf32, #tpu.memory_space<vmem>>, vector<128x32xf32>
    %cst_74 = arith.constant dense<0.000000e+00> : vector<16x32xf32>
    %78 = tpu.matmul %76, %77, %cst_74 {dimension_numbers = #tpu.dot_dimension_numbers<[1], [0], [0], [1], [0, 0, 1, 1], [], []>} : vector<16x128xf32>, vector<128x32xf32>, vector<16x32xf32> -> vector<16x32xf32>
    %79 = vector.extract_strided_slice %78 {offsets = [0, 0], sizes = [8, 32], strides = [1, 1]} : vector<16x32xf32> to vector<8x32xf32>
    %c0_75 = arith.constant 0 : index
    %c8 = arith.constant 8 : index
    %c0_76 = arith.constant 0 : index
    %80 = vector.load %arg24[%c0_75, %c8, %c0_76] : memref<2x16x32xf32, #tpu.memory_space<vmem>>, vector<1x8x32xf32>
    %81 = vector.shape_cast %80 : vector<1x8x32xf32> to vector<8x32xf32>
    %82 = vector.shape_cast %79 : vector<8x32xf32> to vector<1x8x32xf32>
    tpu.vector_store %arg24[%c0_75, %c8, %c0_76], %82 {strides = array<i32>} : memref<2x16x32xf32, #tpu.memory_space<vmem>>, vector<1x8x32xf32>,
    %83 = vector.extract_strided_slice %78 {offsets = [8, 0], sizes = [8, 32], strides = [1, 1]} : vector<16x32xf32> to vector<8x32xf32>
    %c1_77 = arith.constant 1 : index
    %c8_78 = arith.constant 8 : index
    %c0_79 = arith.constant 0 : index
    %84 = vector.load %arg24[%c1_77, %c8_78, %c0_79] : memref<2x16x32xf32, #tpu.memory_space<vmem>>, vector<1x8x32xf32>
    %85 = vector.shape_cast %84 : vector<1x8x32xf32> to vector<8x32xf32>
    %86 = vector.shape_cast %83 : vector<8x32xf32> to vector<1x8x32xf32>
    tpu.vector_store %arg24[%c1_77, %c8_78, %c0_79], %86 {strides = array<i32>} : memref<2x16x32xf32, #tpu.memory_space<vmem>>, vector<1x8x32xf32>,
    %c0_80 = arith.constant 0 : index
    %c0_81 = arith.constant 0 : index
    %c0_82 = arith.constant 0 : index
    %87 = vector.load %arg24[%c0_80, %c0_81, %c0_82] : memref<2x16x32xf32, #tpu.memory_space<vmem>>, vector<2x16x32xf32>
    %c0_83 = arith.constant 0 : index
    %c0_84 = arith.constant 0 : index
    %88 = vector.load %arg4[%c0_83, %c0_84] : memref<64x32xf32, #tpu.memory_space<vmem>>, vector<16x32xf32>
    %89 = vector.shape_cast %88 : vector<16x32xf32> to vector<1x16x32xf32>
    %90 = vector.broadcast %89 : vector<1x16x32xf32> to vector<2x16x32xf32>
    %91 = arith.addf %87, %90 : vector<2x16x32xf32>
    %92 = vector.shape_cast %91 : vector<2x16x32xf32> to vector<32x32xf32>
    %93 = tpu.iota {dimensions = array<i32: 0>} : vector<16x16xi32>
    %94 = tpu.iota {dimensions = array<i32: 1>} : vector<16x16xi32>
    %95 = arith.cmpi sle, %94, %93 : vector<16x16xi32>
    %cst_85 = arith.constant 0.000000e+00 : f32
    %cst_86 = arith.constant -1.000000e+09 : f32
    %96 = vector.broadcast %cst_85 : f32 to vector<16x16xf32>
    %97 = vector.broadcast %cst_86 : f32 to vector<16x16xf32>
    %98 = arith.select %95, %96, %97 : vector<16x16xi1>, vector<16x16xf32>
    %99 = vector.shape_cast %98 : vector<16x16xf32> to vector<1x16x16xf32>
    %cst_87 = arith.constant 1.600000e+01 : f32
    %100 = math.sqrt %cst_87 : f32
    %cst_88 = arith.constant 1.000000e+00 : f32
    %101 = arith.divf %cst_88, %100 : f32
    %c0_89 = arith.constant 0 : index
    %c0_90 = arith.constant 0 : index
    %102 = vector.load %arg9[%c0_89, %c0_90] : memref<2x32xf32, #tpu.memory_space<vmem>>, vector<1x32xf32>
    %c0_91 = arith.constant 0 : index
    %c0_92 = arith.constant 0 : index
    %103 = vector.load %arg10[%c0_91, %c0_92] : memref<2x32xf32, #tpu.memory_space<vmem>>, vector<1x32xf32>
    %cst_93 = arith.constant dense<0.000000e+00> : vector<32xf32>
    %104 = vector.multi_reduction <add>, %92, %cst_93 [1] : vector<32x32xf32> to vector<32xf32>
    %105 = vector.shape_cast %104 : vector<32xf32> to vector<32x1xf32>
    %cst_94 = arith.constant 3.200000e+01 : f32
    %106 = vector.broadcast %cst_94 : f32 to vector<32x1xf32>
    %107 = arith.divf %105, %106 : vector<32x1xf32>
    %108 = vector.broadcast %107 : vector<32x1xf32> to vector<32x32xf32>
    %109 = arith.subf %92, %108 : vector<32x32xf32>
    %110 = arith.mulf %109, %109 : vector<32x32xf32>
    %cst_95 = arith.constant dense<0.000000e+00> : vector<32xf32>
    %111 = vector.multi_reduction <add>, %110, %cst_95 [1] : vector<32x32xf32> to vector<32xf32>
    %112 = vector.shape_cast %111 : vector<32xf32> to vector<32x1xf32>
    %cst_96 = arith.constant 3.200000e+01 : f32
    %113 = vector.broadcast %cst_96 : f32 to vector<32x1xf32>
    %114 = arith.divf %112, %113 : vector<32x1xf32>
    %115 = vector.broadcast %107 : vector<32x1xf32> to vector<32x32xf32>
    %116 = arith.subf %92, %115 : vector<32x32xf32>
    %cst_97 = arith.constant 9.99999974E-6 : f32
    %117 = vector.broadcast %cst_97 : f32 to vector<32x1xf32>
    %118 = arith.addf %114, %117 : vector<32x1xf32>
    %119 = math.rsqrt %118 : vector<32x1xf32>
    %120 = vector.broadcast %119 : vector<32x1xf32> to vector<32x32xf32>
    %121 = arith.mulf %116, %120 : vector<32x32xf32>
    %122 = vector.broadcast %102 : vector<1x32xf32> to vector<32x32xf32>
    %123 = arith.mulf %121, %122 : vector<32x32xf32>
    %124 = vector.broadcast %103 : vector<1x32xf32> to vector<32x32xf32>
    %125 = arith.addf %123, %124 : vector<32x32xf32>
    %c0_98 = arith.constant 0 : index
    %c0_99 = arith.constant 0 : index
    %c0_100 = arith.constant 0 : index
    %126 = vector.load %arg11[%c0_98, %c0_99, %c0_100] : memref<2x32x96xf32, #tpu.memory_space<vmem>>, vector<1x32x96xf32>
    %127 = vector.shape_cast %126 : vector<1x32x96xf32> to vector<32x96xf32>
    %cst_101 = arith.constant dense<0.000000e+00> : vector<32x96xf32>
    %128 = tpu.matmul %125, %127, %cst_101 {dimension_numbers = #tpu.dot_dimension_numbers<[1], [0], [0], [1], [0, 0, 1, 1], [], []>} : vector<32x32xf32>, vector<32x96xf32>, vector<32x96xf32> -> vector<32x96xf32>
    %c0_102 = arith.constant 0 : index
    %c0_103 = arith.constant 0 : index
    %129 = vector.load %arg12[%c0_102, %c0_103] : memref<2x96xf32, #tpu.memory_space<vmem>>, vector<1x96xf32>
    %130 = vector.broadcast %129 : vector<1x96xf32> to vector<32x96xf32>
    %131 = arith.addf %128, %130 : vector<32x96xf32>
    %c0_104 = arith.constant 0 : index
    %c0_105 = arith.constant 0 : index
    %c0_106 = arith.constant 0 : index
    %132 = vector.load %arg13[%c0_104, %c0_105, %c0_106] : memref<2x32x32xf32, #tpu.memory_space<vmem>>, vector<1x32x32xf32>
    %133 = vector.shape_cast %132 : vector<1x32x32xf32> to vector<32x32xf32>
    %cst_107 = arith.constant 0.000000e+00 : f32
    %134 = vector.broadcast %cst_107 : f32 to vector<32x32xf32>
    %135 = vector.extract_strided_slice %131 {offsets = [0, 0], sizes = [32, 16], strides = [1, 1]} : vector<32x96xf32> to vector<32x16xf32>
    %136 = vector.shape_cast %135 : vector<32x16xf32> to vector<2x16x16xf32>
    %137 = vector.extract_strided_slice %131 {offsets = [0, 32], sizes = [32, 16], strides = [1, 1]} : vector<32x96xf32> to vector<32x16xf32>
    %138 = vector.shape_cast %137 : vector<32x16xf32> to vector<2x16x16xf32>
    %139 = vector.extract_strided_slice %131 {offsets = [0, 64], sizes = [32, 16], strides = [1, 1]} : vector<32x96xf32> to vector<32x16xf32>
    %140 = vector.shape_cast %139 : vector<32x16xf32> to vector<2x16x16xf32>
    "tpu.trace_start"() <{level = 10 : i32, message = "bqd,bkd->bqk"}> : () -> ()
    %cst_108 = arith.constant dense<0.000000e+00> : vector<2x16x16xf32>
    %141 = tpu.matmul %136, %138, %cst_108 {dimension_numbers = #tpu.dot_dimension_numbers<[2], [2], [1], [1], [0, 0, 0, 1, 1, 1], [0], [0]>} : vector<2x16x16xf32>, vector<2x16x16xf32>, vector<2x16x16xf32> -> vector<2x16x16xf32>
    "tpu.trace_stop"() : () -> ()
    %142 = vector.broadcast %101 : f32 to vector<2x16x16xf32>
    %143 = arith.mulf %141, %142 : vector<2x16x16xf32>
    %144 = vector.broadcast %99 : vector<1x16x16xf32> to vector<2x16x16xf32>
    %145 = arith.addf %143, %144 : vector<2x16x16xf32>
    %cst_109 = arith.constant dense<0xFF800000> : vector<2x16xf32>
    %146 = vector.multi_reduction <maximumf>, %145, %cst_109 [2] : vector<2x16x16xf32> to vector<2x16xf32>
    %147 = vector.shape_cast %146 : vector<2x16xf32> to vector<2x16x1xf32>
    %148 = vector.broadcast %147 : vector<2x16x1xf32> to vector<2x16x16xf32>
    %149 = arith.subf %145, %148 : vector<2x16x16xf32>
    %150 = math.exp %149 : vector<2x16x16xf32>
    %cst_110 = arith.constant dense<0.000000e+00> : vector<2x16xf32>
    %151 = vector.multi_reduction <add>, %150, %cst_110 [2] : vector<2x16x16xf32> to vector<2x16xf32>
    %152 = vector.shape_cast %151 : vector<2x16xf32> to vector<2x16x1xf32>
    %153 = tpu.reciprocal %152 {approx = true} : vector<2x16x1xf32> -> vector<2x16x1xf32>
    %154 = vector.broadcast %153 : vector<2x16x1xf32> to vector<2x16x16xf32>
    %155 = arith.mulf %150, %154 : vector<2x16x16xf32>
    "tpu.trace_start"() <{level = 10 : i32, message = "bqk,bkd->bqd"}> : () -> ()
    %cst_111 = arith.constant dense<0.000000e+00> : vector<2x16x16xf32>
    %156 = tpu.matmul %155, %140, %cst_111 {dimension_numbers = #tpu.dot_dimension_numbers<[2], [1], [1], [2], [0, 0, 0, 1, 1, 2], [0], [0]>} : vector<2x16x16xf32>, vector<2x16x16xf32>, vector<2x16x16xf32> -> vector<2x16x16xf32>
    "tpu.trace_stop"() : () -> ()
    %157 = vector.shape_cast %156 : vector<2x16x16xf32> to vector<32x16xf32>
    %158 = vector.extract_strided_slice %133 {offsets = [0, 0], sizes = [16, 32], strides = [1, 1]} : vector<32x32xf32> to vector<16x32xf32>
    %cst_112 = arith.constant dense<0.000000e+00> : vector<32x32xf32>
    %159 = tpu.matmul %157, %158, %cst_112 {dimension_numbers = #tpu.dot_dimension_numbers<[1], [0], [0], [1], [0, 0, 1, 1], [], []>} : vector<32x16xf32>, vector<16x32xf32>, vector<32x32xf32> -> vector<32x32xf32>
    %160 = arith.addf %134, %159 : vector<32x32xf32>
    %161 = vector.extract_strided_slice %131 {offsets = [0, 16], sizes = [32, 16], strides = [1, 1]} : vector<32x96xf32> to vector<32x16xf32>
    %162 = vector.shape_cast %161 : vector<32x16xf32> to vector<2x16x16xf32>
    %163 = vector.extract_strided_slice %131 {offsets = [0, 48], sizes = [32, 16], strides = [1, 1]} : vector<32x96xf32> to vector<32x16xf32>
    %164 = vector.shape_cast %163 : vector<32x16xf32> to vector<2x16x16xf32>
    %165 = vector.extract_strided_slice %131 {offsets = [0, 80], sizes = [32, 16], strides = [1, 1]} : vector<32x96xf32> to vector<32x16xf32>
    %166 = vector.shape_cast %165 : vector<32x16xf32> to vector<2x16x16xf32>
    "tpu.trace_start"() <{level = 10 : i32, message = "bqd,bkd->bqk"}> : () -> ()
    %cst_113 = arith.constant dense<0.000000e+00> : vector<2x16x16xf32>
    %167 = tpu.matmul %162, %164, %cst_113 {dimension_numbers = #tpu.dot_dimension_numbers<[2], [2], [1], [1], [0, 0, 0, 1, 1, 1], [0], [0]>} : vector<2x16x16xf32>, vector<2x16x16xf32>, vector<2x16x16xf32> -> vector<2x16x16xf32>
    "tpu.trace_stop"() : () -> ()
    %168 = vector.broadcast %101 : f32 to vector<2x16x16xf32>
    %169 = arith.mulf %167, %168 : vector<2x16x16xf32>
    %170 = vector.broadcast %99 : vector<1x16x16xf32> to vector<2x16x16xf32>
    %171 = arith.addf %169, %170 : vector<2x16x16xf32>
    %cst_114 = arith.constant dense<0xFF800000> : vector<2x16xf32>
    %172 = vector.multi_reduction <maximumf>, %171, %cst_114 [2] : vector<2x16x16xf32> to vector<2x16xf32>
    %173 = vector.shape_cast %172 : vector<2x16xf32> to vector<2x16x1xf32>
    %174 = vector.broadcast %173 : vector<2x16x1xf32> to vector<2x16x16xf32>
    %175 = arith.subf %171, %174 : vector<2x16x16xf32>
    %176 = math.exp %175 : vector<2x16x16xf32>
    %cst_115 = arith.constant dense<0.000000e+00> : vector<2x16xf32>
    %177 = vector.multi_reduction <add>, %176, %cst_115 [2] : vector<2x16x16xf32> to vector<2x16xf32>
    %178 = vector.shape_cast %177 : vector<2x16xf32> to vector<2x16x1xf32>
    %179 = tpu.reciprocal %178 {approx = true} : vector<2x16x1xf32> -> vector<2x16x1xf32>
    %180 = vector.broadcast %179 : vector<2x16x1xf32> to vector<2x16x16xf32>
    %181 = arith.mulf %176, %180 : vector<2x16x16xf32>
    "tpu.trace_start"() <{level = 10 : i32, message = "bqk,bkd->bqd"}> : () -> ()
    %cst_116 = arith.constant dense<0.000000e+00> : vector<2x16x16xf32>
    %182 = tpu.matmul %181, %166, %cst_116 {dimension_numbers = #tpu.dot_dimension_numbers<[2], [1], [1], [2], [0, 0, 0, 1, 1, 2], [0], [0]>} : vector<2x16x16xf32>, vector<2x16x16xf32>, vector<2x16x16xf32> -> vector<2x16x16xf32>
    "tpu.trace_stop"() : () -> ()
    %183 = vector.shape_cast %182 : vector<2x16x16xf32> to vector<32x16xf32>
    %184 = vector.extract_strided_slice %133 {offsets = [16, 0], sizes = [16, 32], strides = [1, 1]} : vector<32x32xf32> to vector<16x32xf32>
    %cst_117 = arith.constant dense<0.000000e+00> : vector<32x32xf32>
    %185 = tpu.matmul %183, %184, %cst_117 {dimension_numbers = #tpu.dot_dimension_numbers<[1], [0], [0], [1], [0, 0, 1, 1], [], []>} : vector<32x16xf32>, vector<16x32xf32>, vector<32x32xf32> -> vector<32x32xf32>
    %186 = arith.addf %160, %185 : vector<32x32xf32>
    %187 = arith.addf %92, %186 : vector<32x32xf32>
    %c0_118 = arith.constant 0 : index
    %c0_119 = arith.constant 0 : index
    %188 = vector.load %arg14[%c0_118, %c0_119] : memref<2x32xf32, #tpu.memory_space<vmem>>, vector<1x32xf32>
    %189 = vector.broadcast %188 : vector<1x32xf32> to vector<32x32xf32>
    %190 = arith.addf %187, %189 : vector<32x32xf32>
    %c0_120 = arith.constant 0 : index
    %c0_121 = arith.constant 0 : index
    %191 = vector.load %arg15[%c0_120, %c0_121] : memref<2x32xf32, #tpu.memory_space<vmem>>, vector<1x32xf32>
    %c0_122 = arith.constant 0 : index
    %c0_123 = arith.constant 0 : index
    %192 = vector.load %arg16[%c0_122, %c0_123] : memref<2x32xf32, #tpu.memory_space<vmem>>, vector<1x32xf32>
    %cst_124 = arith.constant dense<0.000000e+00> : vector<32xf32>
    %193 = vector.multi_reduction <add>, %190, %cst_124 [1] : vector<32x32xf32> to vector<32xf32>
    %194 = vector.shape_cast %193 : vector<32xf32> to vector<32x1xf32>
    %cst_125 = arith.constant 3.200000e+01 : f32
    %195 = vector.broadcast %cst_125 : f32 to vector<32x1xf32>
    %196 = arith.divf %194, %195 : vector<32x1xf32>
    %197 = vector.broadcast %196 : vector<32x1xf32> to vector<32x32xf32>
    %198 = arith.subf %190, %197 : vector<32x32xf32>
    %199 = arith.mulf %198, %198 : vector<32x32xf32>
    %cst_126 = arith.constant dense<0.000000e+00> : vector<32xf32>
    %200 = vector.multi_reduction <add>, %199, %cst_126 [1] : vector<32x32xf32> to vector<32xf32>
    %201 = vector.shape_cast %200 : vector<32xf32> to vector<32x1xf32>
    %cst_127 = arith.constant 3.200000e+01 : f32
    %202 = vector.broadcast %cst_127 : f32 to vector<32x1xf32>
    %203 = arith.divf %201, %202 : vector<32x1xf32>
    %204 = vector.broadcast %196 : vector<32x1xf32> to vector<32x32xf32>
    %205 = arith.subf %190, %204 : vector<32x32xf32>
    %cst_128 = arith.constant 9.99999974E-6 : f32
    %206 = vector.broadcast %cst_128 : f32 to vector<32x1xf32>
    %207 = arith.addf %203, %206 : vector<32x1xf32>
    %208 = math.rsqrt %207 : vector<32x1xf32>
    %209 = vector.broadcast %208 : vector<32x1xf32> to vector<32x32xf32>
    %210 = arith.mulf %205, %209 : vector<32x32xf32>
    %211 = vector.broadcast %191 : vector<1x32xf32> to vector<32x32xf32>
    %212 = arith.mulf %210, %211 : vector<32x32xf32>
    %213 = vector.broadcast %192 : vector<1x32xf32> to vector<32x32xf32>
    %214 = arith.addf %212, %213 : vector<32x32xf32>
    %c0_129 = arith.constant 0 : index
    %c0_130 = arith.constant 0 : index
    %c0_131 = arith.constant 0 : index
    %215 = vector.load %arg17[%c0_129, %c0_130, %c0_131] : memref<2x32x128xf32, #tpu.memory_space<vmem>>, vector<1x32x128xf32>
    %216 = vector.shape_cast %215 : vector<1x32x128xf32> to vector<32x128xf32>
    %cst_132 = arith.constant dense<0.000000e+00> : vector<32x128xf32>
    %217 = tpu.matmul %214, %216, %cst_132 {dimension_numbers = #tpu.dot_dimension_numbers<[1], [0], [0], [1], [0, 0, 1, 1], [], []>} : vector<32x32xf32>, vector<32x128xf32>, vector<32x128xf32> -> vector<32x128xf32>
    %c0_133 = arith.constant 0 : index
    %c0_134 = arith.constant 0 : index
    %218 = vector.load %arg18[%c0_133, %c0_134] : memref<2x128xf32, #tpu.memory_space<vmem>>, vector<1x128xf32>
    %219 = vector.broadcast %218 : vector<1x128xf32> to vector<32x128xf32>
    %220 = arith.addf %217, %219 : vector<32x128xf32>
    %cst_135 = arith.constant 0.636619746 : f32
    %221 = math.sqrt %cst_135 : f32
    %cst_136 = arith.constant 5.000000e-01 : f32
    %222 = vector.broadcast %cst_136 : f32 to vector<32x128xf32>
    %223 = arith.mulf %222, %220 : vector<32x128xf32>
    %cst_137 = arith.constant 4.471500e-02 : f32
    %224 = vector.broadcast %cst_137 : f32 to vector<32x128xf32>
    %225 = arith.mulf %224, %220 : vector<32x128xf32>
    %226 = arith.mulf %225, %220 : vector<32x128xf32>
    %227 = arith.mulf %226, %220 : vector<32x128xf32>
    %228 = arith.addf %220, %227 : vector<32x128xf32>
    %229 = vector.broadcast %221 : f32 to vector<32x128xf32>
    %230 = arith.mulf %229, %228 : vector<32x128xf32>
    %231 = math.tanh %230 : vector<32x128xf32>
    %cst_138 = arith.constant 1.000000e+00 : f32
    %232 = vector.broadcast %cst_138 : f32 to vector<32x128xf32>
    %233 = arith.addf %232, %231 : vector<32x128xf32>
    %234 = arith.mulf %223, %233 : vector<32x128xf32>
    %c0_139 = arith.constant 0 : index
    %c0_140 = arith.constant 0 : index
    %c0_141 = arith.constant 0 : index
    %235 = vector.load %arg19[%c0_139, %c0_140, %c0_141] : memref<2x128x32xf32, #tpu.memory_space<vmem>>, vector<1x128x32xf32>
    %236 = vector.shape_cast %235 : vector<1x128x32xf32> to vector<128x32xf32>
    %cst_142 = arith.constant dense<0.000000e+00> : vector<32x32xf32>
    %237 = tpu.matmul %234, %236, %cst_142 {dimension_numbers = #tpu.dot_dimension_numbers<[1], [0], [0], [1], [0, 0, 1, 1], [], []>} : vector<32x128xf32>, vector<128x32xf32>, vector<32x32xf32> -> vector<32x32xf32>
    %c0_143 = arith.constant 0 : index
    %c0_144 = arith.constant 0 : index
    %238 = vector.load %arg20[%c0_143, %c0_144] : memref<2x32xf32, #tpu.memory_space<vmem>>, vector<1x32xf32>
    %239 = vector.broadcast %238 : vector<1x32xf32> to vector<32x32xf32>
    %240 = arith.addf %237, %239 : vector<32x32xf32>
    %241 = arith.addf %190, %240 : vector<32x32xf32>
    %c1_145 = arith.constant 1 : index
    %c0_146 = arith.constant 0 : index
    %242 = vector.load %arg9[%c1_145, %c0_146] : memref<2x32xf32, #tpu.memory_space<vmem>>, vector<1x32xf32>
    %c1_147 = arith.constant 1 : index
    %c0_148 = arith.constant 0 : index
    %243 = vector.load %arg10[%c1_147, %c0_148] : memref<2x32xf32, #tpu.memory_space<vmem>>, vector<1x32xf32>
    %cst_149 = arith.constant dense<0.000000e+00> : vector<32xf32>
    %244 = vector.multi_reduction <add>, %241, %cst_149 [1] : vector<32x32xf32> to vector<32xf32>
    %245 = vector.shape_cast %244 : vector<32xf32> to vector<32x1xf32>
    %cst_150 = arith.constant 3.200000e+01 : f32
    %246 = vector.broadcast %cst_150 : f32 to vector<32x1xf32>
    %247 = arith.divf %245, %246 : vector<32x1xf32>
    %248 = vector.broadcast %247 : vector<32x1xf32> to vector<32x32xf32>
    %249 = arith.subf %241, %248 : vector<32x32xf32>
    %250 = arith.mulf %249, %249 : vector<32x32xf32>
    %cst_151 = arith.constant dense<0.000000e+00> : vector<32xf32>
    %251 = vector.multi_reduction <add>, %250, %cst_151 [1] : vector<32x32xf32> to vector<32xf32>
    %252 = vector.shape_cast %251 : vector<32xf32> to vector<32x1xf32>
    %cst_152 = arith.constant 3.200000e+01 : f32
    %253 = vector.broadcast %cst_152 : f32 to vector<32x1xf32>
    %254 = arith.divf %252, %253 : vector<32x1xf32>
    %255 = vector.broadcast %247 : vector<32x1xf32> to vector<32x32xf32>
    %256 = arith.subf %241, %255 : vector<32x32xf32>
    %cst_153 = arith.constant 9.99999974E-6 : f32
    %257 = vector.broadcast %cst_153 : f32 to vector<32x1xf32>
    %258 = arith.addf %254, %257 : vector<32x1xf32>
    %259 = math.rsqrt %258 : vector<32x1xf32>
    %260 = vector.broadcast %259 : vector<32x1xf32> to vector<32x32xf32>
    %261 = arith.mulf %256, %260 : vector<32x32xf32>
    %262 = vector.broadcast %242 : vector<1x32xf32> to vector<32x32xf32>
    %263 = arith.mulf %261, %262 : vector<32x32xf32>
    %264 = vector.broadcast %243 : vector<1x32xf32> to vector<32x32xf32>
    %265 = arith.addf %263, %264 : vector<32x32xf32>
    %c1_154 = arith.constant 1 : index
    %c0_155 = arith.constant 0 : index
    %c0_156 = arith.constant 0 : index
    %266 = vector.load %arg11[%c1_154, %c0_155, %c0_156] : memref<2x32x96xf32, #tpu.memory_space<vmem>>, vector<1x32x96xf32>
    %267 = vector.shape_cast %266 : vector<1x32x96xf32> to vector<32x96xf32>
    %cst_157 = arith.constant dense<0.000000e+00> : vector<32x96xf32>
    %268 = tpu.matmul %265, %267, %cst_157 {dimension_numbers = #tpu.dot_dimension_numbers<[1], [0], [0], [1], [0, 0, 1, 1], [], []>} : vector<32x32xf32>, vector<32x96xf32>, vector<32x96xf32> -> vector<32x96xf32>
    %c1_158 = arith.constant 1 : index
    %c0_159 = arith.constant 0 : index
    %269 = vector.load %arg12[%c1_158, %c0_159] : memref<2x96xf32, #tpu.memory_space<vmem>>, vector<1x96xf32>
    %270 = vector.broadcast %269 : vector<1x96xf32> to vector<32x96xf32>
    %271 = arith.addf %268, %270 : vector<32x96xf32>
    %c1_160 = arith.constant 1 : index
    %c0_161 = arith.constant 0 : index
    %c0_162 = arith.constant 0 : index
    %272 = vector.load %arg13[%c1_160, %c0_161, %c0_162] : memref<2x32x32xf32, #tpu.memory_space<vmem>>, vector<1x32x32xf32>
    %273 = vector.shape_cast %272 : vector<1x32x32xf32> to vector<32x32xf32>
    %cst_163 = arith.constant 0.000000e+00 : f32
    %274 = vector.broadcast %cst_163 : f32 to vector<32x32xf32>
    %275 = vector.extract_strided_slice %271 {offsets = [0, 0], sizes = [32, 16], strides = [1, 1]} : vector<32x96xf32> to vector<32x16xf32>
    %276 = vector.shape_cast %275 : vector<32x16xf32> to vector<2x16x16xf32>
    %277 = vector.extract_strided_slice %271 {offsets = [0, 32], sizes = [32, 16], strides = [1, 1]} : vector<32x96xf32> to vector<32x16xf32>
    %278 = vector.shape_cast %277 : vector<32x16xf32> to vector<2x16x16xf32>
    %279 = vector.extract_strided_slice %271 {offsets = [0, 64], sizes = [32, 16], strides = [1, 1]} : vector<32x96xf32> to vector<32x16xf32>
    %280 = vector.shape_cast %279 : vector<32x16xf32> to vector<2x16x16xf32>
    "tpu.trace_start"() <{level = 10 : i32, message = "bqd,bkd->bqk"}> : () -> ()
    %cst_164 = arith.constant dense<0.000000e+00> : vector<2x16x16xf32>
    %281 = tpu.matmul %276, %278, %cst_164 {dimension_numbers = #tpu.dot_dimension_numbers<[2], [2], [1], [1], [0, 0, 0, 1, 1, 1], [0], [0]>} : vector<2x16x16xf32>, vector<2x16x16xf32>, vector<2x16x16xf32> -> vector<2x16x16xf32>
    "tpu.trace_stop"() : () -> ()
    %282 = vector.broadcast %101 : f32 to vector<2x16x16xf32>
    %283 = arith.mulf %281, %282 : vector<2x16x16xf32>
    %284 = vector.broadcast %99 : vector<1x16x16xf32> to vector<2x16x16xf32>
    %285 = arith.addf %283, %284 : vector<2x16x16xf32>
    %cst_165 = arith.constant dense<0xFF800000> : vector<2x16xf32>
    %286 = vector.multi_reduction <maximumf>, %285, %cst_165 [2] : vector<2x16x16xf32> to vector<2x16xf32>
    %287 = vector.shape_cast %286 : vector<2x16xf32> to vector<2x16x1xf32>
    %288 = vector.broadcast %287 : vector<2x16x1xf32> to vector<2x16x16xf32>
    %289 = arith.subf %285, %288 : vector<2x16x16xf32>
    %290 = math.exp %289 : vector<2x16x16xf32>
    %cst_166 = arith.constant dense<0.000000e+00> : vector<2x16xf32>
    %291 = vector.multi_reduction <add>, %290, %cst_166 [2] : vector<2x16x16xf32> to vector<2x16xf32>
    %292 = vector.shape_cast %291 : vector<2x16xf32> to vector<2x16x1xf32>
    %293 = tpu.reciprocal %292 {approx = true} : vector<2x16x1xf32> -> vector<2x16x1xf32>
    %294 = vector.broadcast %293 : vector<2x16x1xf32> to vector<2x16x16xf32>
    %295 = arith.mulf %290, %294 : vector<2x16x16xf32>
    "tpu.trace_start"() <{level = 10 : i32, message = "bqk,bkd->bqd"}> : () -> ()
    %cst_167 = arith.constant dense<0.000000e+00> : vector<2x16x16xf32>
    %296 = tpu.matmul %295, %280, %cst_167 {dimension_numbers = #tpu.dot_dimension_numbers<[2], [1], [1], [2], [0, 0, 0, 1, 1, 2], [0], [0]>} : vector<2x16x16xf32>, vector<2x16x16xf32>, vector<2x16x16xf32> -> vector<2x16x16xf32>
    "tpu.trace_stop"() : () -> ()
    %297 = vector.shape_cast %296 : vector<2x16x16xf32> to vector<32x16xf32>
    %298 = vector.extract_strided_slice %273 {offsets = [0, 0], sizes = [16, 32], strides = [1, 1]} : vector<32x32xf32> to vector<16x32xf32>
    %cst_168 = arith.constant dense<0.000000e+00> : vector<32x32xf32>
    %299 = tpu.matmul %297, %298, %cst_168 {dimension_numbers = #tpu.dot_dimension_numbers<[1], [0], [0], [1], [0, 0, 1, 1], [], []>} : vector<32x16xf32>, vector<16x32xf32>, vector<32x32xf32> -> vector<32x32xf32>
    %300 = arith.addf %274, %299 : vector<32x32xf32>
    %301 = vector.extract_strided_slice %271 {offsets = [0, 16], sizes = [32, 16], strides = [1, 1]} : vector<32x96xf32> to vector<32x16xf32>
    %302 = vector.shape_cast %301 : vector<32x16xf32> to vector<2x16x16xf32>
    %303 = vector.extract_strided_slice %271 {offsets = [0, 48], sizes = [32, 16], strides = [1, 1]} : vector<32x96xf32> to vector<32x16xf32>
    %304 = vector.shape_cast %303 : vector<32x16xf32> to vector<2x16x16xf32>
    %305 = vector.extract_strided_slice %271 {offsets = [0, 80], sizes = [32, 16], strides = [1, 1]} : vector<32x96xf32> to vector<32x16xf32>
    %306 = vector.shape_cast %305 : vector<32x16xf32> to vector<2x16x16xf32>
    "tpu.trace_start"() <{level = 10 : i32, message = "bqd,bkd->bqk"}> : () -> ()
    %cst_169 = arith.constant dense<0.000000e+00> : vector<2x16x16xf32>
    %307 = tpu.matmul %302, %304, %cst_169 {dimension_numbers = #tpu.dot_dimension_numbers<[2], [2], [1], [1], [0, 0, 0, 1, 1, 1], [0], [0]>} : vector<2x16x16xf32>, vector<2x16x16xf32>, vector<2x16x16xf32> -> vector<2x16x16xf32>
    "tpu.trace_stop"() : () -> ()
    %308 = vector.broadcast %101 : f32 to vector<2x16x16xf32>
    %309 = arith.mulf %307, %308 : vector<2x16x16xf32>
    %310 = vector.broadcast %99 : vector<1x16x16xf32> to vector<2x16x16xf32>
    %311 = arith.addf %309, %310 : vector<2x16x16xf32>
    %cst_170 = arith.constant dense<0xFF800000> : vector<2x16xf32>
    %312 = vector.multi_reduction <maximumf>, %311, %cst_170 [2] : vector<2x16x16xf32> to vector<2x16xf32>
    %313 = vector.shape_cast %312 : vector<2x16xf32> to vector<2x16x1xf32>
    %314 = vector.broadcast %313 : vector<2x16x1xf32> to vector<2x16x16xf32>
    %315 = arith.subf %311, %314 : vector<2x16x16xf32>
    %316 = math.exp %315 : vector<2x16x16xf32>
    %cst_171 = arith.constant dense<0.000000e+00> : vector<2x16xf32>
    %317 = vector.multi_reduction <add>, %316, %cst_171 [2] : vector<2x16x16xf32> to vector<2x16xf32>
    %318 = vector.shape_cast %317 : vector<2x16xf32> to vector<2x16x1xf32>
    %319 = tpu.reciprocal %318 {approx = true} : vector<2x16x1xf32> -> vector<2x16x1xf32>
    %320 = vector.broadcast %319 : vector<2x16x1xf32> to vector<2x16x16xf32>
    %321 = arith.mulf %316, %320 : vector<2x16x16xf32>
    "tpu.trace_start"() <{level = 10 : i32, message = "bqk,bkd->bqd"}> : () -> ()
    %cst_172 = arith.constant dense<0.000000e+00> : vector<2x16x16xf32>
    %322 = tpu.matmul %321, %306, %cst_172 {dimension_numbers = #tpu.dot_dimension_numbers<[2], [1], [1], [2], [0, 0, 0, 1, 1, 2], [0], [0]>} : vector<2x16x16xf32>, vector<2x16x16xf32>, vector<2x16x16xf32> -> vector<2x16x16xf32>
    "tpu.trace_stop"() : () -> ()
    %323 = vector.shape_cast %322 : vector<2x16x16xf32> to vector<32x16xf32>
    %324 = vector.extract_strided_slice %273 {offsets = [16, 0], sizes = [16, 32], strides = [1, 1]} : vector<32x32xf32> to vector<16x32xf32>
    %cst_173 = arith.constant dense<0.000000e+00> : vector<32x32xf32>
    %325 = tpu.matmul %323, %324, %cst_173 {dimension_numbers = #tpu.dot_dimension_numbers<[1], [0], [0], [1], [0, 0, 1, 1], [], []>} : vector<32x16xf32>, vector<16x32xf32>, vector<32x32xf32> -> vector<32x32xf32>
    %326 = arith.addf %300, %325 : vector<32x32xf32>
    %327 = arith.addf %241, %326 : vector<32x32xf32>
    %c1_174 = arith.constant 1 : index
    %c0_175 = arith.constant 0 : index
    %328 = vector.load %arg14[%c1_174, %c0_175] : memref<2x32xf32, #tpu.memory_space<vmem>>, vector<1x32xf32>
    %329 = vector.broadcast %328 : vector<1x32xf32> to vector<32x32xf32>
    %330 = arith.addf %327, %329 : vector<32x32xf32>
    %c1_176 = arith.constant 1 : index
    %c0_177 = arith.constant 0 : index
    %331 = vector.load %arg15[%c1_176, %c0_177] : memref<2x32xf32, #tpu.memory_space<vmem>>, vector<1x32xf32>
    %c1_178 = arith.constant 1 : index
    %c0_179 = arith.constant 0 : index
    %332 = vector.load %arg16[%c1_178, %c0_179] : memref<2x32xf32, #tpu.memory_space<vmem>>, vector<1x32xf32>
    %cst_180 = arith.constant dense<0.000000e+00> : vector<32xf32>
    %333 = vector.multi_reduction <add>, %330, %cst_180 [1] : vector<32x32xf32> to vector<32xf32>
    %334 = vector.shape_cast %333 : vector<32xf32> to vector<32x1xf32>
    %cst_181 = arith.constant 3.200000e+01 : f32
    %335 = vector.broadcast %cst_181 : f32 to vector<32x1xf32>
    %336 = arith.divf %334, %335 : vector<32x1xf32>
    %337 = vector.broadcast %336 : vector<32x1xf32> to vector<32x32xf32>
    %338 = arith.subf %330, %337 : vector<32x32xf32>
    %339 = arith.mulf %338, %338 : vector<32x32xf32>
    %cst_182 = arith.constant dense<0.000000e+00> : vector<32xf32>
    %340 = vector.multi_reduction <add>, %339, %cst_182 [1] : vector<32x32xf32> to vector<32xf32>
    %341 = vector.shape_cast %340 : vector<32xf32> to vector<32x1xf32>
    %cst_183 = arith.constant 3.200000e+01 : f32
    %342 = vector.broadcast %cst_183 : f32 to vector<32x1xf32>
    %343 = arith.divf %341, %342 : vector<32x1xf32>
    %344 = vector.broadcast %336 : vector<32x1xf32> to vector<32x32xf32>
    %345 = arith.subf %330, %344 : vector<32x32xf32>
    %cst_184 = arith.constant 9.99999974E-6 : f32
    %346 = vector.broadcast %cst_184 : f32 to vector<32x1xf32>
    %347 = arith.addf %343, %346 : vector<32x1xf32>
    %348 = math.rsqrt %347 : vector<32x1xf32>
    %349 = vector.broadcast %348 : vector<32x1xf32> to vector<32x32xf32>
    %350 = arith.mulf %345, %349 : vector<32x32xf32>
    %351 = vector.broadcast %331 : vector<1x32xf32> to vector<32x32xf32>
    %352 = arith.mulf %350, %351 : vector<32x32xf32>
    %353 = vector.broadcast %332 : vector<1x32xf32> to vector<32x32xf32>
    %354 = arith.addf %352, %353 : vector<32x32xf32>
    %c1_185 = arith.constant 1 : index
    %c0_186 = arith.constant 0 : index
    %c0_187 = arith.constant 0 : index
    %355 = vector.load %arg17[%c1_185, %c0_186, %c0_187] : memref<2x32x128xf32, #tpu.memory_space<vmem>>, vector<1x32x128xf32>
    %356 = vector.shape_cast %355 : vector<1x32x128xf32> to vector<32x128xf32>
    %cst_188 = arith.constant dense<0.000000e+00> : vector<32x128xf32>
    %357 = tpu.matmul %354, %356, %cst_188 {dimension_numbers = #tpu.dot_dimension_numbers<[1], [0], [0], [1], [0, 0, 1, 1], [], []>} : vector<32x32xf32>, vector<32x128xf32>, vector<32x128xf32> -> vector<32x128xf32>
    %c1_189 = arith.constant 1 : index
    %c0_190 = arith.constant 0 : index
    %358 = vector.load %arg18[%c1_189, %c0_190] : memref<2x128xf32, #tpu.memory_space<vmem>>, vector<1x128xf32>
    %359 = vector.broadcast %358 : vector<1x128xf32> to vector<32x128xf32>
    %360 = arith.addf %357, %359 : vector<32x128xf32>
    %cst_191 = arith.constant 0.636619746 : f32
    %361 = math.sqrt %cst_191 : f32
    %cst_192 = arith.constant 5.000000e-01 : f32
    %362 = vector.broadcast %cst_192 : f32 to vector<32x128xf32>
    %363 = arith.mulf %362, %360 : vector<32x128xf32>
    %cst_193 = arith.constant 4.471500e-02 : f32
    %364 = vector.broadcast %cst_193 : f32 to vector<32x128xf32>
    %365 = arith.mulf %364, %360 : vector<32x128xf32>
    %366 = arith.mulf %365, %360 : vector<32x128xf32>
    %367 = arith.mulf %366, %360 : vector<32x128xf32>
    %368 = arith.addf %360, %367 : vector<32x128xf32>
    %369 = vector.broadcast %361 : f32 to vector<32x128xf32>
    %370 = arith.mulf %369, %368 : vector<32x128xf32>
    %371 = math.tanh %370 : vector<32x128xf32>
    %cst_194 = arith.constant 1.000000e+00 : f32
    %372 = vector.broadcast %cst_194 : f32 to vector<32x128xf32>
    %373 = arith.addf %372, %371 : vector<32x128xf32>
    %374 = arith.mulf %363, %373 : vector<32x128xf32>
    %c1_195 = arith.constant 1 : index
    %c0_196 = arith.constant 0 : index
    %c0_197 = arith.constant 0 : index
    %375 = vector.load %arg19[%c1_195, %c0_196, %c0_197] : memref<2x128x32xf32, #tpu.memory_space<vmem>>, vector<1x128x32xf32>
    %376 = vector.shape_cast %375 : vector<1x128x32xf32> to vector<128x32xf32>
    %cst_198 = arith.constant dense<0.000000e+00> : vector<32x32xf32>
    %377 = tpu.matmul %374, %376, %cst_198 {dimension_numbers = #tpu.dot_dimension_numbers<[1], [0], [0], [1], [0, 0, 1, 1], [], []>} : vector<32x128xf32>, vector<128x32xf32>, vector<32x32xf32> -> vector<32x32xf32>
    %c1_199 = arith.constant 1 : index
    %c0_200 = arith.constant 0 : index
    %378 = vector.load %arg20[%c1_199, %c0_200] : memref<2x32xf32, #tpu.memory_space<vmem>>, vector<1x32xf32>
    %379 = vector.broadcast %378 : vector<1x32xf32> to vector<32x32xf32>
    %380 = arith.addf %377, %379 : vector<32x32xf32>
    %381 = arith.addf %330, %380 : vector<32x32xf32>
    %c0_201 = arith.constant 0 : index
    %c0_202 = arith.constant 0 : index
    %382 = vector.load %arg21[%c0_201, %c0_202] : memref<1x32xf32, #tpu.memory_space<vmem>>, vector<1x32xf32>
    %c0_203 = arith.constant 0 : index
    %c0_204 = arith.constant 0 : index
    %383 = vector.load %arg22[%c0_203, %c0_204] : memref<1x32xf32, #tpu.memory_space<vmem>>, vector<1x32xf32>
    %cst_205 = arith.constant dense<0.000000e+00> : vector<32xf32>
    %384 = vector.multi_reduction <add>, %381, %cst_205 [1] : vector<32x32xf32> to vector<32xf32>
    %385 = vector.shape_cast %384 : vector<32xf32> to vector<32x1xf32>
    %cst_206 = arith.constant 3.200000e+01 : f32
    %386 = vector.broadcast %cst_206 : f32 to vector<32x1xf32>
    %387 = arith.divf %385, %386 : vector<32x1xf32>
    %388 = vector.broadcast %387 : vector<32x1xf32> to vector<32x32xf32>
    %389 = arith.subf %381, %388 : vector<32x32xf32>
    %390 = arith.mulf %389, %389 : vector<32x32xf32>
    %cst_207 = arith.constant dense<0.000000e+00> : vector<32xf32>
    %391 = vector.multi_reduction <add>, %390, %cst_207 [1] : vector<32x32xf32> to vector<32xf32>
    %392 = vector.shape_cast %391 : vector<32xf32> to vector<32x1xf32>
    %cst_208 = arith.constant 3.200000e+01 : f32
    %393 = vector.broadcast %cst_208 : f32 to vector<32x1xf32>
    %394 = arith.divf %392, %393 : vector<32x1xf32>
    %395 = vector.broadcast %387 : vector<32x1xf32> to vector<32x32xf32>
    %396 = arith.subf %381, %395 : vector<32x32xf32>
    %cst_209 = arith.constant 9.99999974E-6 : f32
    %397 = vector.broadcast %cst_209 : f32 to vector<32x1xf32>
    %398 = arith.addf %394, %397 : vector<32x1xf32>
    %399 = math.rsqrt %398 : vector<32x1xf32>
    %400 = vector.broadcast %399 : vector<32x1xf32> to vector<32x32xf32>
    %401 = arith.mulf %396, %400 : vector<32x32xf32>
    %402 = vector.broadcast %382 : vector<1x32xf32> to vector<32x32xf32>
    %403 = arith.mulf %401, %402 : vector<32x32xf32>
    %404 = vector.broadcast %383 : vector<1x32xf32> to vector<32x32xf32>
    %405 = arith.addf %403, %404 : vector<32x32xf32>
    %c0_210 = arith.constant 0 : index
    %c0_211 = arith.constant 0 : index
    %406 = vector.load %arg3[%c0_210, %c0_211] : memref<128x32xf32, #tpu.memory_space<vmem>>, vector<128x32xf32>
    %cst_212 = arith.constant dense<0.000000e+00> : vector<32x128xf32>
    %407 = tpu.matmul %405, %406, %cst_212 {dimension_numbers = #tpu.dot_dimension_numbers<[1], [1], [0], [0], [0, 0, 1, 0], [], []>} : vector<32x32xf32>, vector<128x32xf32>, vector<32x128xf32> -> vector<32x128xf32>
    %c0_213 = arith.constant 0 : index
    %c0_214 = arith.constant 0 : index
    %408 = vector.load %arg23[%c0_213, %c0_214] : memref<32x128xf32, #tpu.memory_space<vmem>>, vector<32x128xf32>
    tpu.vector_store %arg23[%c0_213, %c0_214], %407 {strides = array<i32>} : memref<32x128xf32, #tpu.memory_space<vmem>>, vector<32x128xf32>,
    return
  }
  func.func @transform_0(%arg0: i32) -> (i32, i32) {
    %c0_i32 = arith.constant 0 : i32
    %c0_i32_0 = arith.constant 0 : i32
    %c0_i32_1 = arith.constant 0 : i32
    return %c0_i32, %c0_i32_0 : i32, i32
  }
  func.func @transform_1(%arg0: i32) -> (i32, i32) {
    %c0_i32 = arith.constant 0 : i32
    %c0_i32_0 = arith.constant 0 : i32
    %c0_i32_1 = arith.constant 0 : i32
    return %c0_i32, %c0_i32_0 : i32, i32
  }
  func.func @transform_2(%arg0: i32) -> (i32, i32) {
    %c0_i32 = arith.constant 0 : i32
    %c0_i32_0 = arith.constant 0 : i32
    %c0_i32_1 = arith.constant 0 : i32
    return %c0_i32, %c0_i32_0 : i32, i32
  }
  func.func @transform_3(%arg0: i32) -> (i32, i32) {
    %c0_i32 = arith.constant 0 : i32
    %c0_i32_0 = arith.constant 0 : i32
    %c0_i32_1 = arith.constant 0 : i32
    return %c0_i32, %c0_i32_0 : i32, i32
  }
  func.func @transform_4(%arg0: i32) -> (i32, i32) {
    %c0_i32 = arith.constant 0 : i32
    %c0_i32_0 = arith.constant 0 : i32
    %c0_i32_1 = arith.constant 0 : i32
    return %c0_i32, %c0_i32_0 : i32, i32
  }
  func.func @transform_5(%arg0: i32) -> (i32, i32) {
    %c0_i32 = arith.constant 0 : i32
    %c0_i32_0 = arith.constant 0 : i32
    %c0_i32_1 = arith.constant 0 : i32
    return %c0_i32, %c0_i32_0 : i32, i32
  }
  func.func @transform_6(%arg0: i32) -> (i32, i32, i32) {
    %c0_i32 = arith.constant 0 : i32
    %c0_i32_0 = arith.constant 0 : i32
    %c0_i32_1 = arith.constant 0 : i32
    %c0_i32_2 = arith.constant 0 : i32
    return %c0_i32, %c0_i32_0, %c0_i32_1 : i32, i32, i32
  }
  func.func @transform_7(%arg0: i32) -> (i32, i32) {
    %c0_i32 = arith.constant 0 : i32
    %c0_i32_0 = arith.constant 0 : i32
    %c0_i32_1 = arith.constant 0 : i32
    return %c0_i32, %c0_i32_0 : i32, i32
  }
  func.func @transform_8(%arg0: i32) -> (i32, i32) {
    %c0_i32 = arith.constant 0 : i32
    %c0_i32_0 = arith.constant 0 : i32
    %c0_i32_1 = arith.constant 0 : i32
    return %c0_i32, %c0_i32_0 : i32, i32
  }
  func.func @transform_9(%arg0: i32) -> (i32, i32) {
    %c0_i32 = arith.constant 0 : i32
    %c0_i32_0 = arith.constant 0 : i32
    %c0_i32_1 = arith.constant 0 : i32
    return %c0_i32, %c0_i32_0 : i32, i32
  }
  func.func @transform_10(%arg0: i32) -> (i32, i32, i32) {
    %c0_i32 = arith.constant 0 : i32
    %c0_i32_0 = arith.constant 0 : i32
    %c0_i32_1 = arith.constant 0 : i32
    %c0_i32_2 = arith.constant 0 : i32
    return %c0_i32, %c0_i32_0, %c0_i32_1 : i32, i32, i32
  }
  func.func @transform_11(%arg0: i32) -> (i32, i32) {
    %c0_i32 = arith.constant 0 : i32
    %c0_i32_0 = arith.constant 0 : i32
    %c0_i32_1 = arith.constant 0 : i32
    return %c0_i32, %c0_i32_0 : i32, i32
  }
  func.func @transform_12(%arg0: i32) -> (i32, i32, i32) {
    %c0_i32 = arith.constant 0 : i32
    %c0_i32_0 = arith.constant 0 : i32
    %c0_i32_1 = arith.constant 0 : i32
    %c0_i32_2 = arith.constant 0 : i32
    return %c0_i32, %c0_i32_0, %c0_i32_1 : i32, i32, i32
  }
  func.func @transform_13(%arg0: i32) -> (i32, i32) {
    %c0_i32 = arith.constant 0 : i32
    %c0_i32_0 = arith.constant 0 : i32
    %c0_i32_1 = arith.constant 0 : i32
    return %c0_i32, %c0_i32_0 : i32, i32
  }
  func.func @transform_14(%arg0: i32) -> (i32, i32) {
    %c0_i32 = arith.constant 0 : i32
    %c0_i32_0 = arith.constant 0 : i32
    %c0_i32_1 = arith.constant 0 : i32
    return %c0_i32, %c0_i32_0 : i32, i32
  }
  func.func @transform_15(%arg0: i32) -> (i32, i32) {
    %c0_i32 = arith.constant 0 : i32
    %c0_i32_0 = arith.constant 0 : i32
    %c0_i32_1 = arith.constant 0 : i32
    return %c0_i32, %c0_i32_0 : i32, i32
  }
  func.func @transform_16(%arg0: i32) -> (i32, i32, i32) {
    %c0_i32 = arith.constant 0 : i32
    %c0_i32_0 = arith.constant 0 : i32
    %c0_i32_1 = arith.constant 0 : i32
    %c0_i32_2 = arith.constant 0 : i32
    return %c0_i32, %c0_i32_0, %c0_i32_1 : i32, i32, i32
  }
  func.func @transform_17(%arg0: i32) -> (i32, i32) {
    %c0_i32 = arith.constant 0 : i32
    %c0_i32_0 = arith.constant 0 : i32
    %c0_i32_1 = arith.constant 0 : i32
    return %c0_i32, %c0_i32_0 : i32, i32
  }
  func.func @transform_18(%arg0: i32) -> (i32, i32, i32) {
    %c0_i32 = arith.constant 0 : i32
    %c0_i32_0 = arith.constant 0 : i32
    %c0_i32_1 = arith.constant 0 : i32
    %c0_i32_2 = arith.constant 0 : i32
    return %c0_i32, %c0_i32_0, %c0_i32_1 : i32, i32, i32
  }
  func.func @transform_19(%arg0: i32) -> (i32, i32) {
    %c0_i32 = arith.constant 0 : i32
    %c0_i32_0 = arith.constant 0 : i32
    %c0_i32_1 = arith.constant 0 : i32
    return %c0_i32, %c0_i32_0 : i32, i32
  }
  func.func @transform_20(%arg0: i32) -> (i32, i32) {
    %c0_i32 = arith.constant 0 : i32
    %c0_i32_0 = arith.constant 0 : i32
    %c0_i32_1 = arith.constant 0 : i32
    return %c0_i32, %c0_i32_0 : i32, i32
  }
  func.func @transform_21(%arg0: i32) -> (i32, i32) {
    %c0_i32 = arith.constant 0 : i32
    %c0_i32_0 = arith.constant 0 : i32
    %c0_i32_1 = arith.constant 0 : i32
    return %c0_i32, %c0_i32_0 : i32, i32
  }
  func.func @transform_22(%arg0: i32) -> (i32, i32) {
    %c0_i32 = arith.constant 0 : i32
    %c0_i32_0 = arith.constant 0 : i32
    %c0_i32_1 = arith.constant 0 : i32
    return %c0_i32, %c0_i32_0 : i32, i32
  }
}

</mosaic_0001>

<llo_original>
// kernel: clipcap_forward.1
$region0: #{clipcap_forward.1}
  #allocation0 [shape = 'u32[]', space=smem, size = 0x4, offset = 0x4, fixed_abs, tag = 'smem constant byte address 0x4 - core index']
  #allocation1 [shape = 'u32[72,128]{1,0:T(1,128)}', space=vmem, size = 0x9000, scoped, tag = 'internal scratch']
  #allocation2 [shape = 'f32[2,16,32]{2,1,0:T(8,128)}', space=vmem, size = 0x4000, scoped, tag = 'scratch operand']
  %s0 = inlined_call_operand.vmem [shape: s32[16,1], index: 0, kind: input, shape index: {}]
  %s1 = inlined_call_operand.vmem [shape: f32[2,32], index: 1, kind: input, shape index: {}]
  %s2 = inlined_call_operand.vmem [shape: f32[128,32], index: 2, kind: input, shape index: {}]
  %s3 = inlined_call_operand.vmem [shape: f32[64,32], index: 3, kind: input, shape index: {}]
  %s4 = inlined_call_operand.vmem [shape: f32[32,128], index: 4, kind: input, shape index: {}]
  %s5 = inlined_call_operand.vmem [shape: f32[1,128], index: 5, kind: input, shape index: {}]
  %s6 = inlined_call_operand.vmem [shape: f32[8,128,32], index: 6, kind: input, shape index: {}]
  %s7 = inlined_call_operand.vmem [shape: f32[8,32], index: 7, kind: input, shape index: {}]
  %s8 = inlined_call_operand.vmem [shape: f32[2,32], index: 8, kind: input, shape index: {}]
  %s9 = inlined_call_operand.vmem [shape: f32[2,32], index: 9, kind: input, shape index: {}]
  %s10 = inlined_call_operand.vmem [shape: f32[2,32,96], index: 10, kind: input, shape index: {}]
  %s11 = inlined_call_operand.vmem [shape: f32[2,96], index: 11, kind: input, shape index: {}]
  %s12 = inlined_call_operand.vmem [shape: f32[2,32,32], index: 12, kind: input, shape index: {}]
  %s13 = inlined_call_operand.vmem [shape: f32[2,32], index: 13, kind: input, shape index: {}]
  %s14 = inlined_call_operand.vmem [shape: f32[2,32], index: 14, kind: input, shape index: {}]
  %s15 = inlined_call_operand.vmem [shape: f32[2,32], index: 15, kind: input, shape index: {}]
  %s16 = inlined_call_operand.vmem [shape: f32[2,32,128], index: 16, kind: input, shape index: {}]
  %s17 = inlined_call_operand.vmem [shape: f32[2,128], index: 17, kind: input, shape index: {}]
  %s18 = inlined_call_operand.vmem [shape: f32[2,128,32], index: 18, kind: input, shape index: {}]
  %s19 = inlined_call_operand.vmem [shape: f32[2,32], index: 19, kind: input, shape index: {}]
  %s20 = inlined_call_operand.vmem [shape: f32[1,32], index: 20, kind: input, shape index: {}]
  %s21 = inlined_call_operand.vmem [shape: f32[1,32], index: 21, kind: input, shape index: {}]
  %s22 = inlined_call_operand.hbm [shape: f32[32,128], index: 22, kind: output, shape index: {}]
  %s23 = sld [smem:[#allocation0]]
  $region98: #{clipcap_forward.1} parent=0
    _
  %s25 = ssub.s32 1, %s23
  %s26 = scalar_select 0, %s25, %s23
  $region1: #{clipcap_forward.1} parent=0
    #allocation3 [shape = 'u8[16384]{0}', space=vmem, size = 0x4000, scoped, tag = 'output window, operand 0, single buffered']
    #allocation4 [shape = 's32[1]{0}', space=sflag, size = 0x4, scoped, tag = 'scoped memory for clipcap_forward.1']
    %27 = vsyncpa [#allocation4], 0
    // Predicated region
    $region2: #{clipcap_forward.1} parent=1 // pred_check
      _
    $region3: #{clipcap_forward.1} parent=1 // pred_check_branch
      %29 = sbr.rel (0) target = $region5
    $region4: #{clipcap_forward.1} parent=1 // pred_region
      _
    $region5: #{clipcap_forward.1} parent=1 // pred_fallthru
      _
    // Predicated region
    $region6: #{clipcap_forward.1} parent=1 // pred_check
      _
    $region7: #{clipcap_forward.1} parent=1 // pred_check_branch
      %31 = sbr.rel (0) target = $region9
    $region8: #{clipcap_forward.1} parent=1 // pred_region
      _
    $region9: #{clipcap_forward.1} parent=1 // pred_fallthru
      _
    // Predicated region
    $region10: #{clipcap_forward.1} parent=1 // pred_check
      _
    $region11: #{clipcap_forward.1} parent=1 // pred_check_branch
      %33 = sbr.rel (0) target = $region13
    $region12: #{clipcap_forward.1} parent=1 // pred_region
      _
    $region13: #{clipcap_forward.1} parent=1 // pred_fallthru
      _
    // Predicated region
    $region14: #{clipcap_forward.1} parent=1 // pred_check
      _
    $region15: #{clipcap_forward.1} parent=1 // pred_check_branch
      %35 = sbr.rel (0) target = $region17
    $region16: #{clipcap_forward.1} parent=1 // pred_region
      _
    $region17: #{clipcap_forward.1} parent=1 // pred_fallthru
      _
    // Predicated region
    $region18: #{clipcap_forward.1} parent=1 // pred_check
      _
    $region19: #{clipcap_forward.1} parent=1 // pred_check_branch
      %37 = sbr.rel (0) target = $region21
    $region20: #{clipcap_forward.1} parent=1 // pred_region
      _
    $region21: #{clipcap_forward.1} parent=1 // pred_fallthru
      _
    // Predicated region
    $region22: #{clipcap_forward.1} parent=1 // pred_check
      _
    $region23: #{clipcap_forward.1} parent=1 // pred_check_branch
      %39 = sbr.rel (0) target = $region25
    $region24: #{clipcap_forward.1} parent=1 // pred_region
      _
    $region25: #{clipcap_forward.1} parent=1 // pred_fallthru
      _
    // Predicated region
    $region26: #{clipcap_forward.1} parent=1 // pred_check
      _
    $region27: #{clipcap_forward.1} parent=1 // pred_check_branch
      %41 = sbr.rel (0) target = $region29
    $region28: #{clipcap_forward.1} parent=1 // pred_region
      _
    $region29: #{clipcap_forward.1} parent=1 // pred_fallthru
      _
    // Predicated region
    $region30: #{clipcap_forward.1} parent=1 // pred_check
      _
    $region31: #{clipcap_forward.1} parent=1 // pred_check_branch
      %43 = sbr.rel (0) target = $region33
    $region32: #{clipcap_forward.1} parent=1 // pred_region
      _
    $region33: #{clipcap_forward.1} parent=1 // pred_fallthru
      _
    // Predicated region
    $region34: #{clipcap_forward.1} parent=1 // pred_check
      _
    $region35: #{clipcap_forward.1} parent=1 // pred_check_branch
      %45 = sbr.rel (0) target = $region37
    $region36: #{clipcap_forward.1} parent=1 // pred_region
      _
    $region37: #{clipcap_forward.1} parent=1 // pred_fallthru
      _
    // Predicated region
    $region38: #{clipcap_forward.1} parent=1 // pred_check
      _
    $region39: #{clipcap_forward.1} parent=1 // pred_check_branch
      %47 = sbr.rel (0) target = $region41
    $region40: #{clipcap_forward.1} parent=1 // pred_region
      _
    $region41: #{clipcap_forward.1} parent=1 // pred_fallthru
      _
    // Predicated region
    $region42: #{clipcap_forward.1} parent=1 // pred_check
      _
    $region43: #{clipcap_forward.1} parent=1 // pred_check_branch
      %49 = sbr.rel (0) target = $region45
    $region44: #{clipcap_forward.1} parent=1 // pred_region
      _
    $region45: #{clipcap_forward.1} parent=1 // pred_fallthru
      _
    // Predicated region
    $region46: #{clipcap_forward.1} parent=1 // pred_check
      _
    $region47: #{clipcap_forward.1} parent=1 // pred_check_branch
      %51 = sbr.rel (0) target = $region49
    $region48: #{clipcap_forward.1} parent=1 // pred_region
      _
    $region49: #{clipcap_forward.1} parent=1 // pred_fallthru
      _
    // Predicated region
    $region50: #{clipcap_forward.1} parent=1 // pred_check
      _
    $region51: #{clipcap_forward.1} parent=1 // pred_check_branch
      %53 = sbr.rel (0) target = $region53
    $region52: #{clipcap_forward.1} parent=1 // pred_region
      _
    $region53: #{clipcap_forward.1} parent=1 // pred_fallthru
      _
    // Predicated region
    $region54: #{clipcap_forward.1} parent=1 // pred_check
      _
    $region55: #{clipcap_forward.1} parent=1 // pred_check_branch
      %55 = sbr.rel (0) target = $region57
    $region56: #{clipcap_forward.1} parent=1 // pred_region
      _
    $region57: #{clipcap_forward.1} parent=1 // pred_fallthru
      _
    // Predicated region
    $region58: #{clipcap_forward.1} parent=1 // pred_check
      _
    $region59: #{clipcap_forward.1} parent=1 // pred_check_branch
      %57 = sbr.rel (0) target = $region61
    $region60: #{clipcap_forward.1} parent=1 // pred_region
      _
    $region61: #{clipcap_forward.1} parent=1 // pred_fallthru
      _
    // Predicated region
    $region62: #{clipcap_forward.1} parent=1 // pred_check
      _
    $region63: #{clipcap_forward.1} parent=1 // pred_check_branch
      %59 = sbr.rel (0) target = $region65
    $region64: #{clipcap_forward.1} parent=1 // pred_region
      _
    $region65: #{clipcap_forward.1} parent=1 // pred_fallthru
      _
    // Predicated region
    $region66: #{clipcap_forward.1} parent=1 // pred_check
      _
    $region67: #{clipcap_forward.1} parent=1 // pred_check_branch
      %61 = sbr.rel (0) target = $region69
    $region68: #{clipcap_forward.1} parent=1 // pred_region
      _
    $region69: #{clipcap_forward.1} parent=1 // pred_fallthru
      _
    // Predicated region
    $region70: #{clipcap_forward.1} parent=1 // pred_check
      _
    $region71: #{clipcap_forward.1} parent=1 // pred_check_branch
      %63 = sbr.rel (0) target = $region73
    $region72: #{clipcap_forward.1} parent=1 // pred_region
      _
    $region73: #{clipcap_forward.1} parent=1 // pred_fallthru
      _
    // Predicated region
    $region74: #{clipcap_forward.1} parent=1 // pred_check
      _
    $region75: #{clipcap_forward.1} parent=1 // pred_check_branch
      %65 = sbr.rel (0) target = $region77
    $region76: #{clipcap_forward.1} parent=1 // pred_region
      _
    $region77: #{clipcap_forward.1} parent=1 // pred_fallthru
      _
    // Predicated region
    $region78: #{clipcap_forward.1} parent=1 // pred_check
      _
    $region79: #{clipcap_forward.1} parent=1 // pred_check_branch
      %67 = sbr.rel (0) target = $region81
    $region80: #{clipcap_forward.1} parent=1 // pred_region
      _
    $region81: #{clipcap_forward.1} parent=1 // pred_fallthru
      _
    // Predicated region
    $region82: #{clipcap_forward.1} parent=1 // pred_check
      _
    $region83: #{clipcap_forward.1} parent=1 // pred_check_branch
      %69 = sbr.rel (0) target = $region85
    $region84: #{clipcap_forward.1} parent=1 // pred_region
      _
    $region85: #{clipcap_forward.1} parent=1 // pred_fallthru
      _
    // Predicated region
    $region86: #{clipcap_forward.1} parent=1 // pred_check
      _
    $region87: #{clipcap_forward.1} parent=1 // pred_check_branch
      %71 = sbr.rel (0) target = $region89
    $region88: #{clipcap_forward.1} parent=1 // pred_region
      _
    $region89: #{clipcap_forward.1} parent=1 // pred_fallthru
      _
    %v72 = vld [vmem:[%s1] sm:$0x3]
    %v73 = vld [vmem:[%s4] sm:$0xff]
    %v74 = vld [vmem:[%s4 + $0x8] sm:$0xff]
    %v75 = vld [vmem:[%s4 + $0x10] sm:$0xff]
    %v76 = vld [vmem:[%s4 + $0x18] sm:$0xff]
    %v77 = vld [vmem:[%s5] sm:$0x1]
    %v79 = vperm.slane %v77, 0
    %vm81 = vcmask 261120
    %v83 = vsel %vm81, %v72, 0
    %85 = vmatpush.msra.mxu0 0.0
    %86 = vmatpush.msra.mxu0 0.0
    %87 = vmatpush.msra.mxu0 0.0
    %88 = vmatpush.msra.mxu0 0.0
    %89 = vmatpush.msra.mxu0 0.0
    %90 = vmatpush.msra.mxu0 0.0
    %91 = vmatpush.msra.mxu0 0.0
    %92 = vmatpush.msra.mxu0 0.0
    %93 = vmatpush.msra.mxu0 0.0
    %94 = vmatpush.msra.mxu0 0.0
    %95 = vmatpush.msra.mxu0 0.0
    %96 = vmatpush.msra.mxu0 0.0
    %97 = vmatpush.msra.mxu0 %v76
    %98 = vmatpush.msra.mxu0 %v75
    %99 = vmatpush.msra.mxu0 %v74
    %100 = vmatpush.msra.mxu0 %v73
    %101 = vmatmul.f32.gmra.mxu0 %v83
    %v102 = vpop.f32.mrf.mxu0
    %v103 = vadd.f32 %v79, %v102
    %104 = vdwg.mxu0
    %v105 = vtanh.pop %v103
    %v106 = vld [vmem:[%s6] sm:$0xff]
    %v107 = vld [vmem:[%s6 + $0x8] sm:$0xff]
    %v108 = vld [vmem:[%s6 + $0x10] sm:$0xff]
    %v109 = vld [vmem:[%s6 + $0x18] sm:$0xff]
    %v110 = vld [vmem:[%s6 + $0x20] sm:$0xff]
    %v111 = vld [vmem:[%s6 + $0x28] sm:$0xff]
    %v112 = vld [vmem:[%s6 + $0x30] sm:$0xff]
    %v113 = vld [vmem:[%s6 + $0x38] sm:$0xff]
    %v114 = vld [vmem:[%s6 + $0x40] sm:$0xff]
    %v115 = vld [vmem:[%s6 + $0x48] sm:$0xff]
    %v116 = vld [vmem:[%s6 + $0x50] sm:$0xff]
    %v117 = vld [vmem:[%s6 + $0x58] sm:$0xff]
    %v118 = vld [vmem:[%s6 + $0x60] sm:$0xff]
    %v119 = vld [vmem:[%s6 + $0x68] sm:$0xff]
    %v120 = vld [vmem:[%s6 + $0x70] sm:$0xff]
    %v121 = vld [vmem:[%s6 + $0x78] sm:$0xff]
    %v122 = vld [vmem:[%s7] sm:$0x1]
    %v123 = vperm.slane %v122, 0
    %124 = vmatpush.msra.mxu0 %v121
    %125 = vmatpush.msra.mxu0 %v120
    %126 = vmatpush.msra.mxu0 %v119
    %127 = vmatpush.msra.mxu0 %v118
    %128 = vmatpush.msra.mxu0 %v117
    %129 = vmatpush.msra.mxu0 %v116
    %130 = vmatpush.msra.mxu0 %v115
    %131 = vmatpush.msra.mxu0 %v114
    %132 = vmatpush.msra.mxu0 %v113
    %133 = vmatpush.msra.mxu0 %v112
    %134 = vmatpush.msra.mxu0 %v111
    %135 = vmatpush.msra.mxu0 %v110
    %136 = vmatpush.msra.mxu0 %v109
    %137 = vmatpush.msra.mxu0 %v108
    %138 = vmatpush.msra.mxu0 %v107
    %139 = vmatpush.msra.mxu0 %v106
    %140 = vmatmul.f32.gmra.mxu0 %v105
    %v141 = vpop.f32.mrf.mxu0
    %v142 = vadd.f32 %v123, %v141
    %143 = vdwg.mxu0
    %v145 = vrot.slane %v142, 1
    %vm147 = vcmask 253952
    %148 = vst.msk [vmem:[#allocation2] sm:$0x1] %vm147, %v142
    %149 = vst.msk [vmem:[#allocation2 + $0x10] sm:$0x1] %vm147, %v145
    %s150 = scalar_lea.vmem %s6, 128
    %v151 = vld [vmem:[%s150] sm:$0xff]
    %v152 = vld [vmem:[%s150 + $0x8] sm:$0xff]
    %v153 = vld [vmem:[%s150 + $0x10] sm:$0xff]
    %v154 = vld [vmem:[%s150 + $0x18] sm:$0xff]
    %v155 = vld [vmem:[%s150 + $0x20] sm:$0xff]
    %v156 = vld [vmem:[%s150 + $0x28] sm:$0xff]
    %v157 = vld [vmem:[%s150 + $0x30] sm:$0xff]
    %v158 = vld [vmem:[%s150 + $0x38] sm:$0xff]
    %v159 = vld [vmem:[%s150 + $0x40] sm:$0xff]
    %v160 = vld [vmem:[%s150 + $0x48] sm:$0xff]
    %v161 = vld [vmem:[%s150 + $0x50] sm:$0xff]
    %v162 = vld [vmem:[%s150 + $0x58] sm:$0xff]
    %v163 = vld [vmem:[%s150 + $0x60] sm:$0xff]
    %v164 = vld [vmem:[%s150 + $0x68] sm:$0xff]
    %v165 = vld [vmem:[%s150 + $0x70] sm:$0xff]
    %v166 = vld [vmem:[%s150 + $0x78] sm:$0xff]
    %v167 = vld [vmem:[%s7 + $0x1] sm:$0x1]
    %v168 = vperm.slane %v167, 0
    %169 = vmatpush.msra.mxu0 %v166
    %170 = vmatpush.msra.mxu0 %v165
    %171 = vmatpush.msra.mxu0 %v164
    %172 = vmatpush.msra.mxu0 %v163
    %173 = vmatpush.msra.mxu0 %v162
    %174 = vmatpush.msra.mxu0 %v161
    %175 = vmatpush.msra.mxu0 %v160
    %176 = vmatpush.msra.mxu0 %v159
    %177 = vmatpush.msra.mxu0 %v158
    %178 = vmatpush.msra.mxu0 %v157
    %179 = vmatpush.msra.mxu0 %v156
    %180 = vmatpush.msra.mxu0 %v155
    %181 = vmatpush.msra.mxu0 %v154
    %182 = vmatpush.msra.mxu0 %v153
    %183 = vmatpush.msra.mxu0 %v152
    %184 = vmatpush.msra.mxu0 %v151
    %185 = vmatmul.f32.gmra.mxu0 %v105
    %v186 = vpop.f32.mrf.mxu0
    %v187 = vadd.f32 %v168, %v186
    %188 = vdwg.mxu0
    %v190 = vrot.slane %v187, 1
    %192 = vst.msk [vmem:[#allocation2 + $0x1] sm:$0x1] %vm147, %v187
    %193 = vst.msk [vmem:[#allocation2 + $0x11] sm:$0x1] %vm147, %v190
    %s194 = scalar_lea.vmem %s6, 256
    %v195 = vld [vmem:[%s194] sm:$0xff]
    %v196 = vld [vmem:[%s194 + $0x8] sm:$0xff]
    %v197 = vld [vmem:[%s194 + $0x10] sm:$0xff]
    %v198 = vld [vmem:[%s194 + $0x18] sm:$0xff]
    %v199 = vld [vmem:[%s194 + $0x20] sm:$0xff]
    %v200 = vld [vmem:[%s194 + $0x28] sm:$0xff]
    %v201 = vld [vmem:[%s194 + $0x30] sm:$0xff]
    %v202 = vld [vmem:[%s194 + $0x38] sm:$0xff]
    %v203 = vld [vmem:[%s194 + $0x40] sm:$0xff]
    %v204 = vld [vmem:[%s194 + $0x48] sm:$0xff]
    %v205 = vld [vmem:[%s194 + $0x50] sm:$0xff]
    %v206 = vld [vmem:[%s194 + $0x58] sm:$0xff]
    %v207 = vld [vmem:[%s194 + $0x60] sm:$0xff]
    %v208 = vld [vmem:[%s194 + $0x68] sm:$0xff]
    %v209 = vld [vmem:[%s194 + $0x70] sm:$0xff]
    %v210 = vld [vmem:[%s194 + $0x78] sm:$0xff]
    %v211 = vld [vmem:[%s7 + $0x2] sm:$0x1]
    %v212 = vperm.slane %v211, 0
    %213 = vmatpush.msra.mxu0 %v210
    %214 = vmatpush.msra.mxu0 %v209
    %215 = vmatpush.msra.mxu0 %v208
    %216 = vmatpush.msra.mxu0 %v207
    %217 = vmatpush.msra.mxu0 %v206
    %218 = vmatpush.msra.mxu0 %v205
    %219 = vmatpush.msra.mxu0 %v204
    %220 = vmatpush.msra.mxu0 %v203
    %221 = vmatpush.msra.mxu0 %v202
    %222 = vmatpush.msra.mxu0 %v201
    %223 = vmatpush.msra.mxu0 %v200
    %224 = vmatpush.msra.mxu0 %v199
    %225 = vmatpush.msra.mxu0 %v198
    %226 = vmatpush.msra.mxu0 %v197
    %227 = vmatpush.msra.mxu0 %v196
    %228 = vmatpush.msra.mxu0 %v195
    %229 = vmatmul.f32.gmra.mxu0 %v105
    %v230 = vpop.f32.mrf.mxu0
    %v231 = vadd.f32 %v212, %v230
    %232 = vdwg.mxu0
    %v234 = vrot.slane %v231, 1
    %236 = vst.msk [vmem:[#allocation2 + $0x2] sm:$0x1] %vm147, %v231
    %237 = vst.msk [vmem:[#allocation2 + $0x12] sm:$0x1] %vm147, %v234
    %s238 = scalar_lea.vmem %s6, 384
    %v239 = vld [vmem:[%s238] sm:$0xff]
    %v240 = vld [vmem:[%s238 + $0x8] sm:$0xff]
    %v241 = vld [vmem:[%s238 + $0x10] sm:$0xff]
    %v242 = vld [vmem:[%s238 + $0x18] sm:$0xff]
    %v243 = vld [vmem:[%s238 + $0x20] sm:$0xff]
    %v244 = vld [vmem:[%s238 + $0x28] sm:$0xff]
    %v245 = vld [vmem:[%s238 + $0x30] sm:$0xff]
    %v246 = vld [vmem:[%s238 + $0x38] sm:$0xff]
    %v247 = vld [vmem:[%s238 + $0x40] sm:$0xff]
    %v248 = vld [vmem:[%s238 + $0x48] sm:$0xff]
    %v249 = vld [vmem:[%s238 + $0x50] sm:$0xff]
    %v250 = vld [vmem:[%s238 + $0x58] sm:$0xff]
    %v251 = vld [vmem:[%s238 + $0x60] sm:$0xff]
    %v252 = vld [vmem:[%s238 + $0x68] sm:$0xff]
    %v253 = vld [vmem:[%s238 + $0x70] sm:$0xff]
    %v254 = vld [vmem:[%s238 + $0x78] sm:$0xff]
    %v255 = vld [vmem:[%s7 + $0x3] sm:$0x1]
    %v256 = vperm.slane %v255, 0
    %257 = vmatpush.msra.mxu0 %v254
    %258 = vmatpush.msra.mxu0 %v253
    %259 = vmatpush.msra.mxu0 %v252
    %260 = vmatpush.msra.mxu0 %v251
    %261 = vmatpush.msra.mxu0 %v250
    %262 = vmatpush.msra.mxu0 %v249
    %263 = vmatpush.msra.mxu0 %v248
    %264 = vmatpush.msra.mxu0 %v247
    %265 = vmatpush.msra.mxu0 %v246
    %266 = vmatpush.msra.mxu0 %v245
    %267 = vmatpush.msra.mxu0 %v244
    %268 = vmatpush.msra.mxu0 %v243
    %269 = vmatpush.msra.mxu0 %v242
    %270 = vmatpush.msra.mxu0 %v241
    %271 = vmatpush.msra.mxu0 %v240
    %272 = vmatpush.msra.mxu0 %v239
    %273 = vmatmul.f32.gmra.mxu0 %v105
    %v274 = vpop.f32.mrf.mxu0
    %v275 = vadd.f32 %v256, %v274
    %276 = vdwg.mxu0
    %v278 = vrot.slane %v275, 1
    %280 = vst.msk [vmem:[#allocation2 + $0x3] sm:$0x1] %vm147, %v275
    %281 = vst.msk [vmem:[#allocation2 + $0x13] sm:$0x1] %vm147, %v278
    %s282 = scalar_lea.vmem %s6, 512
    %v283 = vld [vmem:[%s282] sm:$0xff]
    %v284 = vld [vmem:[%s282 + $0x8] sm:$0xff]
    %v285 = vld [vmem:[%s282 + $0x10] sm:$0xff]
    %v286 = vld [vmem:[%s282 + $0x18] sm:$0xff]
    %v287 = vld [vmem:[%s282 + $0x20] sm:$0xff]
    %v288 = vld [vmem:[%s282 + $0x28] sm:$0xff]
    %v289 = vld [vmem:[%s282 + $0x30] sm:$0xff]
    %v290 = vld [vmem:[%s282 + $0x38] sm:$0xff]
    %v291 = vld [vmem:[%s282 + $0x40] sm:$0xff]
    %v292 = vld [vmem:[%s282 + $0x48] sm:$0xff]
    %v293 = vld [vmem:[%s282 + $0x50] sm:$0xff]
    %v294 = vld [vmem:[%s282 + $0x58] sm:$0xff]
    %v295 = vld [vmem:[%s282 + $0x60] sm:$0xff]
    %v296 = vld [vmem:[%s282 + $0x68] sm:$0xff]
    %v297 = vld [vmem:[%s282 + $0x70] sm:$0xff]
    %v298 = vld [vmem:[%s282 + $0x78] sm:$0xff]
    %v299 = vld [vmem:[%s7 + $0x4] sm:$0x1]
    %v300 = vperm.slane %v299, 0
    %301 = vmatpush.msra.mxu0 %v298
    %302 = vmatpush.msra.mxu0 %v297
    %303 = vmatpush.msra.mxu0 %v296
    %304 = vmatpush.msra.mxu0 %v295
    %305 = vmatpush.msra.mxu0 %v294
    %306 = vmatpush.msra.mxu0 %v293
    %307 = vmatpush.msra.mxu0 %v292
    %308 = vmatpush.msra.mxu0 %v291
    %309 = vmatpush.msra.mxu0 %v290
    %310 = vmatpush.msra.mxu0 %v289
    %311 = vmatpush.msra.mxu0 %v288
    %312 = vmatpush.msra.mxu0 %v287
    %313 = vmatpush.msra.mxu0 %v286
    %314 = vmatpush.msra.mxu0 %v285
    %315 = vmatpush.msra.mxu0 %v284
    %316 = vmatpush.msra.mxu0 %v283
    %317 = vmatmul.f32.gmra.mxu0 %v105
    %v318 = vpop.f32.mrf.mxu0
    %v319 = vadd.f32 %v300, %v318
    %320 = vdwg.mxu0
    %v322 = vrot.slane %v319, 1
    %324 = vst.msk [vmem:[#allocation2 + $0x4] sm:$0x1] %vm147, %v319
    %325 = vst.msk [vmem:[#allocation2 + $0x14] sm:$0x1] %vm147, %v322
    %s326 = scalar_lea.vmem %s6, 640
    %v327 = vld [vmem:[%s326] sm:$0xff]
    %v328 = vld [vmem:[%s326 + $0x8] sm:$0xff]
    %v329 = vld [vmem:[%s326 + $0x10] sm:$0xff]
    %v330 = vld [vmem:[%s326 + $0x18] sm:$0xff]
    %v331 = vld [vmem:[%s326 + $0x20] sm:$0xff]
    %v332 = vld [vmem:[%s326 + $0x28] sm:$0xff]
    %v333 = vld [vmem:[%s326 + $0x30] sm:$0xff]
    %v334 = vld [vmem:[%s326 + $0x38] sm:$0xff]
    %v335 = vld [vmem:[%s326 + $0x40] sm:$0xff]
    %v336 = vld [vmem:[%s326 + $0x48] sm:$0xff]
    %v337 = vld [vmem:[%s326 + $0x50] sm:$0xff]
    %v338 = vld [vmem:[%s326 + $0x58] sm:$0xff]
    %v339 = vld [vmem:[%s326 + $0x60] sm:$0xff]
    %v340 = vld [vmem:[%s326 + $0x68] sm:$0xff]
    %v341 = vld [vmem:[%s326 + $0x70] sm:$0xff]
    %v342 = vld [vmem:[%s326 + $0x78] sm:$0xff]
    %v343 = vld [vmem:[%s7 + $0x5] sm:$0x1]
    %v344 = vperm.slane %v343, 0
    %345 = vmatpush.msra.mxu0 %v342
    %346 = vmatpush.msra.mxu0 %v341
    %347 = vmatpush.msra.mxu0 %v340
    %348 = vmatpush.msra.mxu0 %v339
    %349 = vmatpush.msra.mxu0 %v338
    %350 = vmatpush.msra.mxu0 %v337
    %351 = vmatpush.msra.mxu0 %v336
    %352 = vmatpush.msra.mxu0 %v335
    %353 = vmatpush.msra.mxu0 %v334
    %354 = vmatpush.msra.mxu0 %v333
    %355 = vmatpush.msra.mxu0 %v332
    %356 = vmatpush.msra.mxu0 %v331
    %357 = vmatpush.msra.mxu0 %v330
    %358 = vmatpush.msra.mxu0 %v329
    %359 = vmatpush.msra.mxu0 %v328
    %360 = vmatpush.msra.mxu0 %v327
    %361 = vmatmul.f32.gmra.mxu0 %v105
    %v362 = vpop.f32.mrf.mxu0
    %v363 = vadd.f32 %v344, %v362
    %364 = vdwg.mxu0
    %v366 = vrot.slane %v363, 1
    %368 = vst.msk [vmem:[#allocation2 + $0x5] sm:$0x1] %vm147, %v363
    %369 = vst.msk [vmem:[#allocation2 + $0x15] sm:$0x1] %vm147, %v366
    %s370 = scalar_lea.vmem %s6, 768
    %v371 = vld [vmem:[%s370] sm:$0xff]
    %v372 = vld [vmem:[%s370 + $0x8] sm:$0xff]
    %v373 = vld [vmem:[%s370 + $0x10] sm:$0xff]
    %v374 = vld [vmem:[%s370 + $0x18] sm:$0xff]
    %v375 = vld [vmem:[%s370 + $0x20] sm:$0xff]
    %v376 = vld [vmem:[%s370 + $0x28] sm:$0xff]
    %v377 = vld [vmem:[%s370 + $0x30] sm:$0xff]
    %v378 = vld [vmem:[%s370 + $0x38] sm:$0xff]
    %v379 = vld [vmem:[%s370 + $0x40] sm:$0xff]
    %v380 = vld [vmem:[%s370 + $0x48] sm:$0xff]
    %v381 = vld [vmem:[%s370 + $0x50] sm:$0xff]
    %v382 = vld [vmem:[%s370 + $0x58] sm:$0xff]
    %v383 = vld [vmem:[%s370 + $0x60] sm:$0xff]
    %v384 = vld [vmem:[%s370 + $0x68] sm:$0xff]
    %v385 = vld [vmem:[%s370 + $0x70] sm:$0xff]
    %v386 = vld [vmem:[%s370 + $0x78] sm:$0xff]
    %v387 = vld [vmem:[%s7 + $0x6] sm:$0x1]
    %v388 = vperm.slane %v387, 0
    %389 = vmatpush.msra.mxu0 %v386
    %390 = vmatpush.msra.mxu0 %v385
    %391 = vmatpush.msra.mxu0 %v384
    %392 = vmatpush.msra.mxu0 %v383
    %393 = vmatpush.msra.mxu0 %v382
    %394 = vmatpush.msra.mxu0 %v381
    %395 = vmatpush.msra.mxu0 %v380
    %396 = vmatpush.msra.mxu0 %v379
    %397 = vmatpush.msra.mxu0 %v378
    %398 = vmatpush.msra.mxu0 %v377
    %399 = vmatpush.msra.mxu0 %v376
    %400 = vmatpush.msra.mxu0 %v375
    %401 = vmatpush.msra.mxu0 %v374
    %402 = vmatpush.msra.mxu0 %v373
    %403 = vmatpush.msra.mxu0 %v372
    %404 = vmatpush.msra.mxu0 %v371
    %405 = vmatmul.f32.gmra.mxu0 %v105
    %v406 = vpop.f32.mrf.mxu0
    %v407 = vadd.f32 %v388, %v406
    %408 = vdwg.mxu0
    %v410 = vrot.slane %v407, 1
    %412 = vst.msk [vmem:[#allocation2 + $0x6] sm:$0x1] %vm147, %v407
    %413 = vst.msk [vmem:[#allocation2 + $0x16] sm:$0x1] %vm147, %v410
    %s414 = scalar_lea.vmem %s6, 896
    %v415 = vld [vmem:[%s414] sm:$0xff]
    %v416 = vld [vmem:[%s414 + $0x8] sm:$0xff]
    %v417 = vld [vmem:[%s414 + $0x10] sm:$0xff]
    %v418 = vld [vmem:[%s414 + $0x18] sm:$0xff]
    %v419 = vld [vmem:[%s414 + $0x20] sm:$0xff]
    %v420 = vld [vmem:[%s414 + $0x28] sm:$0xff]
    %v421 = vld [vmem:[%s414 + $0x30] sm:$0xff]
    %v422 = vld [vmem:[%s414 + $0x38] sm:$0xff]
    %v423 = vld [vmem:[%s414 + $0x40] sm:$0xff]
    %v424 = vld [vmem:[%s414 + $0x48] sm:$0xff]
    %v425 = vld [vmem:[%s414 + $0x50] sm:$0xff]
    %v426 = vld [vmem:[%s414 + $0x58] sm:$0xff]
    %v427 = vld [vmem:[%s414 + $0x60] sm:$0xff]
    %v428 = vld [vmem:[%s414 + $0x68] sm:$0xff]
    %v429 = vld [vmem:[%s414 + $0x70] sm:$0xff]
    %v430 = vld [vmem:[%s414 + $0x78] sm:$0xff]
    %v431 = vld [vmem:[%s7 + $0x7] sm:$0x1]
    %v432 = vperm.slane %v431, 0
    %433 = vmatpush.msra.mxu0 %v430
    %434 = vmatpush.msra.mxu0 %v429
    %435 = vmatpush.msra.mxu0 %v428
    %436 = vmatpush.msra.mxu0 %v427
    %437 = vmatpush.msra.mxu0 %v426
    %438 = vmatpush.msra.mxu0 %v425
    %439 = vmatpush.msra.mxu0 %v424
    %440 = vmatpush.msra.mxu0 %v423
    %441 = vmatpush.msra.mxu0 %v422
    %442 = vmatpush.msra.mxu0 %v421
    %443 = vmatpush.msra.mxu0 %v420
    %444 = vmatpush.msra.mxu0 %v419
    %445 = vmatpush.msra.mxu0 %v418
    %446 = vmatpush.msra.mxu0 %v417
    %447 = vmatpush.msra.mxu0 %v416
    %448 = vmatpush.msra.mxu0 %v415
    %449 = vmatmul.f32.gmra.mxu0 %v105
    %v450 = vpop.f32.mrf.mxu0
    %v451 = vadd.f32 %v432, %v450
    %452 = vdwg.mxu0
    %v454 = vrot.slane %v451, 1
    %456 = vst.msk [vmem:[#allocation2 + $0x7] sm:$0x1] %vm147, %v451
    %457 = vst.msk [vmem:[#allocation2 + $0x17] sm:$0x1] %vm147, %v454
    %v458 = vlaneseq
    %v459 = vand.u32 %v458, 127
    %v460 = vld [vmem:[%s0] sm:$0xff]
    %v461 = vld [vmem:[%s0 + $0x8] sm:$0xff]
    %462 = vset.pattern.permute.xlu0 0
    %463 = vperm.xlu0 %462, %v460
    %v464 = vpop.permute.xlu0 %463
    %465 = vset.pattern.permute.xlu0 0
    %466 = vperm.xlu0 %465, %v461
    %v467 = vpop.permute.xlu0 %466
    %vm468 = vcmp.eq.s32.totalorder %v459, %v464
    %vm469 = vcmp.eq.s32.totalorder %v459, %v467
    %v470 = vsel %vm468, 1, 0
    %v471 = vsel %vm469, 1, 0
    %v472 = vcvt.s32.f32 %v470
    %v473 = vcvt.s32.f32 %v471
    %v474 = vld [vmem:[%s2] sm:$0xff]
    %v475 = vld [vmem:[%s2 + $0x8] sm:$0xff]
    %v476 = vld [vmem:[%s2 + $0x10] sm:$0xff]
    %v477 = vld [vmem:[%s2 + $0x18] sm:$0xff]
    %v478 = vld [vmem:[%s2 + $0x20] sm:$0xff]
    %v479 = vld [vmem:[%s2 + $0x28] sm:$0xff]
    %v480 = vld [vmem:[%s2 + $0x30] sm:$0xff]
    %v481 = vld [vmem:[%s2 + $0x38] sm:$0xff]
    %v482 = vld [vmem:[%s2 + $0x40] sm:$0xff]
    %v483 = vld [vmem:[%s2 + $0x48] sm:$0xff]
    %v484 = vld [vmem:[%s2 + $0x50] sm:$0xff]
    %v485 = vld [vmem:[%s2 + $0x58] sm:$0xff]
    %v486 = vld [vmem:[%s2 + $0x60] sm:$0xff]
    %v487 = vld [vmem:[%s2 + $0x68] sm:$0xff]
    %v488 = vld [vmem:[%s2 + $0x70] sm:$0xff]
    %v489 = vld [vmem:[%s2 + $0x78] sm:$0xff]
    %490 = vmatpush.msra.mxu0 %v489
    %491 = vmatpush.msra.mxu0 %v488
    %492 = vmatpush.msra.mxu0 %v487
    %493 = vmatpush.msra.mxu0 %v486
    %494 = vmatpush.msra.mxu0 %v485
    %495 = vmatpush.msra.mxu0 %v484
    %496 = vmatpush.msra.mxu0 %v483
    %497 = vmatpush.msra.mxu0 %v482
    %498 = vmatpush.msra.mxu0 %v481
    %499 = vmatpush.msra.mxu0 %v480
    %500 = vmatpush.msra.mxu0 %v479
    %501 = vmatpush.msra.mxu0 %v478
    %502 = vmatpush.msra.mxu0 %v477
    %503 = vmatpush.msra.mxu0 %v476
    %504 = vmatpush.msra.mxu0 %v475
    %505 = vmatpush.msra.mxu0 %v474
    %506 = vmatmul.f32.gmra.mxu0 %v472
    %v507 = vpop.f32.mrf.mxu0
    %v508 = vadd.f32 0.0, %v507
    %509 = vmatmul.f32.gmra.mxu0 %v473
    %v510 = vpop.f32.mrf.mxu0
    %v511 = vadd.f32 0.0, %v510
    %512 = vdwg.mxu0
    %513 = vst.msk [vmem:[#allocation2 + $0x8] sm:$0xff] %vm81, %v508
    %s514 = scalar_lea.vmem [#allocation2], 16
    %515 = vst.msk [vmem:[%s514 + $0x8] sm:$0xff] %vm81, %v511
    %v516 = vld [vmem:[#allocation2] sm:$0xff]
    %v517 = vld [vmem:[#allocation2 + $0x8] sm:$0xff]
    %v518 = vld [vmem:[#allocation2 + $0x10] sm:$0xff]
    %v519 = vld [vmem:[#allocation2 + $0x18] sm:$0xff]
    %v520 = vld [vmem:[%s3] sm:$0xff]
    %v521 = vld [vmem:[%s3 + $0x8] sm:$0xff]
    %v522 = vadd.f32 %v516, %v520
    %v523 = vadd.f32 %v517, %v521
    %v524 = vadd.f32 %v518, %v520
    %v525 = vadd.f32 %v519, %v521
    %v526 = vlaneseq
    %v527 = vshrl.u32 %v526, 7
    %v528 = vadd.s32 %v527, 8
    %vm529 = vcmp.le.s32.totalorder %v459, %v527
    %vm530 = vcmp.le.s32.totalorder %v459, %v528
    %v531 = vsel %vm529, 0.0, -1e+09
    %v532 = vsel %vm530, 0.0, -1e+09
    %v533 = vld [vmem:[%s8] sm:$0x1]
    %v534 = vld [vmem:[%s9] sm:$0x1]
    %v535 = vsel %vm81, %v522, 0.0
    %536 = vadd.xlane.f32.xlu0 %v535
    %v537 = vpop.xlane.xlu0 %536
    %v538 = vsel %vm81, %v523, 0.0
    %539 = vadd.xlane.f32.xlu0 %v538
    %v540 = vpop.xlane.xlu0 %539
    %v541 = vsel %vm81, %v524, 0.0
    %542 = vadd.xlane.f32.xlu0 %v541
    %v543 = vpop.xlane.xlu0 %542
    %v544 = vsel %vm81, %v525, 0.0
    %545 = vadd.xlane.f32.xlu0 %v544
    %v546 = vpop.xlane.xlu0 %545
    %v547 = vrcp.pop 32.0
    %v548 = vmul.f32 32.0, %v547
    %v549 = vsub.f32 1.0, %v548
    %v550 = vmul.f32 %v547, %v549
    %v551 = vadd.f32 %v547, %v550
    %vm552 = vweird.f32 %v547
    %v553 = vsel %vm552, %v547, %v551
    %v554 = vmul.f32 %v537, %v553
    %v555 = vmul.f32 %v540, %v553
    %v556 = vmul.f32 %v543, %v553
    %v557 = vmul.f32 %v546, %v553
    %v558 = vsub.f32 %v522, %v554
    %v559 = vsub.f32 %v523, %v555
    %v560 = vsub.f32 %v524, %v556
    %v561 = vsub.f32 %v525, %v557
    %v562 = vmul.f32 %v558, %v558
    %v563 = vmul.f32 %v559, %v559
    %v564 = vmul.f32 %v560, %v560
    %v565 = vmul.f32 %v561, %v561
    %v566 = vsel %vm81, %v562, 0.0
    %567 = vadd.xlane.f32.xlu0 %v566
    %v568 = vpop.xlane.xlu0 %567
    %v569 = vsel %vm81, %v563, 0.0
    %570 = vadd.xlane.f32.xlu0 %v569
    %v571 = vpop.xlane.xlu0 %570
    %v572 = vsel %vm81, %v564, 0.0
    %573 = vadd.xlane.f32.xlu0 %v572
    %v574 = vpop.xlane.xlu0 %573
    %v575 = vsel %vm81, %v565, 0.0
    %576 = vadd.xlane.f32.xlu0 %v575
    %v577 = vpop.xlane.xlu0 %576
    %v578 = vmul.f32 %v568, %v553
    %v579 = vmul.f32 %v571, %v553
    %v580 = vmul.f32 %v574, %v553
    %v581 = vmul.f32 %v577, %v553
    %v582 = vadd.f32 %v578, 1e-05
    %v583 = vadd.f32 %v579, 1e-05
    %v584 = vadd.f32 %v580, 1e-05
    %v585 = vadd.f32 %v581, 1e-05
    %v586 = vrsqrt.pop %v582
    %v587 = vmul.f32 %v586, %v582
    %v588 = vmul.f32 %v587, %v586
    %v589 = vmul.f32 0.5, %v588
    %v590 = vsub.f32 1.5, %v589
    %v591 = vmul.f32 %v586, %v590
    %vm592 = vweird.f32 %v582
    %vm593 = vweird.f32 %v586
    %vm594 = vmor %vm592, %vm593
    %v595 = vsel %vm594, %v586, %v591
    %v596 = vrsqrt.pop %v583
    %v597 = vmul.f32 %v596, %v583
    %v598 = vmul.f32 %v597, %v596
    %v599 = vmul.f32 0.5, %v598
    %v600 = vsub.f32 1.5, %v599
    %v601 = vmul.f32 %v596, %v600
    %vm602 = vweird.f32 %v583
    %vm603 = vweird.f32 %v596
    %vm604 = vmor %vm602, %vm603
    %v605 = vsel %vm604, %v596, %v601
    %v606 = vrsqrt.pop %v584
    %v607 = vmul.f32 %v606, %v584
    %v608 = vmul.f32 %v607, %v606
    %v609 = vmul.f32 0.5, %v608
    %v610 = vsub.f32 1.5, %v609
    %v611 = vmul.f32 %v606, %v610
    %vm612 = vweird.f32 %v584
    %vm613 = vweird.f32 %v606
    %vm614 = vmor %vm612, %vm613
    %v615 = vsel %vm614, %v606, %v611
    %v616 = vrsqrt.pop %v585
    %v617 = vmul.f32 %v616, %v585
    %v618 = vmul.f32 %v617, %v616
    %v619 = vmul.f32 0.5, %v618
    %v620 = vsub.f32 1.5, %v619
    %v621 = vmul.f32 %v616, %v620
    %vm622 = vweird.f32 %v585
    %vm623 = vweird.f32 %v616
    %vm624 = vmor %vm622, %vm623
    %v625 = vsel %vm624, %v616, %v621
    %v626 = vmul.f32 %v558, %v595
    %v627 = vmul.f32 %v559, %v605
    %v628 = vmul.f32 %v560, %v615
    %v629 = vmul.f32 %v561, %v625
    %v630 = vperm.slane %v533, 0
    %v631 = vmul.f32 %v626, %v630
    %v632 = vmul.f32 %v627, %v630
    %v633 = vmul.f32 %v628, %v630
    %v634 = vmul.f32 %v629, %v630
    %v635 = vperm.slane %v534, 0
    %v636 = vadd.f32 %v631, %v635
    %v637 = vadd.f32 %v632, %v635
    %v638 = vadd.f32 %v633, %v635
    %v639 = vadd.f32 %v634, %v635
    %v640 = vld [vmem:[%s10] sm:$0xff]
    %v641 = vld [vmem:[%s10 + $0x8] sm:$0xff]
    %v642 = vld [vmem:[%s10 + $0x10] sm:$0xff]
    %v643 = vld [vmem:[%s10 + $0x18] sm:$0xff]
    %v644 = vld [vmem:[%s11] sm:$0x1]
    %v645 = vperm.slane %v644, 0
    %v647 = vsel %vm81, %v636, 0
    %v650 = vsel %vm81, %v637, 0
    %v653 = vsel %vm81, %v638, 0
    %v656 = vsel %vm81, %v639, 0
    %658 = vmatpush.msra.mxu0 0.0
    %659 = vmatpush.msra.mxu0 0.0
    %660 = vmatpush.msra.mxu0 0.0
    %661 = vmatpush.msra.mxu0 0.0
    %662 = vmatpush.msra.mxu0 0.0
    %663 = vmatpush.msra.mxu0 0.0
    %664 = vmatpush.msra.mxu0 0.0
    %665 = vmatpush.msra.mxu0 0.0
    %666 = vmatpush.msra.mxu0 0.0
    %667 = vmatpush.msra.mxu0 0.0
    %668 = vmatpush.msra.mxu0 0.0
    %669 = vmatpush.msra.mxu0 0.0
    %670 = vmatpush.msra.mxu0 %v643
    %671 = vmatpush.msra.mxu0 %v642
    %672 = vmatpush.msra.mxu0 %v641
    %673 = vmatpush.msra.mxu0 %v640
    %674 = vmatmul.f32.gmra.mxu0 %v647
    %v675 = vpop.f32.mrf.mxu0
    %v676 = vadd.f32 %v645, %v675
    %677 = vmatmul.f32.gmra.mxu0 %v650
    %v678 = vpop.f32.mrf.mxu0
    %v679 = vadd.f32 %v645, %v678
    %680 = vmatmul.f32.gmra.mxu0 %v653
    %v681 = vpop.f32.mrf.mxu0
    %v682 = vadd.f32 %v645, %v681
    %683 = vmatmul.f32.gmra.mxu0 %v656
    %v684 = vpop.f32.mrf.mxu0
    %v685 = vadd.f32 %v645, %v684
    %686 = vdwg.mxu0
    %v687 = vld [vmem:[%s12] sm:$0xff]
    %v688 = vld [vmem:[%s12 + $0x8] sm:$0xff]
    %v689 = vld [vmem:[%s12 + $0x10] sm:$0xff]
    %v690 = vld [vmem:[%s12 + $0x18] sm:$0xff]
    %693 = vrot.lane.b32.xlu0 %v676, 96
    %v694 = vpop.permute.xlu0 %693
    %695 = vrot.lane.b32.xlu0 %v679, 96
    %v696 = vpop.permute.xlu0 %695
    %vm697 = vcmask 130048
    %v698 = vsel %vm697, %v676, 0
    %v700 = vsel %vm697, %v679, 0
    %v702 = vsel %vm697, %v694, 0
    %v704 = vsel %vm697, %v696, 0
    %706 = vmatpush.xpose.msra.mxu0 0.0
    %707 = vmatpush.xpose.msra.mxu0 0.0
    %708 = vmatpush.xpose.msra.mxu0 0.0
    %709 = vmatpush.xpose.msra.mxu0 0.0
    %710 = vmatpush.xpose.msra.mxu0 0.0
    %711 = vmatpush.xpose.msra.mxu0 0.0
    %712 = vmatpush.xpose.msra.mxu0 0.0
    %713 = vmatpush.xpose.msra.mxu0 0.0
    %714 = vmatpush.xpose.msra.mxu0 0.0
    %715 = vmatpush.xpose.msra.mxu0 0.0
    %716 = vmatpush.xpose.msra.mxu0 0.0
    %717 = vmatpush.xpose.msra.mxu0 0.0
    %718 = vmatpush.xpose.msra.mxu0 0.0
    %719 = vmatpush.xpose.msra.mxu0 0.0
    %720 = vmatpush.xpose.msra.mxu0 %v704
    %721 = vmatpush.xpose.msra.mxu0 %v702
    %722 = vmatmul.f32.gmra.mxu0 %v698
    %v723 = vpop.f32.mrf.mxu0
    %v724 = vadd.f32 0.0, %v723
    %725 = vmatmul.f32.gmra.mxu0 %v700
    %v726 = vpop.f32.mrf.mxu0
    %v727 = vadd.f32 0.0, %v726
    %728 = vdwg.mxu0
    %731 = vrot.lane.b32.xlu0 %v682, 96
    %v732 = vpop.permute.xlu0 %731
    %733 = vrot.lane.b32.xlu0 %v685, 96
    %v734 = vpop.permute.xlu0 %733
    %v735 = vsel %vm697, %v682, 0
    %v737 = vsel %vm697, %v685, 0
    %v739 = vsel %vm697, %v732, 0
    %v741 = vsel %vm697, %v734, 0
    %743 = vmatpush.xpose.msra.mxu0 0.0
    %744 = vmatpush.xpose.msra.mxu0 0.0
    %745 = vmatpush.xpose.msra.mxu0 0.0
    %746 = vmatpush.xpose.msra.mxu0 0.0
    %747 = vmatpush.xpose.msra.mxu0 0.0
    %748 = vmatpush.xpose.msra.mxu0 0.0
    %749 = vmatpush.xpose.msra.mxu0 0.0
    %750 = vmatpush.xpose.msra.mxu0 0.0
    %751 = vmatpush.xpose.msra.mxu0 0.0
    %752 = vmatpush.xpose.msra.mxu0 0.0
    %753 = vmatpush.xpose.msra.mxu0 0.0
    %754 = vmatpush.xpose.msra.mxu0 0.0
    %755 = vmatpush.xpose.msra.mxu0 0.0
    %756 = vmatpush.xpose.msra.mxu0 0.0
    %757 = vmatpush.xpose.msra.mxu0 %v741
    %758 = vmatpush.xpose.msra.mxu0 %v739
    %759 = vmatmul.f32.gmra.mxu0 %v735
    %v760 = vpop.f32.mrf.mxu0
    %v761 = vadd.f32 0.0, %v760
    %762 = vmatmul.f32.gmra.mxu0 %v737
    %v763 = vpop.f32.mrf.mxu0
    %v764 = vadd.f32 0.0, %v763
    %765 = vdwg.mxu0
    %v766 = vmul.f32 %v724, 0.25
    %v767 = vmul.f32 %v727, 0.25
    %v768 = vmul.f32 %v761, 0.25
    %v769 = vmul.f32 %v764, 0.25
    %v770 = vadd.f32 %v766, %v531
    %v771 = vadd.f32 %v767, %v532
    %v772 = vadd.f32 %v768, %v531
    %v773 = vadd.f32 %v769, %v532
    %v774 = vsel %vm697, %v770, -inf
    %775 = vmax.xlane.f32.xlu0 %v774
    %v776 = vpop.xlane.xlu0 %775
    %v777 = vsel %vm697, %v771, -inf
    %778 = vmax.xlane.f32.xlu0 %v777
    %v779 = vpop.xlane.xlu0 %778
    %v780 = vsel %vm697, %v772, -inf
    %781 = vmax.xlane.f32.xlu0 %v780
    %v782 = vpop.xlane.xlu0 %781
    %v783 = vsel %vm697, %v773, -inf
    %784 = vmax.xlane.f32.xlu0 %v783
    %v785 = vpop.xlane.xlu0 %784
    %v786 = vsub.f32 %v770, %v776
    %v787 = vsub.f32 %v771, %v779
    %v788 = vsub.f32 %v772, %v782
    %v789 = vsub.f32 %v773, %v785
    %v790 = vmul.f32 %v786, 1.442695
    %v791 = vpow.pop %v790
    %v792 = vmul.f32 %v787, 1.442695
    %v793 = vpow.pop %v792
    %v794 = vmul.f32 %v788, 1.442695
    %v795 = vpow.pop %v794
    %v796 = vmul.f32 %v789, 1.442695
    %v797 = vpow.pop %v796
    %v798 = vsel %vm697, %v791, 0.0
    %799 = vadd.xlane.f32.xlu0 %v798
    %v800 = vpop.xlane.xlu0 %799
    %v801 = vsel %vm697, %v793, 0.0
    %802 = vadd.xlane.f32.xlu0 %v801
    %v803 = vpop.xlane.xlu0 %802
    %v804 = vsel %vm697, %v795, 0.0
    %805 = vadd.xlane.f32.xlu0 %v804
    %v806 = vpop.xlane.xlu0 %805
    %v807 = vsel %vm697, %v797, 0.0
    %808 = vadd.xlane.f32.xlu0 %v807
    %v809 = vpop.xlane.xlu0 %808
    %v810 = vrcp.pop %v800
    %v811 = vrcp.pop %v803
    %v812 = vrcp.pop %v806
    %v813 = vrcp.pop %v809
    %v814 = vmul.f32 %v791, %v810
    %v815 = vmul.f32 %v793, %v811
    %v816 = vmul.f32 %v795, %v812
    %v817 = vmul.f32 %v797, %v813
    %818 = vrot.lane.b32.xlu0 %v676, 64
    %v819 = vpop.permute.xlu0 %818
    %820 = vrot.lane.b32.xlu0 %v679, 64
    %v821 = vpop.permute.xlu0 %820
    %v825 = vsel %vm697, %v814, 0
    %v828 = vsel %vm697, %v815, 0
    %830 = vmatpush.msra.mxu0 0.0
    %831 = vmatpush.msra.mxu0 0.0
    %832 = vmatpush.msra.mxu0 0.0
    %833 = vmatpush.msra.mxu0 0.0
    %834 = vmatpush.msra.mxu0 0.0
    %835 = vmatpush.msra.mxu0 0.0
    %836 = vmatpush.msra.mxu0 0.0
    %837 = vmatpush.msra.mxu0 0.0
    %838 = vmatpush.msra.mxu0 0.0
    %839 = vmatpush.msra.mxu0 0.0
    %840 = vmatpush.msra.mxu0 0.0
    %841 = vmatpush.msra.mxu0 0.0
    %842 = vmatpush.msra.mxu0 0.0
    %843 = vmatpush.msra.mxu0 0.0
    %844 = vmatpush.msra.mxu0 %v821
    %845 = vmatpush.msra.mxu0 %v819
    %846 = vmatmul.f32.gmra.mxu0 %v825
    %v847 = vpop.f32.mrf.mxu0
    %v848 = vadd.f32 0.0, %v847
    %849 = vmatmul.f32.gmra.mxu0 %v828
    %v850 = vpop.f32.mrf.mxu0
    %v851 = vadd.f32 0.0, %v850
    %852 = vdwg.mxu0
    %853 = vrot.lane.b32.xlu0 %v682, 64
    %v854 = vpop.permute.xlu0 %853
    %855 = vrot.lane.b32.xlu0 %v685, 64
    %v856 = vpop.permute.xlu0 %855
    %v860 = vsel %vm697, %v816, 0
    %v863 = vsel %vm697, %v817, 0
    %865 = vmatpush.msra.mxu0 0.0
    %866 = vmatpush.msra.mxu0 0.0
    %867 = vmatpush.msra.mxu0 0.0
    %868 = vmatpush.msra.mxu0 0.0
    %869 = vmatpush.msra.mxu0 0.0
    %870 = vmatpush.msra.mxu0 0.0
    %871 = vmatpush.msra.mxu0 0.0
    %872 = vmatpush.msra.mxu0 0.0
    %873 = vmatpush.msra.mxu0 0.0
    %874 = vmatpush.msra.mxu0 0.0
    %875 = vmatpush.msra.mxu0 0.0
    %876 = vmatpush.msra.mxu0 0.0
    %877 = vmatpush.msra.mxu0 0.0
    %878 = vmatpush.msra.mxu0 0.0
    %879 = vmatpush.msra.mxu0 %v856
    %880 = vmatpush.msra.mxu0 %v854
    %881 = vmatmul.f32.gmra.mxu0 %v860
    %v882 = vpop.f32.mrf.mxu0
    %v883 = vadd.f32 0.0, %v882
    %884 = vmatmul.f32.gmra.mxu0 %v863
    %v885 = vpop.f32.mrf.mxu0
    %v886 = vadd.f32 0.0, %v885
    %887 = vdwg.mxu0
    %888 = vrot.lane.b32.xlu0 %v676, 112
    %v889 = vpop.permute.xlu0 %888
    %890 = vrot.lane.b32.xlu0 %v679, 112
    %v891 = vpop.permute.xlu0 %890
    %892 = vrot.lane.b32.xlu0 %v676, 80
    %v893 = vpop.permute.xlu0 %892
    %894 = vrot.lane.b32.xlu0 %v679, 80
    %v895 = vpop.permute.xlu0 %894
    %v896 = vsel %vm697, %v889, 0
    %v898 = vsel %vm697, %v891, 0
    %v900 = vsel %vm697, %v893, 0
    %v902 = vsel %vm697, %v895, 0
    %904 = vmatpush.xpose.msra.mxu0 0.0
    %905 = vmatpush.xpose.msra.mxu0 0.0
    %906 = vmatpush.xpose.msra.mxu0 0.0
    %907 = vmatpush.xpose.msra.mxu0 0.0
    %908 = vmatpush.xpose.msra.mxu0 0.0
    %909 = vmatpush.xpose.msra.mxu0 0.0
    %910 = vmatpush.xpose.msra.mxu0 0.0
    %911 = vmatpush.xpose.msra.mxu0 0.0
    %912 = vmatpush.xpose.msra.mxu0 0.0
    %913 = vmatpush.xpose.msra.mxu0 0.0
    %914 = vmatpush.xpose.msra.mxu0 0.0
    %915 = vmatpush.xpose.msra.mxu0 0.0
    %916 = vmatpush.xpose.msra.mxu0 0.0
    %917 = vmatpush.xpose.msra.mxu0 0.0
    %918 = vmatpush.xpose.msra.mxu0 %v902
    %919 = vmatpush.xpose.msra.mxu0 %v900
    %920 = vmatmul.f32.gmra.mxu0 %v896
    %v921 = vpop.f32.mrf.mxu0
    %v922 = vadd.f32 0.0, %v921
    %923 = vmatmul.f32.gmra.mxu0 %v898
    %v924 = vpop.f32.mrf.mxu0
    %v925 = vadd.f32 0.0, %v924
    %926 = vdwg.mxu0
    %927 = vrot.lane.b32.xlu0 %v682, 112
    %v928 = vpop.permute.xlu0 %927
    %929 = vrot.lane.b32.xlu0 %v685, 112
    %v930 = vpop.permute.xlu0 %929
    %931 = vrot.lane.b32.xlu0 %v682, 80
    %v932 = vpop.permute.xlu0 %931
    %933 = vrot.lane.b32.xlu0 %v685, 80
    %v934 = vpop.permute.xlu0 %933
    %v935 = vsel %vm697, %v928, 0
    %v937 = vsel %vm697, %v930, 0
    %v939 = vsel %vm697, %v932, 0
    %v941 = vsel %vm697, %v934, 0
    %943 = vmatpush.xpose.msra.mxu0 0.0
    %944 = vmatpush.xpose.msra.mxu0 0.0
    %945 = vmatpush.xpose.msra.mxu0 0.0
    %946 = vmatpush.xpose.msra.mxu0 0.0
    %947 = vmatpush.xpose.msra.mxu0 0.0
    %948 = vmatpush.xpose.msra.mxu0 0.0
    %949 = vmatpush.xpose.msra.mxu0 0.0
    %950 = vmatpush.xpose.msra.mxu0 0.0
    %951 = vmatpush.xpose.msra.mxu0 0.0
    %952 = vmatpush.xpose.msra.mxu0 0.0
    %953 = vmatpush.xpose.msra.mxu0 0.0
    %954 = vmatpush.xpose.msra.mxu0 0.0
    %955 = vmatpush.xpose.msra.mxu0 0.0
    %956 = vmatpush.xpose.msra.mxu0 0.0
    %957 = vmatpush.xpose.msra.mxu0 %v941
    %958 = vmatpush.xpose.msra.mxu0 %v939
    %959 = vmatmul.f32.gmra.mxu0 %v935
    %v960 = vpop.f32.mrf.mxu0
    %v961 = vadd.f32 0.0, %v960
    %962 = vmatmul.f32.gmra.mxu0 %v937
    %v963 = vpop.f32.mrf.mxu0
    %v964 = vadd.f32 0.0, %v963
    %965 = vdwg.mxu0
    %v966 = vmul.f32 %v922, 0.25
    %v967 = vmul.f32 %v925, 0.25
    %v968 = vmul.f32 %v961, 0.25
    %v969 = vmul.f32 %v964, 0.25
    %v970 = vadd.f32 %v966, %v531
    %v971 = vadd.f32 %v967, %v532
    %v972 = vadd.f32 %v968, %v531
    %v973 = vadd.f32 %v969, %v532
    %v974 = vsel %vm697, %v970, -inf
    %975 = vmax.xlane.f32.xlu0 %v974
    %v976 = vpop.xlane.xlu0 %975
    %v977 = vsel %vm697, %v971, -inf
    %978 = vmax.xlane.f32.xlu0 %v977
    %v979 = vpop.xlane.xlu0 %978
    %v980 = vsel %vm697, %v972, -inf
    %981 = vmax.xlane.f32.xlu0 %v980
    %v982 = vpop.xlane.xlu0 %981
    %v983 = vsel %vm697, %v973, -inf
    %984 = vmax.xlane.f32.xlu0 %v983
    %v985 = vpop.xlane.xlu0 %984
    %v986 = vsub.f32 %v970, %v976
    %v987 = vsub.f32 %v971, %v979
    %v988 = vsub.f32 %v972, %v982
    %v989 = vsub.f32 %v973, %v985
    %v990 = vmul.f32 %v986, 1.442695
    %v991 = vpow.pop %v990
    %v992 = vmul.f32 %v987, 1.442695
    %v993 = vpow.pop %v992
    %v994 = vmul.f32 %v988, 1.442695
    %v995 = vpow.pop %v994
    %v996 = vmul.f32 %v989, 1.442695
    %v997 = vpow.pop %v996
    %v998 = vsel %vm697, %v991, 0.0
    %999 = vadd.xlane.f32.xlu0 %v998
    %v1000 = vpop.xlane.xlu0 %999
    %v1001 = vsel %vm697, %v993, 0.0
    %1002 = vadd.xlane.f32.xlu0 %v1001
    %v1003 = vpop.xlane.xlu0 %1002
    %v1004 = vsel %vm697, %v995, 0.0
    %1005 = vadd.xlane.f32.xlu0 %v1004
    %v1006 = vpop.xlane.xlu0 %1005
    %v1007 = vsel %vm697, %v997, 0.0
    %1008 = vadd.xlane.f32.xlu0 %v1007
    %v1009 = vpop.xlane.xlu0 %1008
    %v1010 = vrcp.pop %v1000
    %v1011 = vrcp.pop %v1003
    %v1012 = vrcp.pop %v1006
    %v1013 = vrcp.pop %v1009
    %v1014 = vmul.f32 %v991, %v1010
    %v1015 = vmul.f32 %v993, %v1011
    %v1016 = vmul.f32 %v995, %v1012
    %v1017 = vmul.f32 %v997, %v1013
    %1018 = vrot.lane.b32.xlu0 %v676, 48
    %v1019 = vpop.permute.xlu0 %1018
    %1020 = vrot.lane.b32.xlu0 %v679, 48
    %v1021 = vpop.permute.xlu0 %1020
    %v1025 = vsel %vm697, %v1014, 0
    %v1028 = vsel %vm697, %v1015, 0
    %1030 = vmatpush.msra.mxu0 0.0
    %1031 = vmatpush.msra.mxu0 0.0
    %1032 = vmatpush.msra.mxu0 0.0
    %1033 = vmatpush.msra.mxu0 0.0
    %1034 = vmatpush.msra.mxu0 0.0
    %1035 = vmatpush.msra.mxu0 0.0
    %1036 = vmatpush.msra.mxu0 0.0
    %1037 = vmatpush.msra.mxu0 0.0
    %1038 = vmatpush.msra.mxu0 0.0
    %1039 = vmatpush.msra.mxu0 0.0
    %1040 = vmatpush.msra.mxu0 0.0
    %1041 = vmatpush.msra.mxu0 0.0
    %1042 = vmatpush.msra.mxu0 0.0
    %1043 = vmatpush.msra.mxu0 0.0
    %1044 = vmatpush.msra.mxu0 %v1021
    %1045 = vmatpush.msra.mxu0 %v1019
    %1046 = vmatmul.f32.gmra.mxu0 %v1025
    %v1047 = vpop.f32.mrf.mxu0
    %v1048 = vadd.f32 0.0, %v1047
    %1049 = vmatmul.f32.gmra.mxu0 %v1028
    %v1050 = vpop.f32.mrf.mxu0
    %v1051 = vadd.f32 0.0, %v1050
    %1052 = vdwg.mxu0
    %1053 = vrot.lane.b32.xlu0 %v682, 48
    %v1054 = vpop.permute.xlu0 %1053
    %1055 = vrot.lane.b32.xlu0 %v685, 48
    %v1056 = vpop.permute.xlu0 %1055
    %v1060 = vsel %vm697, %v1016, 0
    %v1063 = vsel %vm697, %v1017, 0
    %1065 = vmatpush.msra.mxu0 0.0
    %1066 = vmatpush.msra.mxu0 0.0
    %1067 = vmatpush.msra.mxu0 0.0
    %1068 = vmatpush.msra.mxu0 0.0
    %1069 = vmatpush.msra.mxu0 0.0
    %1070 = vmatpush.msra.mxu0 0.0
    %1071 = vmatpush.msra.mxu0 0.0
    %1072 = vmatpush.msra.mxu0 0.0
    %1073 = vmatpush.msra.mxu0 0.0
    %1074 = vmatpush.msra.mxu0 0.0
    %1075 = vmatpush.msra.mxu0 0.0
    %1076 = vmatpush.msra.mxu0 0.0
    %1077 = vmatpush.msra.mxu0 0.0
    %1078 = vmatpush.msra.mxu0 0.0
    %1079 = vmatpush.msra.mxu0 %v1056
    %1080 = vmatpush.msra.mxu0 %v1054
    %1081 = vmatmul.f32.gmra.mxu0 %v1060
    %v1082 = vpop.f32.mrf.mxu0
    %v1083 = vadd.f32 0.0, %v1082
    %1084 = vmatmul.f32.gmra.mxu0 %v1063
    %v1085 = vpop.f32.mrf.mxu0
    %v1086 = vadd.f32 0.0, %v1085
    %1087 = vdwg.mxu0
    %v1089 = vsel %vm697, %v1048, 0
    %v1092 = vsel %vm697, %v1051, 0
    %v1095 = vsel %vm697, %v1083, 0
    %v1098 = vsel %vm697, %v1086, 0
    %1100 = vmatpush.msra.mxu0 0.0
    %1101 = vmatpush.msra.mxu0 0.0
    %1102 = vmatpush.msra.mxu0 0.0
    %1103 = vmatpush.msra.mxu0 0.0
    %1104 = vmatpush.msra.mxu0 0.0
    %1105 = vmatpush.msra.mxu0 0.0
    %1106 = vmatpush.msra.mxu0 0.0
    %1107 = vmatpush.msra.mxu0 0.0
    %1108 = vmatpush.msra.mxu0 0.0
    %1109 = vmatpush.msra.mxu0 0.0
    %1110 = vmatpush.msra.mxu0 0.0
    %1111 = vmatpush.msra.mxu0 0.0
    %1112 = vmatpush.msra.mxu0 0.0
    %1113 = vmatpush.msra.mxu0 0.0
    %1114 = vmatpush.msra.mxu0 %v690
    %1115 = vmatpush.msra.mxu0 %v689
    %1116 = vmatmul.f32.gmra.mxu0 %v1089
    %v1117 = vpop.f32.mrf.mxu0
    %v1118 = vadd.f32 0.0, %v1117
    %1119 = vmatmul.f32.gmra.mxu0 %v1092
    %v1120 = vpop.f32.mrf.mxu0
    %v1121 = vadd.f32 0.0, %v1120
    %1122 = vmatmul.f32.gmra.mxu0 %v1095
    %v1123 = vpop.f32.mrf.mxu0
    %v1124 = vadd.f32 0.0, %v1123
    %1125 = vmatmul.f32.gmra.mxu0 %v1098
    %v1126 = vpop.f32.mrf.mxu0
    %v1127 = vadd.f32 0.0, %v1126
    %1128 = vdwg.mxu0
    %v1130 = vsel %vm697, %v848, 0
    %v1133 = vsel %vm697, %v851, 0
    %v1136 = vsel %vm697, %v883, 0
    %v1139 = vsel %vm697, %v886, 0
    %1141 = vmatpush.msra.mxu0 0.0
    %1142 = vmatpush.msra.mxu0 0.0
    %1143 = vmatpush.msra.mxu0 0.0
    %1144 = vmatpush.msra.mxu0 0.0
    %1145 = vmatpush.msra.mxu0 0.0
    %1146 = vmatpush.msra.mxu0 0.0
    %1147 = vmatpush.msra.mxu0 0.0
    %1148 = vmatpush.msra.mxu0 0.0
    %1149 = vmatpush.msra.mxu0 0.0
    %1150 = vmatpush.msra.mxu0 0.0
    %1151 = vmatpush.msra.mxu0 0.0
    %1152 = vmatpush.msra.mxu0 0.0
    %1153 = vmatpush.msra.mxu0 0.0
    %1154 = vmatpush.msra.mxu0 0.0
    %1155 = vmatpush.msra.mxu0 %v688
    %1156 = vmatpush.msra.mxu0 %v687
    %1157 = vmatmul.f32.gmra.mxu0 %v1130
    %v1158 = vpop.f32.mrf.mxu0
    %v1159 = vadd.f32 %v1118, %v1158
    %1160 = vmatmul.f32.gmra.mxu0 %v1133
    %v1161 = vpop.f32.mrf.mxu0
    %v1162 = vadd.f32 %v1121, %v1161
    %1163 = vmatmul.f32.gmra.mxu0 %v1136
    %v1164 = vpop.f32.mrf.mxu0
    %v1165 = vadd.f32 %v1124, %v1164
    %1166 = vmatmul.f32.gmra.mxu0 %v1139
    %v1167 = vpop.f32.mrf.mxu0
    %v1168 = vadd.f32 %v1127, %v1167
    %1169 = vdwg.mxu0
    %v1170 = vadd.f32 %v522, %v1159
    %v1171 = vadd.f32 %v523, %v1162
    %v1172 = vadd.f32 %v524, %v1165
    %v1173 = vadd.f32 %v525, %v1168
    %v1174 = vld [vmem:[%s13] sm:$0x1]
    %v1175 = vperm.slane %v1174, 0
    %v1176 = vadd.f32 %v1170, %v1175
    %v1177 = vadd.f32 %v1171, %v1175
    %v1178 = vadd.f32 %v1172, %v1175
    %v1179 = vadd.f32 %v1173, %v1175
    %v1180 = vld [vmem:[%s14] sm:$0x1]
    %v1181 = vld [vmem:[%s15] sm:$0x1]
    %v1182 = vsel %vm81, %v1176, 0.0
    %1183 = vadd.xlane.f32.xlu0 %v1182
    %v1184 = vpop.xlane.xlu0 %1183
    %v1185 = vsel %vm81, %v1177, 0.0
    %1186 = vadd.xlane.f32.xlu0 %v1185
    %v1187 = vpop.xlane.xlu0 %1186
    %v1188 = vsel %vm81, %v1178, 0.0
    %1189 = vadd.xlane.f32.xlu0 %v1188
    %v1190 = vpop.xlane.xlu0 %1189
    %v1191 = vsel %vm81, %v1179, 0.0
    %1192 = vadd.xlane.f32.xlu0 %v1191
    %v1193 = vpop.xlane.xlu0 %1192
    %v1194 = vmul.f32 %v1184, %v553
    %v1195 = vmul.f32 %v1187, %v553
    %v1196 = vmul.f32 %v1190, %v553
    %v1197 = vmul.f32 %v1193, %v553
    %v1198 = vsub.f32 %v1176, %v1194
    %v1199 = vsub.f32 %v1177, %v1195
    %v1200 = vsub.f32 %v1178, %v1196
    %v1201 = vsub.f32 %v1179, %v1197
    %v1202 = vmul.f32 %v1198, %v1198
    %v1203 = vmul.f32 %v1199, %v1199
    %v1204 = vmul.f32 %v1200, %v1200
    %v1205 = vmul.f32 %v1201, %v1201
    %v1206 = vsel %vm81, %v1202, 0.0
    %1207 = vadd.xlane.f32.xlu0 %v1206
    %v1208 = vpop.xlane.xlu0 %1207
    %v1209 = vsel %vm81, %v1203, 0.0
    %1210 = vadd.xlane.f32.xlu0 %v1209
    %v1211 = vpop.xlane.xlu0 %1210
    %v1212 = vsel %vm81, %v1204, 0.0
    %1213 = vadd.xlane.f32.xlu0 %v1212
    %v1214 = vpop.xlane.xlu0 %1213
    %v1215 = vsel %vm81, %v1205, 0.0
    %1216 = vadd.xlane.f32.xlu0 %v1215
    %v1217 = vpop.xlane.xlu0 %1216
    %v1218 = vmul.f32 %v1208, %v553
    %v1219 = vmul.f32 %v1211, %v553
    %v1220 = vmul.f32 %v1214, %v553
    %v1221 = vmul.f32 %v1217, %v553
    %v1222 = vadd.f32 %v1218, 1e-05
    %v1223 = vadd.f32 %v1219, 1e-05
    %v1224 = vadd.f32 %v1220, 1e-05
    %v1225 = vadd.f32 %v1221, 1e-05
    %v1226 = vrsqrt.pop %v1222
    %v1227 = vmul.f32 %v1226, %v1222
    %v1228 = vmul.f32 %v1227, %v1226
    %v1229 = vmul.f32 0.5, %v1228
    %v1230 = vsub.f32 1.5, %v1229
    %v1231 = vmul.f32 %v1226, %v1230
    %vm1232 = vweird.f32 %v1222
    %vm1233 = vweird.f32 %v1226
    %vm1234 = vmor %vm1232, %vm1233
    %v1235 = vsel %vm1234, %v1226, %v1231
    %v1236 = vrsqrt.pop %v1223
    %v1237 = vmul.f32 %v1236, %v1223
    %v1238 = vmul.f32 %v1237, %v1236
    %v1239 = vmul.f32 0.5, %v1238
    %v1240 = vsub.f32 1.5, %v1239
    %v1241 = vmul.f32 %v1236, %v1240
    %vm1242 = vweird.f32 %v1223
    %vm1243 = vweird.f32 %v1236
    %vm1244 = vmor %vm1242, %vm1243
    %v1245 = vsel %vm1244, %v1236, %v1241
    %v1246 = vrsqrt.pop %v1224
    %v1247 = vmul.f32 %v1246, %v1224
    %v1248 = vmul.f32 %v1247, %v1246
    %v1249 = vmul.f32 0.5, %v1248
    %v1250 = vsub.f32 1.5, %v1249
    %v1251 = vmul.f32 %v1246, %v1250
    %vm1252 = vweird.f32 %v1224
    %vm1253 = vweird.f32 %v1246
    %vm1254 = vmor %vm1252, %vm1253
    %v1255 = vsel %vm1254, %v1246, %v1251
    %v1256 = vrsqrt.pop %v1225
    %v1257 = vmul.f32 %v1256, %v1225
    %v1258 = vmul.f32 %v1257, %v1256
    %v1259 = vmul.f32 0.5, %v1258
    %v1260 = vsub.f32 1.5, %v1259
    %v1261 = vmul.f32 %v1256, %v1260
    %vm1262 = vweird.f32 %v1225
    %vm1263 = vweird.f32 %v1256
    %vm1264 = vmor %vm1262, %vm1263
    %v1265 = vsel %vm1264, %v1256, %v1261
    %v1266 = vmul.f32 %v1198, %v1235
    %v1267 = vmul.f32 %v1199, %v1245
    %v1268 = vmul.f32 %v1200, %v1255
    %v1269 = vmul.f32 %v1201, %v1265
    %v1270 = vperm.slane %v1180, 0
    %v1271 = vmul.f32 %v1266, %v1270
    %v1272 = vmul.f32 %v1267, %v1270
    %v1273 = vmul.f32 %v1268, %v1270
    %v1274 = vmul.f32 %v1269, %v1270
    %v1275 = vperm.slane %v1181, 0
    %v1276 = vadd.f32 %v1271, %v1275
    %v1277 = vadd.f32 %v1272, %v1275
    %v1278 = vadd.f32 %v1273, %v1275
    %v1279 = vadd.f32 %v1274, %v1275
    %v1280 = vld [vmem:[%s16] sm:$0xff]
    %v1281 = vld [vmem:[%s16 + $0x8] sm:$0xff]
    %v1282 = vld [vmem:[%s16 + $0x10] sm:$0xff]
    %v1283 = vld [vmem:[%s16 + $0x18] sm:$0xff]
    %v1284 = vld [vmem:[%s17] sm:$0x1]
    %v1285 = vperm.slane %v1284, 0
    %v1287 = vsel %vm81, %v1276, 0
    %v1290 = vsel %vm81, %v1277, 0
    %v1293 = vsel %vm81, %v1278, 0
    %v1296 = vsel %vm81, %v1279, 0
    %1298 = vmatpush.msra.mxu0 0.0
    %1299 = vmatpush.msra.mxu0 0.0
    %1300 = vmatpush.msra.mxu0 0.0
    %1301 = vmatpush.msra.mxu0 0.0
    %1302 = vmatpush.msra.mxu0 0.0
    %1303 = vmatpush.msra.mxu0 0.0
    %1304 = vmatpush.msra.mxu0 0.0
    %1305 = vmatpush.msra.mxu0 0.0
    %1306 = vmatpush.msra.mxu0 0.0
    %1307 = vmatpush.msra.mxu0 0.0
    %1308 = vmatpush.msra.mxu0 0.0
    %1309 = vmatpush.msra.mxu0 0.0
    %1310 = vmatpush.msra.mxu0 %v1283
    %1311 = vmatpush.msra.mxu0 %v1282
    %1312 = vmatpush.msra.mxu0 %v1281
    %1313 = vmatpush.msra.mxu0 %v1280
    %1314 = vmatmul.f32.gmra.mxu0 %v1287
    %v1315 = vpop.f32.mrf.mxu0
    %v1316 = vadd.f32 %v1285, %v1315
    %1317 = vmatmul.f32.gmra.mxu0 %v1290
    %v1318 = vpop.f32.mrf.mxu0
    %v1319 = vadd.f32 %v1285, %v1318
    %1320 = vmatmul.f32.gmra.mxu0 %v1293
    %v1321 = vpop.f32.mrf.mxu0
    %v1322 = vadd.f32 %v1285, %v1321
    %1323 = vmatmul.f32.gmra.mxu0 %v1296
    %v1324 = vpop.f32.mrf.mxu0
    %v1325 = vadd.f32 %v1285, %v1324
    %1326 = vdwg.mxu0
    %v1327 = vmul.f32 %v1316, 0.5
    %v1328 = vmul.f32 %v1319, 0.5
    %v1329 = vmul.f32 %v1322, 0.5
    %v1330 = vmul.f32 %v1325, 0.5
    %v1331 = vmul.f32 %v1316, 0.044715
    %v1332 = vmul.f32 %v1319, 0.044715
    %v1333 = vmul.f32 %v1322, 0.044715
    %v1334 = vmul.f32 %v1325, 0.044715
    %v1335 = vmul.f32 %v1331, %v1316
    %v1336 = vmul.f32 %v1332, %v1319
    %v1337 = vmul.f32 %v1333, %v1322
    %v1338 = vmul.f32 %v1334, %v1325
    %v1339 = vmul.f32 %v1335, %v1316
    %v1340 = vmul.f32 %v1336, %v1319
    %v1341 = vmul.f32 %v1337, %v1322
    %v1342 = vmul.f32 %v1338, %v1325
    %v1343 = vadd.f32 %v1316, %v1339
    %v1344 = vadd.f32 %v1319, %v1340
    %v1345 = vadd.f32 %v1322, %v1341
    %v1346 = vadd.f32 %v1325, %v1342
    %v1347 = vmul.f32 %v1343, 0.7978845
    %v1348 = vmul.f32 %v1344, 0.7978845
    %v1349 = vmul.f32 %v1345, 0.7978845
    %v1350 = vmul.f32 %v1346, 0.7978845
    %v1351 = vtanh.pop %v1347
    %v1352 = vtanh.pop %v1348
    %v1353 = vtanh.pop %v1349
    %v1354 = vtanh.pop %v1350
    %v1355 = vadd.f32 %v1351, 1.0
    %v1356 = vadd.f32 %v1352, 1.0
    %v1357 = vadd.f32 %v1353, 1.0
    %v1358 = vadd.f32 %v1354, 1.0
    %v1359 = vmul.f32 %v1327, %v1355
    %v1360 = vmul.f32 %v1328, %v1356
    %v1361 = vmul.f32 %v1329, %v1357
    %v1362 = vmul.f32 %v1330, %v1358
    %v1363 = vld [vmem:[%s18] sm:$0xff]
    %v1364 = vld [vmem:[%s18 + $0x8] sm:$0xff]
    %v1365 = vld [vmem:[%s18 + $0x10] sm:$0xff]
    %v1366 = vld [vmem:[%s18 + $0x18] sm:$0xff]
    %v1367 = vld [vmem:[%s18 + $0x20] sm:$0xff]
    %v1368 = vld [vmem:[%s18 + $0x28] sm:$0xff]
    %v1369 = vld [vmem:[%s18 + $0x30] sm:$0xff]
    %v1370 = vld [vmem:[%s18 + $0x38] sm:$0xff]
    %v1371 = vld [vmem:[%s18 + $0x40] sm:$0xff]
    %v1372 = vld [vmem:[%s18 + $0x48] sm:$0xff]
    %v1373 = vld [vmem:[%s18 + $0x50] sm:$0xff]
    %v1374 = vld [vmem:[%s18 + $0x58] sm:$0xff]
    %v1375 = vld [vmem:[%s18 + $0x60] sm:$0xff]
    %v1376 = vld [vmem:[%s18 + $0x68] sm:$0xff]
    %v1377 = vld [vmem:[%s18 + $0x70] sm:$0xff]
    %v1378 = vld [vmem:[%s18 + $0x78] sm:$0xff]
    %v1379 = vld [vmem:[%s19] sm:$0x1]
    %v1380 = vperm.slane %v1379, 0
    %1381 = vmatpush.msra.mxu0 %v1378
    %1382 = vmatpush.msra.mxu0 %v1377
    %1383 = vmatpush.msra.mxu0 %v1376
    %1384 = vmatpush.msra.mxu0 %v1375
    %1385 = vmatpush.msra.mxu0 %v1374
    %1386 = vmatpush.msra.mxu0 %v1373
    %1387 = vmatpush.msra.mxu0 %v1372
    %1388 = vmatpush.msra.mxu0 %v1371
    %1389 = vmatpush.msra.mxu0 %v1370
    %1390 = vmatpush.msra.mxu0 %v1369
    %1391 = vmatpush.msra.mxu0 %v1368
    %1392 = vmatpush.msra.mxu0 %v1367
    %1393 = vmatpush.msra.mxu0 %v1366
    %1394 = vmatpush.msra.mxu0 %v1365
    %1395 = vmatpush.msra.mxu0 %v1364
    %1396 = vmatpush.msra.mxu0 %v1363
    %1397 = vmatmul.f32.gmra.mxu0 %v1359
    %v1398 = vpop.f32.mrf.mxu0
    %v1399 = vadd.f32 %v1380, %v1398
    %1400 = vmatmul.f32.gmra.mxu0 %v1360
    %v1401 = vpop.f32.mrf.mxu0
    %v1402 = vadd.f32 %v1380, %v1401
    %1403 = vmatmul.f32.gmra.mxu0 %v1361
    %v1404 = vpop.f32.mrf.mxu0
    %v1405 = vadd.f32 %v1380, %v1404
    %1406 = vmatmul.f32.gmra.mxu0 %v1362
    %v1407 = vpop.f32.mrf.mxu0
    %v1408 = vadd.f32 %v1380, %v1407
    %1409 = vdwg.mxu0
    %v1410 = vadd.f32 %v1176, %v1399
    %v1411 = vadd.f32 %v1177, %v1402
    %v1412 = vadd.f32 %v1178, %v1405
    %v1413 = vadd.f32 %v1179, %v1408
    %v1414 = vld [vmem:[%s8 + $0x1] sm:$0x1]
    %v1415 = vld [vmem:[%s9 + $0x1] sm:$0x1]
    %v1416 = vsel %vm81, %v1410, 0.0
    %1417 = vadd.xlane.f32.xlu0 %v1416
    %v1418 = vpop.xlane.xlu0 %1417
    %v1419 = vsel %vm81, %v1411, 0.0
    %1420 = vadd.xlane.f32.xlu0 %v1419
    %v1421 = vpop.xlane.xlu0 %1420
    %v1422 = vsel %vm81, %v1412, 0.0
    %1423 = vadd.xlane.f32.xlu0 %v1422
    %v1424 = vpop.xlane.xlu0 %1423
    %v1425 = vsel %vm81, %v1413, 0.0
    %1426 = vadd.xlane.f32.xlu0 %v1425
    %v1427 = vpop.xlane.xlu0 %1426
    %v1428 = vmul.f32 %v1418, %v553
    %v1429 = vmul.f32 %v1421, %v553
    %v1430 = vmul.f32 %v1424, %v553
    %v1431 = vmul.f32 %v1427, %v553
    %v1432 = vsub.f32 %v1410, %v1428
    %v1433 = vsub.f32 %v1411, %v1429
    %v1434 = vsub.f32 %v1412, %v1430
    %v1435 = vsub.f32 %v1413, %v1431
    %v1436 = vmul.f32 %v1432, %v1432
    %v1437 = vmul.f32 %v1433, %v1433
    %v1438 = vmul.f32 %v1434, %v1434
    %v1439 = vmul.f32 %v1435, %v1435
    %v1440 = vsel %vm81, %v1436, 0.0
    %1441 = vadd.xlane.f32.xlu0 %v1440
    %v1442 = vpop.xlane.xlu0 %1441
    %v1443 = vsel %vm81, %v1437, 0.0
    %1444 = vadd.xlane.f32.xlu0 %v1443
    %v1445 = vpop.xlane.xlu0 %1444
    %v1446 = vsel %vm81, %v1438, 0.0
    %1447 = vadd.xlane.f32.xlu0 %v1446
    %v1448 = vpop.xlane.xlu0 %1447
    %v1449 = vsel %vm81, %v1439, 0.0
    %1450 = vadd.xlane.f32.xlu0 %v1449
    %v1451 = vpop.xlane.xlu0 %1450
    %v1452 = vmul.f32 %v1442, %v553
    %v1453 = vmul.f32 %v1445, %v553
    %v1454 = vmul.f32 %v1448, %v553
    %v1455 = vmul.f32 %v1451, %v553
    %v1456 = vadd.f32 %v1452, 1e-05
    %v1457 = vadd.f32 %v1453, 1e-05
    %v1458 = vadd.f32 %v1454, 1e-05
    %v1459 = vadd.f32 %v1455, 1e-05
    %v1460 = vrsqrt.pop %v1456
    %v1461 = vmul.f32 %v1460, %v1456
    %v1462 = vmul.f32 %v1461, %v1460
    %v1463 = vmul.f32 0.5, %v1462
    %v1464 = vsub.f32 1.5, %v1463
    %v1465 = vmul.f32 %v1460, %v1464
    %vm1466 = vweird.f32 %v1456
    %vm1467 = vweird.f32 %v1460
    %vm1468 = vmor %vm1466, %vm1467
    %v1469 = vsel %vm1468, %v1460, %v1465
    %v1470 = vrsqrt.pop %v1457
    %v1471 = vmul.f32 %v1470, %v1457
    %v1472 = vmul.f32 %v1471, %v1470
    %v1473 = vmul.f32 0.5, %v1472
    %v1474 = vsub.f32 1.5, %v1473
    %v1475 = vmul.f32 %v1470, %v1474
    %vm1476 = vweird.f32 %v1457
    %vm1477 = vweird.f32 %v1470
    %vm1478 = vmor %vm1476, %vm1477
    %v1479 = vsel %vm1478, %v1470, %v1475
    %v1480 = vrsqrt.pop %v1458
    %v1481 = vmul.f32 %v1480, %v1458
    %v1482 = vmul.f32 %v1481, %v1480
    %v1483 = vmul.f32 0.5, %v1482
    %v1484 = vsub.f32 1.5, %v1483
    %v1485 = vmul.f32 %v1480, %v1484
    %vm1486 = vweird.f32 %v1458
    %vm1487 = vweird.f32 %v1480
    %vm1488 = vmor %vm1486, %vm1487
    %v1489 = vsel %vm1488, %v1480, %v1485
    %v1490 = vrsqrt.pop %v1459
    %v1491 = vmul.f32 %v1490, %v1459
    %v1492 = vmul.f32 %v1491, %v1490
    %v1493 = vmul.f32 0.5, %v1492
    %v1494 = vsub.f32 1.5, %v1493
    %v1495 = vmul.f32 %v1490, %v1494
    %vm1496 = vweird.f32 %v1459
    %vm1497 = vweird.f32 %v1490
    %vm1498 = vmor %vm1496, %vm1497
    %v1499 = vsel %vm1498, %v1490, %v1495
    %v1500 = vmul.f32 %v1432, %v1469
    %v1501 = vmul.f32 %v1433, %v1479
    %v1502 = vmul.f32 %v1434, %v1489
    %v1503 = vmul.f32 %v1435, %v1499
    %v1504 = vperm.slane %v1414, 0
    %v1505 = vmul.f32 %v1500, %v1504
    %v1506 = vmul.f32 %v1501, %v1504
    %v1507 = vmul.f32 %v1502, %v1504
    %v1508 = vmul.f32 %v1503, %v1504
    %v1509 = vperm.slane %v1415, 0
    %v1510 = vadd.f32 %v1505, %v1509
    %v1511 = vadd.f32 %v1506, %v1509
    %v1512 = vadd.f32 %v1507, %v1509
    %v1513 = vadd.f32 %v1508, %v1509
    %s1514 = scalar_lea.vmem %s10, 32
    %v1515 = vld [vmem:[%s1514] sm:$0xff]
    %v1516 = vld [vmem:[%s1514 + $0x8] sm:$0xff]
    %v1517 = vld [vmem:[%s1514 + $0x10] sm:$0xff]
    %v1518 = vld [vmem:[%s1514 + $0x18] sm:$0xff]
    %v1519 = vld [vmem:[%s11 + $0x1] sm:$0x1]
    %v1520 = vperm.slane %v1519, 0
    %v1522 = vsel %vm81, %v1510, 0
    %v1525 = vsel %vm81, %v1511, 0
    %v1528 = vsel %vm81, %v1512, 0
    %v1531 = vsel %vm81, %v1513, 0
    %1533 = vmatpush.msra.mxu0 0.0
    %1534 = vmatpush.msra.mxu0 0.0
    %1535 = vmatpush.msra.mxu0 0.0
    %1536 = vmatpush.msra.mxu0 0.0
    %1537 = vmatpush.msra.mxu0 0.0
    %1538 = vmatpush.msra.mxu0 0.0
    %1539 = vmatpush.msra.mxu0 0.0
    %1540 = vmatpush.msra.mxu0 0.0
    %1541 = vmatpush.msra.mxu0 0.0
    %1542 = vmatpush.msra.mxu0 0.0
    %1543 = vmatpush.msra.mxu0 0.0
    %1544 = vmatpush.msra.mxu0 0.0
    %1545 = vmatpush.msra.mxu0 %v1518
    %1546 = vmatpush.msra.mxu0 %v1517
    %1547 = vmatpush.msra.mxu0 %v1516
    %1548 = vmatpush.msra.mxu0 %v1515
    %1549 = vmatmul.f32.gmra.mxu0 %v1522
    %v1550 = vpop.f32.mrf.mxu0
    %v1551 = vadd.f32 %v1520, %v1550
    %1552 = vmatmul.f32.gmra.mxu0 %v1525
    %v1553 = vpop.f32.mrf.mxu0
    %v1554 = vadd.f32 %v1520, %v1553
    %1555 = vmatmul.f32.gmra.mxu0 %v1528
    %v1556 = vpop.f32.mrf.mxu0
    %v1557 = vadd.f32 %v1520, %v1556
    %1558 = vmatmul.f32.gmra.mxu0 %v1531
    %v1559 = vpop.f32.mrf.mxu0
    %v1560 = vadd.f32 %v1520, %v1559
    %1561 = vdwg.mxu0
    %s1562 = scalar_lea.vmem %s12, 32
    %v1563 = vld [vmem:[%s1562] sm:$0xff]
    %v1564 = vld [vmem:[%s1562 + $0x8] sm:$0xff]
    %v1565 = vld [vmem:[%s1562 + $0x10] sm:$0xff]
    %v1566 = vld [vmem:[%s1562 + $0x18] sm:$0xff]
    %1569 = vrot.lane.b32.xlu0 %v1551, 96
    %v1570 = vpop.permute.xlu0 %1569
    %1571 = vrot.lane.b32.xlu0 %v1554, 96
    %v1572 = vpop.permute.xlu0 %1571
    %v1573 = vsel %vm697, %v1551, 0
    %v1575 = vsel %vm697, %v1554, 0
    %v1577 = vsel %vm697, %v1570, 0
    %v1579 = vsel %vm697, %v1572, 0
    %1581 = vmatpush.xpose.msra.mxu0 0.0
    %1582 = vmatpush.xpose.msra.mxu0 0.0
    %1583 = vmatpush.xpose.msra.mxu0 0.0
    %1584 = vmatpush.xpose.msra.mxu0 0.0
    %1585 = vmatpush.xpose.msra.mxu0 0.0
    %1586 = vmatpush.xpose.msra.mxu0 0.0
    %1587 = vmatpush.xpose.msra.mxu0 0.0
    %1588 = vmatpush.xpose.msra.mxu0 0.0
    %1589 = vmatpush.xpose.msra.mxu0 0.0
    %1590 = vmatpush.xpose.msra.mxu0 0.0
    %1591 = vmatpush.xpose.msra.mxu0 0.0
    %1592 = vmatpush.xpose.msra.mxu0 0.0
    %1593 = vmatpush.xpose.msra.mxu0 0.0
    %1594 = vmatpush.xpose.msra.mxu0 0.0
    %1595 = vmatpush.xpose.msra.mxu0 %v1579
    %1596 = vmatpush.xpose.msra.mxu0 %v1577
    %1597 = vmatmul.f32.gmra.mxu0 %v1573
    %v1598 = vpop.f32.mrf.mxu0
    %v1599 = vadd.f32 0.0, %v1598
    %1600 = vmatmul.f32.gmra.mxu0 %v1575
    %v1601 = vpop.f32.mrf.mxu0
    %v1602 = vadd.f32 0.0, %v1601
    %1603 = vdwg.mxu0
    %1606 = vrot.lane.b32.xlu0 %v1557, 96
    %v1607 = vpop.permute.xlu0 %1606
    %1608 = vrot.lane.b32.xlu0 %v1560, 96
    %v1609 = vpop.permute.xlu0 %1608
    %v1610 = vsel %vm697, %v1557, 0
    %v1612 = vsel %vm697, %v1560, 0
    %v1614 = vsel %vm697, %v1607, 0
    %v1616 = vsel %vm697, %v1609, 0
    %1618 = vmatpush.xpose.msra.mxu0 0.0
    %1619 = vmatpush.xpose.msra.mxu0 0.0
    %1620 = vmatpush.xpose.msra.mxu0 0.0
    %1621 = vmatpush.xpose.msra.mxu0 0.0
    %1622 = vmatpush.xpose.msra.mxu0 0.0
    %1623 = vmatpush.xpose.msra.mxu0 0.0
    %1624 = vmatpush.xpose.msra.mxu0 0.0
    %1625 = vmatpush.xpose.msra.mxu0 0.0
    %1626 = vmatpush.xpose.msra.mxu0 0.0
    %1627 = vmatpush.xpose.msra.mxu0 0.0
    %1628 = vmatpush.xpose.msra.mxu0 0.0
    %1629 = vmatpush.xpose.msra.mxu0 0.0
    %1630 = vmatpush.xpose.msra.mxu0 0.0
    %1631 = vmatpush.xpose.msra.mxu0 0.0
    %1632 = vmatpush.xpose.msra.mxu0 %v1616
    %1633 = vmatpush.xpose.msra.mxu0 %v1614
    %1634 = vmatmul.f32.gmra.mxu0 %v1610
    %v1635 = vpop.f32.mrf.mxu0
    %v1636 = vadd.f32 0.0, %v1635
    %1637 = vmatmul.f32.gmra.mxu0 %v1612
    %v1638 = vpop.f32.mrf.mxu0
    %v1639 = vadd.f32 0.0, %v1638
    %1640 = vdwg.mxu0
    %v1641 = vmul.f32 %v1599, 0.25
    %v1642 = vmul.f32 %v1602, 0.25
    %v1643 = vmul.f32 %v1636, 0.25
    %v1644 = vmul.f32 %v1639, 0.25
    %v1645 = vadd.f32 %v1641, %v531
    %v1646 = vadd.f32 %v1642, %v532
    %v1647 = vadd.f32 %v1643, %v531
    %v1648 = vadd.f32 %v1644, %v532
    %v1649 = vsel %vm697, %v1645, -inf
    %1650 = vmax.xlane.f32.xlu0 %v1649
    %v1651 = vpop.xlane.xlu0 %1650
    %v1652 = vsel %vm697, %v1646, -inf
    %1653 = vmax.xlane.f32.xlu0 %v1652
    %v1654 = vpop.xlane.xlu0 %1653
    %v1655 = vsel %vm697, %v1647, -inf
    %1656 = vmax.xlane.f32.xlu0 %v1655
    %v1657 = vpop.xlane.xlu0 %1656
    %v1658 = vsel %vm697, %v1648, -inf
    %1659 = vmax.xlane.f32.xlu0 %v1658
    %v1660 = vpop.xlane.xlu0 %1659
    %v1661 = vsub.f32 %v1645, %v1651
    %v1662 = vsub.f32 %v1646, %v1654
    %v1663 = vsub.f32 %v1647, %v1657
    %v1664 = vsub.f32 %v1648, %v1660
    %v1665 = vmul.f32 %v1661, 1.442695
    %v1666 = vpow.pop %v1665
    %v1667 = vmul.f32 %v1662, 1.442695
    %v1668 = vpow.pop %v1667
    %v1669 = vmul.f32 %v1663, 1.442695
    %v1670 = vpow.pop %v1669
    %v1671 = vmul.f32 %v1664, 1.442695
    %v1672 = vpow.pop %v1671
    %v1673 = vsel %vm697, %v1666, 0.0
    %1674 = vadd.xlane.f32.xlu0 %v1673
    %v1675 = vpop.xlane.xlu0 %1674
    %v1676 = vsel %vm697, %v1668, 0.0
    %1677 = vadd.xlane.f32.xlu0 %v1676
    %v1678 = vpop.xlane.xlu0 %1677
    %v1679 = vsel %vm697, %v1670, 0.0
    %1680 = vadd.xlane.f32.xlu0 %v1679
    %v1681 = vpop.xlane.xlu0 %1680
    %v1682 = vsel %vm697, %v1672, 0.0
    %1683 = vadd.xlane.f32.xlu0 %v1682
    %v1684 = vpop.xlane.xlu0 %1683
    %v1685 = vrcp.pop %v1675
    %v1686 = vrcp.pop %v1678
    %v1687 = vrcp.pop %v1681
    %v1688 = vrcp.pop %v1684
    %v1689 = vmul.f32 %v1666, %v1685
    %v1690 = vmul.f32 %v1668, %v1686
    %v1691 = vmul.f32 %v1670, %v1687
    %v1692 = vmul.f32 %v1672, %v1688
    %1693 = vrot.lane.b32.xlu0 %v1551, 64
    %v1694 = vpop.permute.xlu0 %1693
    %1695 = vrot.lane.b32.xlu0 %v1554, 64
    %v1696 = vpop.permute.xlu0 %1695
    %v1700 = vsel %vm697, %v1689, 0
    %v1703 = vsel %vm697, %v1690, 0
    %1705 = vmatpush.msra.mxu0 0.0
    %1706 = vmatpush.msra.mxu0 0.0
    %1707 = vmatpush.msra.mxu0 0.0
    %1708 = vmatpush.msra.mxu0 0.0
    %1709 = vmatpush.msra.mxu0 0.0
    %1710 = vmatpush.msra.mxu0 0.0
    %1711 = vmatpush.msra.mxu0 0.0
    %1712 = vmatpush.msra.mxu0 0.0
    %1713 = vmatpush.msra.mxu0 0.0
    %1714 = vmatpush.msra.mxu0 0.0
    %1715 = vmatpush.msra.mxu0 0.0
    %1716 = vmatpush.msra.mxu0 0.0
    %1717 = vmatpush.msra.mxu0 0.0
    %1718 = vmatpush.msra.mxu0 0.0
    %1719 = vmatpush.msra.mxu0 %v1696
    %1720 = vmatpush.msra.mxu0 %v1694
    %1721 = vmatmul.f32.gmra.mxu0 %v1700
    %v1722 = vpop.f32.mrf.mxu0
    %v1723 = vadd.f32 0.0, %v1722
    %1724 = vmatmul.f32.gmra.mxu0 %v1703
    %v1725 = vpop.f32.mrf.mxu0
    %v1726 = vadd.f32 0.0, %v1725
    %1727 = vdwg.mxu0
    %1728 = vrot.lane.b32.xlu0 %v1557, 64
    %v1729 = vpop.permute.xlu0 %1728
    %1730 = vrot.lane.b32.xlu0 %v1560, 64
    %v1731 = vpop.permute.xlu0 %1730
    %v1735 = vsel %vm697, %v1691, 0
    %v1738 = vsel %vm697, %v1692, 0
    %1740 = vmatpush.msra.mxu0 0.0
    %1741 = vmatpush.msra.mxu0 0.0
    %1742 = vmatpush.msra.mxu0 0.0
    %1743 = vmatpush.msra.mxu0 0.0
    %1744 = vmatpush.msra.mxu0 0.0
    %1745 = vmatpush.msra.mxu0 0.0
    %1746 = vmatpush.msra.mxu0 0.0
    %1747 = vmatpush.msra.mxu0 0.0
    %1748 = vmatpush.msra.mxu0 0.0
    %1749 = vmatpush.msra.mxu0 0.0
    %1750 = vmatpush.msra.mxu0 0.0
    %1751 = vmatpush.msra.mxu0 0.0
    %1752 = vmatpush.msra.mxu0 0.0
    %1753 = vmatpush.msra.mxu0 0.0
    %1754 = vmatpush.msra.mxu0 %v1731
    %1755 = vmatpush.msra.mxu0 %v1729
    %1756 = vmatmul.f32.gmra.mxu0 %v1735
    %v1757 = vpop.f32.mrf.mxu0
    %v1758 = vadd.f32 0.0, %v1757
    %1759 = vmatmul.f32.gmra.mxu0 %v1738
    %v1760 = vpop.f32.mrf.mxu0
    %v1761 = vadd.f32 0.0, %v1760
    %1762 = vdwg.mxu0
    %1763 = vrot.lane.b32.xlu0 %v1551, 112
    %v1764 = vpop.permute.xlu0 %1763
    %1765 = vrot.lane.b32.xlu0 %v1554, 112
    %v1766 = vpop.permute.xlu0 %1765
    %1767 = vrot.lane.b32.xlu0 %v1551, 80
    %v1768 = vpop.permute.xlu0 %1767
    %1769 = vrot.lane.b32.xlu0 %v1554, 80
    %v1770 = vpop.permute.xlu0 %1769
    %v1771 = vsel %vm697, %v1764, 0
    %v1773 = vsel %vm697, %v1766, 0
    %v1775 = vsel %vm697, %v1768, 0
    %v1777 = vsel %vm697, %v1770, 0
    %1779 = vmatpush.xpose.msra.mxu0 0.0
    %1780 = vmatpush.xpose.msra.mxu0 0.0
    %1781 = vmatpush.xpose.msra.mxu0 0.0
    %1782 = vmatpush.xpose.msra.mxu0 0.0
    %1783 = vmatpush.xpose.msra.mxu0 0.0
    %1784 = vmatpush.xpose.msra.mxu0 0.0
    %1785 = vmatpush.xpose.msra.mxu0 0.0
    %1786 = vmatpush.xpose.msra.mxu0 0.0
    %1787 = vmatpush.xpose.msra.mxu0 0.0
    %1788 = vmatpush.xpose.msra.mxu0 0.0
    %1789 = vmatpush.xpose.msra.mxu0 0.0
    %1790 = vmatpush.xpose.msra.mxu0 0.0
    %1791 = vmatpush.xpose.msra.mxu0 0.0
    %1792 = vmatpush.xpose.msra.mxu0 0.0
    %1793 = vmatpush.xpose.msra.mxu0 %v1777
    %1794 = vmatpush.xpose.msra.mxu0 %v1775
    %1795 = vmatmul.f32.gmra.mxu0 %v1771
    %v1796 = vpop.f32.mrf.mxu0
    %v1797 = vadd.f32 0.0, %v1796
    %1798 = vmatmul.f32.gmra.mxu0 %v1773
    %v1799 = vpop.f32.mrf.mxu0
    %v1800 = vadd.f32 0.0, %v1799
    %1801 = vdwg.mxu0
    %1802 = vrot.lane.b32.xlu0 %v1557, 112
    %v1803 = vpop.permute.xlu0 %1802
    %1804 = vrot.lane.b32.xlu0 %v1560, 112
    %v1805 = vpop.permute.xlu0 %1804
    %1806 = vrot.lane.b32.xlu0 %v1557, 80
    %v1807 = vpop.permute.xlu0 %1806
    %1808 = vrot.lane.b32.xlu0 %v1560, 80
    %v1809 = vpop.permute.xlu0 %1808
    %v1810 = vsel %vm697, %v1803, 0
    %v1812 = vsel %vm697, %v1805, 0
    %v1814 = vsel %vm697, %v1807, 0
    %v1816 = vsel %vm697, %v1809, 0
    %1818 = vmatpush.xpose.msra.mxu0 0.0
    %1819 = vmatpush.xpose.msra.mxu0 0.0
    %1820 = vmatpush.xpose.msra.mxu0 0.0
    %1821 = vmatpush.xpose.msra.mxu0 0.0
    %1822 = vmatpush.xpose.msra.mxu0 0.0
    %1823 = vmatpush.xpose.msra.mxu0 0.0
    %1824 = vmatpush.xpose.msra.mxu0 0.0
    %1825 = vmatpush.xpose.msra.mxu0 0.0
    %1826 = vmatpush.xpose.msra.mxu0 0.0
    %1827 = vmatpush.xpose.msra.mxu0 0.0
    %1828 = vmatpush.xpose.msra.mxu0 0.0
    %1829 = vmatpush.xpose.msra.mxu0 0.0
    %1830 = vmatpush.xpose.msra.mxu0 0.0
    %1831 = vmatpush.xpose.msra.mxu0 0.0
    %1832 = vmatpush.xpose.msra.mxu0 %v1816
    %1833 = vmatpush.xpose.msra.mxu0 %v1814
    %1834 = vmatmul.f32.gmra.mxu0 %v1810
    %v1835 = vpop.f32.mrf.mxu0
    %v1836 = vadd.f32 0.0, %v1835
    %1837 = vmatmul.f32.gmra.mxu0 %v1812
    %v1838 = vpop.f32.mrf.mxu0
    %v1839 = vadd.f32 0.0, %v1838
    %1840 = vdwg.mxu0
    %v1841 = vmul.f32 %v1797, 0.25
    %v1842 = vmul.f32 %v1800, 0.25
    %v1843 = vmul.f32 %v1836, 0.25
    %v1844 = vmul.f32 %v1839, 0.25
    %v1845 = vadd.f32 %v1841, %v531
    %v1846 = vadd.f32 %v1842, %v532
    %v1847 = vadd.f32 %v1843, %v531
    %v1848 = vadd.f32 %v1844, %v532
    %v1849 = vsel %vm697, %v1845, -inf
    %1850 = vmax.xlane.f32.xlu0 %v1849
    %v1851 = vpop.xlane.xlu0 %1850
    %v1852 = vsel %vm697, %v1846, -inf
    %1853 = vmax.xlane.f32.xlu0 %v1852
    %v1854 = vpop.xlane.xlu0 %1853
    %v1855 = vsel %vm697, %v1847, -inf
    %1856 = vmax.xlane.f32.xlu0 %v1855
    %v1857 = vpop.xlane.xlu0 %1856
    %v1858 = vsel %vm697, %v1848, -inf
    %1859 = vmax.xlane.f32.xlu0 %v1858
    %v1860 = vpop.xlane.xlu0 %1859
    %v1861 = vsub.f32 %v1845, %v1851
    %v1862 = vsub.f32 %v1846, %v1854
    %v1863 = vsub.f32 %v1847, %v1857
    %v1864 = vsub.f32 %v1848, %v1860
    %v1865 = vmul.f32 %v1861, 1.442695
    %v1866 = vpow.pop %v1865
    %v1867 = vmul.f32 %v1862, 1.442695
    %v1868 = vpow.pop %v1867
    %v1869 = vmul.f32 %v1863, 1.442695
    %v1870 = vpow.pop %v1869
    %v1871 = vmul.f32 %v1864, 1.442695
    %v1872 = vpow.pop %v1871
    %v1873 = vsel %vm697, %v1866, 0.0
    %1874 = vadd.xlane.f32.xlu0 %v1873
    %v1875 = vpop.xlane.xlu0 %1874
    %v1876 = vsel %vm697, %v1868, 0.0
    %1877 = vadd.xlane.f32.xlu0 %v1876
    %v1878 = vpop.xlane.xlu0 %1877
    %v1879 = vsel %vm697, %v1870, 0.0
    %1880 = vadd.xlane.f32.xlu0 %v1879
    %v1881 = vpop.xlane.xlu0 %1880
    %v1882 = vsel %vm697, %v1872, 0.0
    %1883 = vadd.xlane.f32.xlu0 %v1882
    %v1884 = vpop.xlane.xlu0 %1883
    %v1885 = vrcp.pop %v1875
    %v1886 = vrcp.pop %v1878
    %v1887 = vrcp.pop %v1881
    %v1888 = vrcp.pop %v1884
    %v1889 = vmul.f32 %v1866, %v1885
    %v1890 = vmul.f32 %v1868, %v1886
    %v1891 = vmul.f32 %v1870, %v1887
    %v1892 = vmul.f32 %v1872, %v1888
    %1893 = vrot.lane.b32.xlu0 %v1551, 48
    %v1894 = vpop.permute.xlu0 %1893
    %1895 = vrot.lane.b32.xlu0 %v1554, 48
    %v1896 = vpop.permute.xlu0 %1895
    %v1900 = vsel %vm697, %v1889, 0
    %v1903 = vsel %vm697, %v1890, 0
    %1905 = vmatpush.msra.mxu0 0.0
    %1906 = vmatpush.msra.mxu0 0.0
    %1907 = vmatpush.msra.mxu0 0.0
    %1908 = vmatpush.msra.mxu0 0.0
    %1909 = vmatpush.msra.mxu0 0.0
    %1910 = vmatpush.msra.mxu0 0.0
    %1911 = vmatpush.msra.mxu0 0.0
    %1912 = vmatpush.msra.mxu0 0.0
    %1913 = vmatpush.msra.mxu0 0.0
    %1914 = vmatpush.msra.mxu0 0.0
    %1915 = vmatpush.msra.mxu0 0.0
    %1916 = vmatpush.msra.mxu0 0.0
    %1917 = vmatpush.msra.mxu0 0.0
    %1918 = vmatpush.msra.mxu0 0.0
    %1919 = vmatpush.msra.mxu0 %v1896
    %1920 = vmatpush.msra.mxu0 %v1894
    %1921 = vmatmul.f32.gmra.mxu0 %v1900
    %v1922 = vpop.f32.mrf.mxu0
    %v1923 = vadd.f32 0.0, %v1922
    %1924 = vmatmul.f32.gmra.mxu0 %v1903
    %v1925 = vpop.f32.mrf.mxu0
    %v1926 = vadd.f32 0.0, %v1925
    %1927 = vdwg.mxu0
    %1928 = vrot.lane.b32.xlu0 %v1557, 48
    %v1929 = vpop.permute.xlu0 %1928
    %1930 = vrot.lane.b32.xlu0 %v1560, 48
    %v1931 = vpop.permute.xlu0 %1930
    %v1935 = vsel %vm697, %v1891, 0
    %v1938 = vsel %vm697, %v1892, 0
    %1940 = vmatpush.msra.mxu0 0.0
    %1941 = vmatpush.msra.mxu0 0.0
    %1942 = vmatpush.msra.mxu0 0.0
    %1943 = vmatpush.msra.mxu0 0.0
    %1944 = vmatpush.msra.mxu0 0.0
    %1945 = vmatpush.msra.mxu0 0.0
    %1946 = vmatpush.msra.mxu0 0.0
    %1947 = vmatpush.msra.mxu0 0.0
    %1948 = vmatpush.msra.mxu0 0.0
    %1949 = vmatpush.msra.mxu0 0.0
    %1950 = vmatpush.msra.mxu0 0.0
    %1951 = vmatpush.msra.mxu0 0.0
    %1952 = vmatpush.msra.mxu0 0.0
    %1953 = vmatpush.msra.mxu0 0.0
    %1954 = vmatpush.msra.mxu0 %v1931
    %1955 = vmatpush.msra.mxu0 %v1929
    %1956 = vmatmul.f32.gmra.mxu0 %v1935
    %v1957 = vpop.f32.mrf.mxu0
    %v1958 = vadd.f32 0.0, %v1957
    %1959 = vmatmul.f32.gmra.mxu0 %v1938
    %v1960 = vpop.f32.mrf.mxu0
    %v1961 = vadd.f32 0.0, %v1960
    %1962 = vdwg.mxu0
    %v1964 = vsel %vm697, %v1923, 0
    %v1967 = vsel %vm697, %v1926, 0
    %v1970 = vsel %vm697, %v1958, 0
    %v1973 = vsel %vm697, %v1961, 0
    %1975 = vmatpush.msra.mxu0 0.0
    %1976 = vmatpush.msra.mxu0 0.0
    %1977 = vmatpush.msra.mxu0 0.0
    %1978 = vmatpush.msra.mxu0 0.0
    %1979 = vmatpush.msra.mxu0 0.0
    %1980 = vmatpush.msra.mxu0 0.0
    %1981 = vmatpush.msra.mxu0 0.0
    %1982 = vmatpush.msra.mxu0 0.0
    %1983 = vmatpush.msra.mxu0 0.0
    %1984 = vmatpush.msra.mxu0 0.0
    %1985 = vmatpush.msra.mxu0 0.0
    %1986 = vmatpush.msra.mxu0 0.0
    %1987 = vmatpush.msra.mxu0 0.0
    %1988 = vmatpush.msra.mxu0 0.0
    %1989 = vmatpush.msra.mxu0 %v1566
    %1990 = vmatpush.msra.mxu0 %v1565
    %1991 = vmatmul.f32.gmra.mxu0 %v1964
    %v1992 = vpop.f32.mrf.mxu0
    %v1993 = vadd.f32 0.0, %v1992
    %1994 = vmatmul.f32.gmra.mxu0 %v1967
    %v1995 = vpop.f32.mrf.mxu0
    %v1996 = vadd.f32 0.0, %v1995
    %1997 = vmatmul.f32.gmra.mxu0 %v1970
    %v1998 = vpop.f32.mrf.mxu0
    %v1999 = vadd.f32 0.0, %v1998
    %2000 = vmatmul.f32.gmra.mxu0 %v1973
    %v2001 = vpop.f32.mrf.mxu0
    %v2002 = vadd.f32 0.0, %v2001
    %2003 = vdwg.mxu0
    %v2005 = vsel %vm697, %v1723, 0
    %v2008 = vsel %vm697, %v1726, 0
    %v2011 = vsel %vm697, %v1758, 0
    %v2014 = vsel %vm697, %v1761, 0
    %2016 = vmatpush.msra.mxu0 0.0
    %2017 = vmatpush.msra.mxu0 0.0
    %2018 = vmatpush.msra.mxu0 0.0
    %2019 = vmatpush.msra.mxu0 0.0
    %2020 = vmatpush.msra.mxu0 0.0
    %2021 = vmatpush.msra.mxu0 0.0
    %2022 = vmatpush.msra.mxu0 0.0
    %2023 = vmatpush.msra.mxu0 0.0
    %2024 = vmatpush.msra.mxu0 0.0
    %2025 = vmatpush.msra.mxu0 0.0
    %2026 = vmatpush.msra.mxu0 0.0
    %2027 = vmatpush.msra.mxu0 0.0
    %2028 = vmatpush.msra.mxu0 0.0
    %2029 = vmatpush.msra.mxu0 0.0
    %2030 = vmatpush.msra.mxu0 %v1564
    %2031 = vmatpush.msra.mxu0 %v1563
    %2032 = vmatmul.f32.gmra.mxu0 %v2005
    %v2033 = vpop.f32.mrf.mxu0
    %v2034 = vadd.f32 %v1993, %v2033
    %2035 = vmatmul.f32.gmra.mxu0 %v2008
    %v2036 = vpop.f32.mrf.mxu0
    %v2037 = vadd.f32 %v1996, %v2036
    %2038 = vmatmul.f32.gmra.mxu0 %v2011
    %v2039 = vpop.f32.mrf.mxu0
    %v2040 = vadd.f32 %v1999, %v2039
    %2041 = vmatmul.f32.gmra.mxu0 %v2014
    %v2042 = vpop.f32.mrf.mxu0
    %v2043 = vadd.f32 %v2002, %v2042
    %2044 = vdwg.mxu0
    %v2045 = vadd.f32 %v1410, %v2034
    %v2046 = vadd.f32 %v1411, %v2037
    %v2047 = vadd.f32 %v1412, %v2040
    %v2048 = vadd.f32 %v1413, %v2043
    %v2049 = vld [vmem:[%s13 + $0x1] sm:$0x1]
    %v2050 = vperm.slane %v2049, 0
    %v2051 = vadd.f32 %v2045, %v2050
    %v2052 = vadd.f32 %v2046, %v2050
    %v2053 = vadd.f32 %v2047, %v2050
    %v2054 = vadd.f32 %v2048, %v2050
    %v2055 = vld [vmem:[%s14 + $0x1] sm:$0x1]
    %v2056 = vld [vmem:[%s15 + $0x1] sm:$0x1]
    %v2057 = vsel %vm81, %v2051, 0.0
    %2058 = vadd.xlane.f32.xlu0 %v2057
    %v2059 = vpop.xlane.xlu0 %2058
    %v2060 = vsel %vm81, %v2052, 0.0
    %2061 = vadd.xlane.f32.xlu0 %v2060
    %v2062 = vpop.xlane.xlu0 %2061
    %v2063 = vsel %vm81, %v2053, 0.0
    %2064 = vadd.xlane.f32.xlu0 %v2063
    %v2065 = vpop.xlane.xlu0 %2064
    %v2066 = vsel %vm81, %v2054, 0.0
    %2067 = vadd.xlane.f32.xlu0 %v2066
    %v2068 = vpop.xlane.xlu0 %2067
    %v2069 = vmul.f32 %v2059, %v553
    %v2070 = vmul.f32 %v2062, %v553
    %v2071 = vmul.f32 %v2065, %v553
    %v2072 = vmul.f32 %v2068, %v553
    %v2073 = vsub.f32 %v2051, %v2069
    %v2074 = vsub.f32 %v2052, %v2070
    %v2075 = vsub.f32 %v2053, %v2071
    %v2076 = vsub.f32 %v2054, %v2072
    %v2077 = vmul.f32 %v2073, %v2073
    %v2078 = vmul.f32 %v2074, %v2074
    %v2079 = vmul.f32 %v2075, %v2075
    %v2080 = vmul.f32 %v2076, %v2076
    %v2081 = vsel %vm81, %v2077, 0.0
    %2082 = vadd.xlane.f32.xlu0 %v2081
    %v2083 = vpop.xlane.xlu0 %2082
    %v2084 = vsel %vm81, %v2078, 0.0
    %2085 = vadd.xlane.f32.xlu0 %v2084
    %v2086 = vpop.xlane.xlu0 %2085
    %v2087 = vsel %vm81, %v2079, 0.0
    %2088 = vadd.xlane.f32.xlu0 %v2087
    %v2089 = vpop.xlane.xlu0 %2088
    %v2090 = vsel %vm81, %v2080, 0.0
    %2091 = vadd.xlane.f32.xlu0 %v2090
    %v2092 = vpop.xlane.xlu0 %2091
    %v2093 = vmul.f32 %v2083, %v553
    %v2094 = vmul.f32 %v2086, %v553
    %v2095 = vmul.f32 %v2089, %v553
    %v2096 = vmul.f32 %v2092, %v553
    %v2097 = vadd.f32 %v2093, 1e-05
    %v2098 = vadd.f32 %v2094, 1e-05
    %v2099 = vadd.f32 %v2095, 1e-05
    %v2100 = vadd.f32 %v2096, 1e-05
    %v2101 = vrsqrt.pop %v2097
    %v2102 = vmul.f32 %v2101, %v2097
    %v2103 = vmul.f32 %v2102, %v2101
    %v2104 = vmul.f32 0.5, %v2103
    %v2105 = vsub.f32 1.5, %v2104
    %v2106 = vmul.f32 %v2101, %v2105
    %vm2107 = vweird.f32 %v2097
    %vm2108 = vweird.f32 %v2101
    %vm2109 = vmor %vm2107, %vm2108
    %v2110 = vsel %vm2109, %v2101, %v2106
    %v2111 = vrsqrt.pop %v2098
    %v2112 = vmul.f32 %v2111, %v2098
    %v2113 = vmul.f32 %v2112, %v2111
    %v2114 = vmul.f32 0.5, %v2113
    %v2115 = vsub.f32 1.5, %v2114
    %v2116 = vmul.f32 %v2111, %v2115
    %vm2117 = vweird.f32 %v2098
    %vm2118 = vweird.f32 %v2111
    %vm2119 = vmor %vm2117, %vm2118
    %v2120 = vsel %vm2119, %v2111, %v2116
    %v2121 = vrsqrt.pop %v2099
    %v2122 = vmul.f32 %v2121, %v2099
    %v2123 = vmul.f32 %v2122, %v2121
    %v2124 = vmul.f32 0.5, %v2123
    %v2125 = vsub.f32 1.5, %v2124
    %v2126 = vmul.f32 %v2121, %v2125
    %vm2127 = vweird.f32 %v2099
    %vm2128 = vweird.f32 %v2121
    %vm2129 = vmor %vm2127, %vm2128
    %v2130 = vsel %vm2129, %v2121, %v2126
    %v2131 = vrsqrt.pop %v2100
    %v2132 = vmul.f32 %v2131, %v2100
    %v2133 = vmul.f32 %v2132, %v2131
    %v2134 = vmul.f32 0.5, %v2133
    %v2135 = vsub.f32 1.5, %v2134
    %v2136 = vmul.f32 %v2131, %v2135
    %vm2137 = vweird.f32 %v2100
    %vm2138 = vweird.f32 %v2131
    %vm2139 = vmor %vm2137, %vm2138
    %v2140 = vsel %vm2139, %v2131, %v2136
    %v2141 = vmul.f32 %v2073, %v2110
    %v2142 = vmul.f32 %v2074, %v2120
    %v2143 = vmul.f32 %v2075, %v2130
    %v2144 = vmul.f32 %v2076, %v2140
    %v2145 = vperm.slane %v2055, 0
    %v2146 = vmul.f32 %v2141, %v2145
    %v2147 = vmul.f32 %v2142, %v2145
    %v2148 = vmul.f32 %v2143, %v2145
    %v2149 = vmul.f32 %v2144, %v2145
    %v2150 = vperm.slane %v2056, 0
    %v2151 = vadd.f32 %v2146, %v2150
    %v2152 = vadd.f32 %v2147, %v2150
    %v2153 = vadd.f32 %v2148, %v2150
    %v2154 = vadd.f32 %v2149, %v2150
    %s2155 = scalar_lea.vmem %s16, 32
    %v2156 = vld [vmem:[%s2155] sm:$0xff]
    %v2157 = vld [vmem:[%s2155 + $0x8] sm:$0xff]
    %v2158 = vld [vmem:[%s2155 + $0x10] sm:$0xff]
    %v2159 = vld [vmem:[%s2155 + $0x18] sm:$0xff]
    %v2160 = vld [vmem:[%s17 + $0x1] sm:$0x1]
    %v2161 = vperm.slane %v2160, 0
    %v2163 = vsel %vm81, %v2151, 0
    %v2166 = vsel %vm81, %v2152, 0
    %v2169 = vsel %vm81, %v2153, 0
    %v2172 = vsel %vm81, %v2154, 0
    %2174 = vmatpush.msra.mxu0 0.0
    %2175 = vmatpush.msra.mxu0 0.0
    %2176 = vmatpush.msra.mxu0 0.0
    %2177 = vmatpush.msra.mxu0 0.0
    %2178 = vmatpush.msra.mxu0 0.0
    %2179 = vmatpush.msra.mxu0 0.0
    %2180 = vmatpush.msra.mxu0 0.0
    %2181 = vmatpush.msra.mxu0 0.0
    %2182 = vmatpush.msra.mxu0 0.0
    %2183 = vmatpush.msra.mxu0 0.0
    %2184 = vmatpush.msra.mxu0 0.0
    %2185 = vmatpush.msra.mxu0 0.0
    %2186 = vmatpush.msra.mxu0 %v2159
    %2187 = vmatpush.msra.mxu0 %v2158
    %2188 = vmatpush.msra.mxu0 %v2157
    %2189 = vmatpush.msra.mxu0 %v2156
    %2190 = vmatmul.f32.gmra.mxu0 %v2163
    %v2191 = vpop.f32.mrf.mxu0
    %v2192 = vadd.f32 %v2161, %v2191
    %2193 = vmatmul.f32.gmra.mxu0 %v2166
    %v2194 = vpop.f32.mrf.mxu0
    %v2195 = vadd.f32 %v2161, %v2194
    %2196 = vmatmul.f32.gmra.mxu0 %v2169
    %v2197 = vpop.f32.mrf.mxu0
    %v2198 = vadd.f32 %v2161, %v2197
    %2199 = vmatmul.f32.gmra.mxu0 %v2172
    %v2200 = vpop.f32.mrf.mxu0
    %v2201 = vadd.f32 %v2161, %v2200
    %2202 = vdwg.mxu0
    %v2203 = vmul.f32 %v2192, 0.5
    %v2204 = vmul.f32 %v2195, 0.5
    %v2205 = vmul.f32 %v2198, 0.5
    %v2206 = vmul.f32 %v2201, 0.5
    %v2207 = vmul.f32 %v2192, 0.044715
    %v2208 = vmul.f32 %v2195, 0.044715
    %v2209 = vmul.f32 %v2198, 0.044715
    %v2210 = vmul.f32 %v2201, 0.044715
    %v2211 = vmul.f32 %v2207, %v2192
    %v2212 = vmul.f32 %v2208, %v2195
    %v2213 = vmul.f32 %v2209, %v2198
    %v2214 = vmul.f32 %v2210, %v2201
    %v2215 = vmul.f32 %v2211, %v2192
    %v2216 = vmul.f32 %v2212, %v2195
    %v2217 = vmul.f32 %v2213, %v2198
    %v2218 = vmul.f32 %v2214, %v2201
    %v2219 = vadd.f32 %v2192, %v2215
    %v2220 = vadd.f32 %v2195, %v2216
    %v2221 = vadd.f32 %v2198, %v2217
    %v2222 = vadd.f32 %v2201, %v2218
    %v2223 = vmul.f32 %v2219, 0.7978845
    %v2224 = vmul.f32 %v2220, 0.7978845
    %v2225 = vmul.f32 %v2221, 0.7978845
    %v2226 = vmul.f32 %v2222, 0.7978845
    %v2227 = vtanh.pop %v2223
    %v2228 = vtanh.pop %v2224
    %v2229 = vtanh.pop %v2225
    %v2230 = vtanh.pop %v2226
    %v2231 = vadd.f32 %v2227, 1.0
    %v2232 = vadd.f32 %v2228, 1.0
    %v2233 = vadd.f32 %v2229, 1.0
    %v2234 = vadd.f32 %v2230, 1.0
    %v2235 = vmul.f32 %v2203, %v2231
    %v2236 = vmul.f32 %v2204, %v2232
    %v2237 = vmul.f32 %v2205, %v2233
    %v2238 = vmul.f32 %v2206, %v2234
    %s2239 = scalar_lea.vmem %s18, 128
    %v2240 = vld [vmem:[%s2239] sm:$0xff]
    %v2241 = vld [vmem:[%s2239 + $0x8] sm:$0xff]
    %v2242 = vld [vmem:[%s2239 + $0x10] sm:$0xff]
    %v2243 = vld [vmem:[%s2239 + $0x18] sm:$0xff]
    %v2244 = vld [vmem:[%s2239 + $0x20] sm:$0xff]
    %v2245 = vld [vmem:[%s2239 + $0x28] sm:$0xff]
    %v2246 = vld [vmem:[%s2239 + $0x30] sm:$0xff]
    %v2247 = vld [vmem:[%s2239 + $0x38] sm:$0xff]
    %v2248 = vld [vmem:[%s2239 + $0x40] sm:$0xff]
    %v2249 = vld [vmem:[%s2239 + $0x48] sm:$0xff]
    %v2250 = vld [vmem:[%s2239 + $0x50] sm:$0xff]
    %v2251 = vld [vmem:[%s2239 + $0x58] sm:$0xff]
    %v2252 = vld [vmem:[%s2239 + $0x60] sm:$0xff]
    %v2253 = vld [vmem:[%s2239 + $0x68] sm:$0xff]
    %v2254 = vld [vmem:[%s2239 + $0x70] sm:$0xff]
    %v2255 = vld [vmem:[%s2239 + $0x78] sm:$0xff]
    %v2256 = vld [vmem:[%s19 + $0x1] sm:$0x1]
    %v2257 = vperm.slane %v2256, 0
    %2258 = vmatpush.msra.mxu0 %v2255
    %2259 = vmatpush.msra.mxu0 %v2254
    %2260 = vmatpush.msra.mxu0 %v2253
    %2261 = vmatpush.msra.mxu0 %v2252
    %2262 = vmatpush.msra.mxu0 %v2251
    %2263 = vmatpush.msra.mxu0 %v2250
    %2264 = vmatpush.msra.mxu0 %v2249
    %2265 = vmatpush.msra.mxu0 %v2248
    %2266 = vmatpush.msra.mxu0 %v2247
    %2267 = vmatpush.msra.mxu0 %v2246
    %2268 = vmatpush.msra.mxu0 %v2245
    %2269 = vmatpush.msra.mxu0 %v2244
    %2270 = vmatpush.msra.mxu0 %v2243
    %2271 = vmatpush.msra.mxu0 %v2242
    %2272 = vmatpush.msra.mxu0 %v2241
    %2273 = vmatpush.msra.mxu0 %v2240
    %2274 = vmatmul.f32.gmra.mxu0 %v2235
    %v2275 = vpop.f32.mrf.mxu0
    %v2276 = vadd.f32 %v2257, %v2275
    %2277 = vmatmul.f32.gmra.mxu0 %v2236
    %v2278 = vpop.f32.mrf.mxu0
    %v2279 = vadd.f32 %v2257, %v2278
    %2280 = vmatmul.f32.gmra.mxu0 %v2237
    %v2281 = vpop.f32.mrf.mxu0
    %v2282 = vadd.f32 %v2257, %v2281
    %2283 = vmatmul.f32.gmra.mxu0 %v2238
    %v2284 = vpop.f32.mrf.mxu0
    %v2285 = vadd.f32 %v2257, %v2284
    %2286 = vdwg.mxu0
    %v2287 = vadd.f32 %v2051, %v2276
    %v2288 = vadd.f32 %v2052, %v2279
    %v2289 = vadd.f32 %v2053, %v2282
    %v2290 = vadd.f32 %v2054, %v2285
    %v2291 = vld [vmem:[%s20] sm:$0x1]
    %v2292 = vld [vmem:[%s21] sm:$0x1]
    %v2293 = vsel %vm81, %v2287, 0.0
    %2294 = vadd.xlane.f32.xlu0 %v2293
    %v2295 = vpop.xlane.xlu0 %2294
    %v2296 = vsel %vm81, %v2288, 0.0
    %2297 = vadd.xlane.f32.xlu0 %v2296
    %v2298 = vpop.xlane.xlu0 %2297
    %v2299 = vsel %vm81, %v2289, 0.0
    %2300 = vadd.xlane.f32.xlu0 %v2299
    %v2301 = vpop.xlane.xlu0 %2300
    %v2302 = vsel %vm81, %v2290, 0.0
    %2303 = vadd.xlane.f32.xlu0 %v2302
    %v2304 = vpop.xlane.xlu0 %2303
    %v2305 = vmul.f32 %v2295, %v553
    %v2306 = vmul.f32 %v2298, %v553
    %v2307 = vmul.f32 %v2301, %v553
    %v2308 = vmul.f32 %v2304, %v553
    %v2309 = vsub.f32 %v2287, %v2305
    %v2310 = vsub.f32 %v2288, %v2306
    %v2311 = vsub.f32 %v2289, %v2307
    %v2312 = vsub.f32 %v2290, %v2308
    %v2313 = vmul.f32 %v2309, %v2309
    %v2314 = vmul.f32 %v2310, %v2310
    %v2315 = vmul.f32 %v2311, %v2311
    %v2316 = vmul.f32 %v2312, %v2312
    %v2317 = vsel %vm81, %v2313, 0.0
    %2318 = vadd.xlane.f32.xlu0 %v2317
    %v2319 = vpop.xlane.xlu0 %2318
    %v2320 = vsel %vm81, %v2314, 0.0
    %2321 = vadd.xlane.f32.xlu0 %v2320
    %v2322 = vpop.xlane.xlu0 %2321
    %v2323 = vsel %vm81, %v2315, 0.0
    %2324 = vadd.xlane.f32.xlu0 %v2323
    %v2325 = vpop.xlane.xlu0 %2324
    %v2326 = vsel %vm81, %v2316, 0.0
    %2327 = vadd.xlane.f32.xlu0 %v2326
    %v2328 = vpop.xlane.xlu0 %2327
    %v2329 = vmul.f32 %v2319, %v553
    %v2330 = vmul.f32 %v2322, %v553
    %v2331 = vmul.f32 %v2325, %v553
    %v2332 = vmul.f32 %v2328, %v553
    %v2333 = vadd.f32 %v2329, 1e-05
    %v2334 = vadd.f32 %v2330, 1e-05
    %v2335 = vadd.f32 %v2331, 1e-05
    %v2336 = vadd.f32 %v2332, 1e-05
    %v2337 = vrsqrt.pop %v2333
    %v2338 = vmul.f32 %v2337, %v2333
    %v2339 = vmul.f32 %v2338, %v2337
    %v2340 = vmul.f32 0.5, %v2339
    %v2341 = vsub.f32 1.5, %v2340
    %v2342 = vmul.f32 %v2337, %v2341
    %vm2343 = vweird.f32 %v2333
    %vm2344 = vweird.f32 %v2337
    %vm2345 = vmor %vm2343, %vm2344
    %v2346 = vsel %vm2345, %v2337, %v2342
    %v2347 = vrsqrt.pop %v2334
    %v2348 = vmul.f32 %v2347, %v2334
    %v2349 = vmul.f32 %v2348, %v2347
    %v2350 = vmul.f32 0.5, %v2349
    %v2351 = vsub.f32 1.5, %v2350
    %v2352 = vmul.f32 %v2347, %v2351
    %vm2353 = vweird.f32 %v2334
    %vm2354 = vweird.f32 %v2347
    %vm2355 = vmor %vm2353, %vm2354
    %v2356 = vsel %vm2355, %v2347, %v2352
    %v2357 = vrsqrt.pop %v2335
    %v2358 = vmul.f32 %v2357, %v2335
    %v2359 = vmul.f32 %v2358, %v2357
    %v2360 = vmul.f32 0.5, %v2359
    %v2361 = vsub.f32 1.5, %v2360
    %v2362 = vmul.f32 %v2357, %v2361
    %vm2363 = vweird.f32 %v2335
    %vm2364 = vweird.f32 %v2357
    %vm2365 = vmor %vm2363, %vm2364
    %v2366 = vsel %vm2365, %v2357, %v2362
    %v2367 = vrsqrt.pop %v2336
    %v2368 = vmul.f32 %v2367, %v2336
    %v2369 = vmul.f32 %v2368, %v2367
    %v2370 = vmul.f32 0.5, %v2369
    %v2371 = vsub.f32 1.5, %v2370
    %v2372 = vmul.f32 %v2367, %v2371
    %vm2373 = vweird.f32 %v2336
    %vm2374 = vweird.f32 %v2367
    %vm2375 = vmor %vm2373, %vm2374
    %v2376 = vsel %vm2375, %v2367, %v2372
    %v2377 = vmul.f32 %v2309, %v2346
    %v2378 = vmul.f32 %v2310, %v2356
    %v2379 = vmul.f32 %v2311, %v2366
    %v2380 = vmul.f32 %v2312, %v2376
    %v2382 = vperm.slane %v2291, 0
    %v2384 = vmul.f32 %v2377, %v2382
    %v2385 = vmul.f32 %v2378, %v2382
    %v2386 = vmul.f32 %v2379, %v2382
    %v2387 = vmul.f32 %v2380, %v2382
    %v2389 = vperm.slane %v2292, 0
    %v2391 = vadd.f32 %v2384, %v2389
    %v2392 = vadd.f32 %v2385, %v2389
    %v2393 = vadd.f32 %v2386, %v2389
    %v2394 = vadd.f32 %v2387, %v2389
    %v2395 = vld [vmem:[%s2] sm:$0xff]
    %v2396 = vld [vmem:[%s2 + $0x8] sm:$0xff]
    %v2397 = vld [vmem:[%s2 + $0x10] sm:$0xff]
    %v2398 = vld [vmem:[%s2 + $0x18] sm:$0xff]
    %v2399 = vld [vmem:[%s2 + $0x20] sm:$0xff]
    %v2400 = vld [vmem:[%s2 + $0x28] sm:$0xff]
    %v2401 = vld [vmem:[%s2 + $0x30] sm:$0xff]
    %v2402 = vld [vmem:[%s2 + $0x38] sm:$0xff]
    %v2403 = vld [vmem:[%s2 + $0x40] sm:$0xff]
    %v2404 = vld [vmem:[%s2 + $0x48] sm:$0xff]
    %v2405 = vld [vmem:[%s2 + $0x50] sm:$0xff]
    %v2406 = vld [vmem:[%s2 + $0x58] sm:$0xff]
    %v2407 = vld [vmem:[%s2 + $0x60] sm:$0xff]
    %v2408 = vld [vmem:[%s2 + $0x68] sm:$0xff]
    %v2409 = vld [vmem:[%s2 + $0x70] sm:$0xff]
    %v2410 = vld [vmem:[%s2 + $0x78] sm:$0xff]
    %v2412 = vsel %vm81, %v2391, 0
    %v2415 = vsel %vm81, %v2392, 0
    %v2418 = vsel %vm81, %v2393, 0
    %v2421 = vsel %vm81, %v2394, 0
    %v2424 = vsel %vm81, %v2395, 0
    %v2427 = vsel %vm81, %v2396, 0
    %v2430 = vsel %vm81, %v2397, 0
    %v2433 = vsel %vm81, %v2398, 0
    %v2436 = vsel %vm81, %v2399, 0
    %v2439 = vsel %vm81, %v2400, 0
    %v2442 = vsel %vm81, %v2401, 0
    %v2445 = vsel %vm81, %v2402, 0
    %v2448 = vsel %vm81, %v2403, 0
    %v2451 = vsel %vm81, %v2404, 0
    %v2454 = vsel %vm81, %v2405, 0
    %v2457 = vsel %vm81, %v2406, 0
    %v2460 = vsel %vm81, %v2407, 0
    %v2463 = vsel %vm81, %v2408, 0
    %v2466 = vsel %vm81, %v2409, 0
    %v2469 = vsel %vm81, %v2410, 0
    %2471 = vmatpush.xpose.msra.mxu0 %v2469
    %2472 = vmatpush.xpose.msra.mxu0 %v2466
    %2473 = vmatpush.xpose.msra.mxu0 %v2463
    %2474 = vmatpush.xpose.msra.mxu0 %v2460
    %2475 = vmatpush.xpose.msra.mxu0 %v2457
    %2476 = vmatpush.xpose.msra.mxu0 %v2454
    %2477 = vmatpush.xpose.msra.mxu0 %v2451
    %2478 = vmatpush.xpose.msra.mxu0 %v2448
    %2479 = vmatpush.xpose.msra.mxu0 %v2445
    %2480 = vmatpush.xpose.msra.mxu0 %v2442
    %2481 = vmatpush.xpose.msra.mxu0 %v2439
    %2482 = vmatpush.xpose.msra.mxu0 %v2436
    %2483 = vmatpush.xpose.msra.mxu0 %v2433
    %2484 = vmatpush.xpose.msra.mxu0 %v2430
    %2485 = vmatpush.xpose.msra.mxu0 %v2427
    %2486 = vmatpush.xpose.msra.mxu0 %v2424
    %2487 = vmatmul.f32.gmra.mxu0 %v2412
    %v2488 = vpop.f32.mrf.mxu0
    %v2489 = vadd.f32 0.0, %v2488
    %2490 = vmatmul.f32.gmra.mxu0 %v2415
    %v2491 = vpop.f32.mrf.mxu0
    %v2492 = vadd.f32 0.0, %v2491
    %2493 = vmatmul.f32.gmra.mxu0 %v2418
    %v2494 = vpop.f32.mrf.mxu0
    %v2495 = vadd.f32 0.0, %v2494
    %2496 = vmatmul.f32.gmra.mxu0 %v2421
    %v2497 = vpop.f32.mrf.mxu0
    %v2498 = vadd.f32 0.0, %v2497
    %2499 = vdwg.mxu0
    %2500 = vst [vmem:[#allocation3] sm:$0xff] %v2489
    %2501 = vst [vmem:[#allocation3 + $0x8] sm:$0xff] %v2492
    %2502 = vst [vmem:[#allocation3 + $0x10] sm:$0xff] %v2495
    %2503 = vst [vmem:[#allocation3 + $0x18] sm:$0xff] %v2498
    // Predicated region
    $region90: #{clipcap_forward.1} parent=1 // pred_check
      _
    $region91: #{clipcap_forward.1} parent=1 // pred_check_branch
      %2505 = sbr.rel (0) target = $region93
    $region92: #{clipcap_forward.1} parent=1 // pred_region
      %2507 = vsyncadd [#allocation4], 0
      %s2508 = sshll.u32 [#allocation3], 4
      %s2509 = int_to_ptr.vmem [resolvable:$true] %s2508
      %s2510 = sshll.u32 %s22, 4
      %s2511 = int_to_ptr.hbm [resolvable:$true] %s2510
      %2516 = dma.vmem_to_hbm [thread:$0]  %s2509, 512, %s2511, [#allocation4], 128, 128, 8
    $region93: #{clipcap_forward.1} parent=1 // pred_fallthru
      _
    // Predicated region
    $region94: #{clipcap_forward.1} parent=1 // pred_check
      _
    $region95: #{clipcap_forward.1} parent=1 // pred_check_branch
      %2518 = sbr.rel (0) target = $region97
    $region96: #{clipcap_forward.1} parent=1 // pred_region
      %2520 = dma.done [#allocation4], 512
    $region97: #{clipcap_forward.1} parent=1 // pred_fallthru
      _
    %2521 = vsyncpa [#allocation4], 1

</llo_original>
